<compile_context>
chip_gen: v7x
topology: tpu7x:2x2x1
jax: 0.10.0
libtpu: 0.0.40
codegen_flags: <defaults>
</compile_context>

<pallas_src>
import jax
import jax.numpy as jnp
from jax.experimental import pallas as pl
from jax.experimental.pallas import tpu as pltpu


# (C_in, C_out, K, conv_stride, conv_pad, pool_pad) -- mirrors the nn.Sequential
LAYER_CFG = [
    (1, 16, 81, 8, 1, 1),
    (16, 32, 3, 1, 1, 0),
    (32, 64, 3, 1, 1, 0),
    (64, 64, 3, 1, 1, 0),
    (64, 64, 3, 1, 1, 0),
]
_BN_EPS = 1e-5
_K1, _STRIDE1 = LAYER_CFG[0][2], LAYER_CFG[0][3]
_NB1 = -(-_K1 // _STRIDE1)          # 11 stride-8 weight blocks for layer 1
_PAD = 8                            # row offset of real data inside scratch buffers
                                    # (multiple of the f32 sublane tile -> aligned stores)


def _make_encoder_kernel(l1, plens):
    """Builds the fused 5-stage encoder kernel for one batch element.

    l1:    conv-1 output length.
    plens: (P1..P5) pooled lengths; P_i is also the conv in/out length of stage i+1.
    """

    def kernel(x_ref,                                    # (l1 + 10, 8) bf16 stride-8 blocks
               w1_ref, w2_ref, w3_ref, w4_ref, w5_ref,   # bf16 matmul weights
               s1_ref, b1_ref, s2_ref, b2_ref, s3_ref, b3_ref,
               s4_ref, b4_ref, s5_ref, b5_ref,           # (1, Cout) f32 folded BN scale/bias
               out_ref,                                  # (1, P5, 64) f32
               c1, a2, c2, a3, c3, a4, c4, a5, c5):      # VMEM f32 scratch
        f32 = jnp.float32
        bf16 = jnp.bfloat16
        P = _PAD

        # ---- layer 1: Conv1d(1, 16, K=81, stride=8, pad=1) as 11 shifted matmuls ----
        y = jnp.dot(x_ref[pl.ds(0, l1), :], w1_ref[0], preferred_element_type=f32)
        for j in range(1, _NB1):
            y = y + jnp.dot(x_ref[pl.ds(j, l1), :], w1_ref[j],
                            preferred_element_type=f32)
        y = jnp.maximum(y * s1_ref[...] + b1_ref[...], 0.0)      # folded BN + ReLU

        # MaxPool1d(2, 2, padding=1): zero rows around the data emulate the -inf pool
        # padding (exact because post-ReLU values are >= 0).
        c1[...] = jnp.zeros_like(c1)
        c1[pl.ds(P, l1), :] = y
        p1 = plens[0]
        pooled = jnp.maximum(c1[pl.ds(P - 1, p1, stride=2), :],   # conv[2p - 1] (pad at p=0)
                             c1[pl.ds(P, p1, stride=2), :])       # conv[2p]

        # ---- layers 2..5: Conv1d(K=3, s=1, pad=1) -> BN -> ReLU -> MaxPool1d(2, 2) ----
        stages = ((w2_ref, s2_ref, b2_ref, a2, c2),
                  (w3_ref, s3_ref, b3_ref, a3, c3),
                  (w4_ref, s4_ref, b4_ref, a4, c4),
                  (w5_ref, s5_ref, b5_ref, a5, c5))
        for i, (w_ref, s_ref, b_ref, a_buf, c_buf) in enumerate(stages):
            lc = plens[i]                                         # conv in/out length
            a_buf[...] = jnp.zeros_like(a_buf)                    # zero rows = conv padding
            a_buf[pl.ds(P, lc), :] = pooled
            y = jnp.dot(a_buf[pl.ds(P - 1, lc), :].astype(bf16), w_ref[0],
                        preferred_element_type=f32)
            for j in (1, 2):
                y = y + jnp.dot(a_buf[pl.ds(P - 1 + j, lc), :].astype(bf16), w_ref[j],
                                preferred_element_type=f32)
            y = jnp.maximum(y * s_ref[...] + b_ref[...], 0.0)     # folded BN + ReLU
            c_buf[...] = y
            p_out = plens[i + 1]
            pooled = jnp.maximum(c_buf[pl.ds(0, p_out, stride=2), :],   # conv[2p]
                                 c_buf[pl.ds(1, p_out, stride=2), :])   # conv[2p + 1]

        out_ref[0] = pooled.astype(out_ref.dtype)

    return kernel


def prepare_params(params):
    """One-time parameter preprocessing, hoisted out of the forward path.

    Returns (w1..w5, s1, b1, ..., s5, b5):
      w1: (11, 8, 16) bf16 stride-8-blocked conv-1 weight (taps zero-padded 81 -> 88)
      wi: (3, Cin, Cout) bf16 for layers 2-5
      si, bi: (1, Cout) f32 folded BatchNorm(eval) scale and (conv-bias + BN) bias
    """
    weights, scale_bias = [], []
    for idx, ((cin, cout, k, *_), (w, b, gamma, beta, rmean, rvar)) in enumerate(
            zip(LAYER_CFG, params)):
        scale = (gamma / jnp.sqrt(rvar + _BN_EPS)).astype(jnp.float32)
        bias = ((b - rmean) * scale + beta).astype(jnp.float32)
        scale_bias += [scale.reshape(1, cout), bias.reshape(1, cout)]
        if idx == 0:
            wm = jnp.pad(w.reshape(cout, k), ((0, 0), (0, _NB1 * _STRIDE1 - k)))
            wm = wm.reshape(cout, _NB1, _STRIDE1).transpose(1, 2, 0)     # (11, 8, cout)
        else:
            wm = jnp.transpose(w, (2, 1, 0))                             # (K, cin, cout)
        weights.append(wm.astype(jnp.bfloat16))
    return tuple(weights) + tuple(scale_bias)


def conv_autoencoder_encoder(x_ncl, prepared):
    """x_ncl: (N, 1, L) float32 in PyTorch NCL layout; returns (N, 64, L_out) float32."""
    N, cin, L = x_ncl.shape
    assert cin == LAYER_CFG[0][0]

    conv_pad = LAYER_CFG[0][4]
    L1 = (L + 2 * conv_pad - _K1) // _STRIDE1 + 1     # conv-1 output length
    plens = [L1 // 2 + 1]                             # pool-1 (kernel 2, stride 2, pad 1)
    for _ in range(4):
        plens.append(plens[-1] // 2)                  # K=3/p=1 conv keeps length; pool halves
    assert all(p > 0 for p in plens), "input sequence too short for this encoder"
    p_out = plens[-1]
    couts = [cfg[1] for cfg in LAYER_CFG]

    # Stride-8 blocked conv-1 input (pad + reshape only -- no im2col expansion):
    #   x_blocks[n, m, r] = x_conv_padded[n, 8*m + r]
    nblk = L1 + _NB1 - 1
    xpad = jnp.pad(x_ncl[:, 0, :], ((0, 0), (conv_pad, nblk * _STRIDE1 - conv_pad - L)))
    x_blocks = xpad.reshape(N, nblk, _STRIDE1).astype(jnp.bfloat16)

    weights, scale_bias = prepared[:5], prepared[5:]
    in_specs = [pl.BlockSpec((None, nblk, _STRIDE1), lambda n: (n, 0, 0))]
    in_specs += [pl.BlockSpec(w.shape, lambda n: (0, 0, 0)) for w in weights]
    in_specs += [pl.BlockSpec(v.shape, lambda n: (0, 0)) for v in scale_bias]

    # VMEM scratch: zero-bordered conv inputs (a*) and pre-pool conv outputs (c*).
    scratch = [pltpu.VMEM((_PAD + L1 + 1, couts[0]), jnp.float32)]              # c1
    for i in range(1, 5):
        lc = plens[i - 1]
        scratch.append(pltpu.VMEM((_PAD + lc + 1, couts[i - 1]), jnp.float32))  # a_{i+1}
        scratch.append(pltpu.VMEM((lc, couts[i]), jnp.float32))                 # c_{i+1}

    out = pl.pallas_call(
        _make_encoder_kernel(L1, tuple(plens)),
        out_shape=jax.ShapeDtypeStruct((N, p_out, couts[-1]), jnp.float32),
        grid_spec=pltpu.PrefetchScalarGridSpec(
            num_scalar_prefetch=0,
            grid=(N,),
            in_specs=in_specs,
            out_specs=pl.BlockSpec((1, p_out, couts[-1]), lambda n: (n, 0, 0)),
            scratch_shapes=scratch,
        ),
        compiler_params=pltpu.CompilerParams(
            dimension_semantics=("parallel",)),       # v7x: one batch element per TensorCore
    )(x_blocks, *prepared)

    return jnp.transpose(out, (0, 2, 1))              # back to PyTorch NCL


def init_params(key):
    """PyTorch-style init (Conv1d default; BN affine randomized, eval-mode running stats)."""
    params = []
    for (cin, cout, k, *_rest) in LAYER_CFG:
        key, k1, k2, k3, k4 = jax.random.split(key, 5)
        bound = 1.0 / (cin * k) ** 0.5
        w = jax.random.uniform(k1, (cout, cin, k), jnp.float32, -bound, bound)
        b = jax.random.uniform(k2, (cout,), jnp.float32, -bound, bound)
        gamma = 1.0 + 0.1 * jax.random.normal(k3, (cout,), jnp.float32)
        beta = 0.1 * jax.random.normal(k4, (cout,), jnp.float32)
        running_mean = jnp.zeros((cout,), jnp.float32)
        running_var = jnp.ones((cout,), jnp.float32)
        params.append((w, b, gamma, beta, running_mean, running_var))
    return params


def _reference_encoder(x_ncl, params):
    """Pure-JAX (XLA) reference of the PyTorch module in eval mode."""
    y = x_ncl
    for (w, b, gamma, beta, rmean, rvar), (cin, cout, k, st, cp, pp) in zip(params, LAYER_CFG):
        y = jax.lax.conv_general_dilated(
            y, w, window_strides=(st,), padding=[(cp, cp)],
            dimension_numbers=("NCH", "OIH", "NCH"))
        y = y + b[None, :, None]
        y = ((y - rmean[None, :, None])
             * (gamma[None, :, None] / jnp.sqrt(rvar[None, :, None] + _BN_EPS))
             + beta[None, :, None])
        y = jnp.maximum(y, 0.0)
        if pp:
            y = jnp.pad(y, ((0, 0), (0, 0), (pp, pp)), constant_values=-jnp.inf)
        lcur = y.shape[-1]
        p = (lcur - 2) // 2 + 1
        y = jnp.maximum(y[:, :, 0:2 * p:2], y[:, :, 1:2 * p:2])
    return y


if __name__ == "__main__":
    key = jax.random.PRNGKey(0)
    pkey, xkey = jax.random.split(key)
    params = init_params(pkey)
    prepared = prepare_params(params)     # hoisted one-time weight/BN preprocessing

    # small deterministic input: batch=2, channels=1, seq=1024
    x = jax.random.normal(xkey, (2, 1, 1024), jnp.float32)

    out = jax.jit(conv_autoencoder_encoder)(x, prepared)
    out = jax.block_until_ready(out)

    # 1024 -> conv(81,s8,p1)=119 -> pool(p1)=60 -> 60 -> 30 -> 30 -> 15 -> 15 -> 7 -> 7 -> 3
    assert out.shape == (2, 64, 3), out.shape
    assert bool(jnp.all(jnp.isfinite(out)))

    ref = _reference_encoder(x, params)
    max_err = float(jnp.max(jnp.abs(out - ref)))
    assert bool(jnp.allclose(out, ref, rtol=0.1, atol=0.05)), max_err

    print("KERNEL_OK")
</pallas_src>

<mosaic_0001>
module attributes {stable_mosaic.version = 11 : i64} {
  func.func @kernel(%arg0: i32, %arg1: memref<1x129x8xbf16, #tpu.memory_space<vmem>>, %arg2: memref<11x8x16xbf16, #tpu.memory_space<vmem>>, %arg3: memref<3x16x32xbf16, #tpu.memory_space<vmem>>, %arg4: memref<3x32x64xbf16, #tpu.memory_space<vmem>>, %arg5: memref<3x64x64xbf16, #tpu.memory_space<vmem>>, %arg6: memref<3x64x64xbf16, #tpu.memory_space<vmem>>, %arg7: memref<1x16xf32, #tpu.memory_space<vmem>>, %arg8: memref<1x16xf32, #tpu.memory_space<vmem>>, %arg9: memref<1x32xf32, #tpu.memory_space<vmem>>, %arg10: memref<1x32xf32, #tpu.memory_space<vmem>>, %arg11: memref<1x64xf32, #tpu.memory_space<vmem>>, %arg12: memref<1x64xf32, #tpu.memory_space<vmem>>, %arg13: memref<1x64xf32, #tpu.memory_space<vmem>>, %arg14: memref<1x64xf32, #tpu.memory_space<vmem>>, %arg15: memref<1x64xf32, #tpu.memory_space<vmem>>, %arg16: memref<1x64xf32, #tpu.memory_space<vmem>>, %arg17: memref<1x3x64xf32, #tpu.memory_space<vmem>>, %arg18: memref<128x16xf32, #tpu.memory_space<vmem>>, %arg19: memref<69x16xf32, #tpu.memory_space<vmem>>, %arg20: memref<60x32xf32, #tpu.memory_space<vmem>>, %arg21: memref<39x32xf32, #tpu.memory_space<vmem>>, %arg22: memref<30x64xf32, #tpu.memory_space<vmem>>, %arg23: memref<24x64xf32, #tpu.memory_space<vmem>>, %arg24: memref<15x64xf32, #tpu.memory_space<vmem>>, %arg25: memref<16x64xf32, #tpu.memory_space<vmem>>, %arg26: memref<7x64xf32, #tpu.memory_space<vmem>>) attributes {dimension_semantics = [#tpu.dimension_semantics<parallel>], iteration_bounds = array<i64: 2>, scalar_prefetch = 0 : i64, scratch_operands = 9 : i64, tpu.core_type = #tpu.core_type<tc>, window_params = [{transform_indices = @transform_0, window_bounds = array<i64: 1, 129, 8>}, {pipeline_mode = #tpu.pipeline_mode<synchronous>, transform_indices = @transform_1, window_bounds = array<i64: 11, 8, 16>}, {pipeline_mode = #tpu.pipeline_mode<synchronous>, transform_indices = @transform_2, window_bounds = array<i64: 3, 16, 32>}, {pipeline_mode = #tpu.pipeline_mode<synchronous>, transform_indices = @transform_3, window_bounds = array<i64: 3, 32, 64>}, {pipeline_mode = #tpu.pipeline_mode<synchronous>, transform_indices = @transform_4, window_bounds = array<i64: 3, 64, 64>}, {pipeline_mode = #tpu.pipeline_mode<synchronous>, transform_indices = @transform_5, window_bounds = array<i64: 3, 64, 64>}, {pipeline_mode = #tpu.pipeline_mode<synchronous>, transform_indices = @transform_6, window_bounds = array<i64: 1, 16>}, {pipeline_mode = #tpu.pipeline_mode<synchronous>, transform_indices = @transform_7, window_bounds = array<i64: 1, 16>}, {pipeline_mode = #tpu.pipeline_mode<synchronous>, transform_indices = @transform_8, window_bounds = array<i64: 1, 32>}, {pipeline_mode = #tpu.pipeline_mode<synchronous>, transform_indices = @transform_9, window_bounds = array<i64: 1, 32>}, {pipeline_mode = #tpu.pipeline_mode<synchronous>, transform_indices = @transform_10, window_bounds = array<i64: 1, 64>}, {pipeline_mode = #tpu.pipeline_mode<synchronous>, transform_indices = @transform_11, window_bounds = array<i64: 1, 64>}, {pipeline_mode = #tpu.pipeline_mode<synchronous>, transform_indices = @transform_12, window_bounds = array<i64: 1, 64>}, {pipeline_mode = #tpu.pipeline_mode<synchronous>, transform_indices = @transform_13, window_bounds = array<i64: 1, 64>}, {pipeline_mode = #tpu.pipeline_mode<synchronous>, transform_indices = @transform_14, window_bounds = array<i64: 1, 64>}, {pipeline_mode = #tpu.pipeline_mode<synchronous>, transform_indices = @transform_15, window_bounds = array<i64: 1, 64>}, {transform_indices = @transform_16, window_bounds = array<i64: 1, 3, 64>}]} {
    %c0 = arith.constant 0 : index
    %c0_0 = arith.constant 0 : index
    %c0_1 = arith.constant 0 : index
    %0 = vector.load %arg1[%c0, %c0_0, %c0_1] : memref<1x129x8xbf16, #tpu.memory_space<vmem>>, vector<1x119x8xbf16>
    %1 = vector.shape_cast %0 : vector<1x119x8xbf16> to vector<119x8xbf16>
    %c0_2 = arith.constant 0 : index
    %c0_3 = arith.constant 0 : index
    %c0_4 = arith.constant 0 : index
    %2 = vector.load %arg2[%c0_2, %c0_3, %c0_4] : memref<11x8x16xbf16, #tpu.memory_space<vmem>>, vector<1x8x16xbf16>
    %3 = vector.shape_cast %2 : vector<1x8x16xbf16> to vector<8x16xbf16>
    %cst = arith.constant dense<0.000000e+00> : vector<119x16xf32>
    %4 = tpu.matmul %1, %3, %cst {dimension_numbers = #tpu.dot_dimension_numbers<[1], [0], [0], [1], [0, 0, 1, 1], [], []>} : vector<119x8xbf16>, vector<8x16xbf16>, vector<119x16xf32> -> vector<119x16xf32>
    %c0_5 = arith.constant 0 : index
    %c1 = arith.constant 1 : index
    %c0_6 = arith.constant 0 : index
    %5 = vector.load %arg1[%c0_5, %c1, %c0_6] : memref<1x129x8xbf16, #tpu.memory_space<vmem>>, vector<1x119x8xbf16>
    %6 = vector.shape_cast %5 : vector<1x119x8xbf16> to vector<119x8xbf16>
    %c1_7 = arith.constant 1 : index
    %c0_8 = arith.constant 0 : index
    %c0_9 = arith.constant 0 : index
    %7 = vector.load %arg2[%c1_7, %c0_8, %c0_9] : memref<11x8x16xbf16, #tpu.memory_space<vmem>>, vector<1x8x16xbf16>
    %8 = vector.shape_cast %7 : vector<1x8x16xbf16> to vector<8x16xbf16>
    %cst_10 = arith.constant dense<0.000000e+00> : vector<119x16xf32>
    %9 = tpu.matmul %6, %8, %cst_10 {dimension_numbers = #tpu.dot_dimension_numbers<[1], [0], [0], [1], [0, 0, 1, 1], [], []>} : vector<119x8xbf16>, vector<8x16xbf16>, vector<119x16xf32> -> vector<119x16xf32>
    %10 = arith.addf %4, %9 : vector<119x16xf32>
    %c0_11 = arith.constant 0 : index
    %c2 = arith.constant 2 : index
    %c0_12 = arith.constant 0 : index
    %11 = vector.load %arg1[%c0_11, %c2, %c0_12] : memref<1x129x8xbf16, #tpu.memory_space<vmem>>, vector<1x119x8xbf16>
    %12 = vector.shape_cast %11 : vector<1x119x8xbf16> to vector<119x8xbf16>
    %c2_13 = arith.constant 2 : index
    %c0_14 = arith.constant 0 : index
    %c0_15 = arith.constant 0 : index
    %13 = vector.load %arg2[%c2_13, %c0_14, %c0_15] : memref<11x8x16xbf16, #tpu.memory_space<vmem>>, vector<1x8x16xbf16>
    %14 = vector.shape_cast %13 : vector<1x8x16xbf16> to vector<8x16xbf16>
    %cst_16 = arith.constant dense<0.000000e+00> : vector<119x16xf32>
    %15 = tpu.matmul %12, %14, %cst_16 {dimension_numbers = #tpu.dot_dimension_numbers<[1], [0], [0], [1], [0, 0, 1, 1], [], []>} : vector<119x8xbf16>, vector<8x16xbf16>, vector<119x16xf32> -> vector<119x16xf32>
    %16 = arith.addf %10, %15 : vector<119x16xf32>
    %c0_17 = arith.constant 0 : index
    %c3 = arith.constant 3 : index
    %c0_18 = arith.constant 0 : index
    %17 = vector.load %arg1[%c0_17, %c3, %c0_18] : memref<1x129x8xbf16, #tpu.memory_space<vmem>>, vector<1x119x8xbf16>
    %18 = vector.shape_cast %17 : vector<1x119x8xbf16> to vector<119x8xbf16>
    %c3_19 = arith.constant 3 : index
    %c0_20 = arith.constant 0 : index
    %c0_21 = arith.constant 0 : index
    %19 = vector.load %arg2[%c3_19, %c0_20, %c0_21] : memref<11x8x16xbf16, #tpu.memory_space<vmem>>, vector<1x8x16xbf16>
    %20 = vector.shape_cast %19 : vector<1x8x16xbf16> to vector<8x16xbf16>
    %cst_22 = arith.constant dense<0.000000e+00> : vector<119x16xf32>
    %21 = tpu.matmul %18, %20, %cst_22 {dimension_numbers = #tpu.dot_dimension_numbers<[1], [0], [0], [1], [0, 0, 1, 1], [], []>} : vector<119x8xbf16>, vector<8x16xbf16>, vector<119x16xf32> -> vector<119x16xf32>
    %22 = arith.addf %16, %21 : vector<119x16xf32>
    %c0_23 = arith.constant 0 : index
    %c4 = arith.constant 4 : index
    %c0_24 = arith.constant 0 : index
    %23 = vector.load %arg1[%c0_23, %c4, %c0_24] : memref<1x129x8xbf16, #tpu.memory_space<vmem>>, vector<1x119x8xbf16>
    %24 = vector.shape_cast %23 : vector<1x119x8xbf16> to vector<119x8xbf16>
    %c4_25 = arith.constant 4 : index
    %c0_26 = arith.constant 0 : index
    %c0_27 = arith.constant 0 : index
    %25 = vector.load %arg2[%c4_25, %c0_26, %c0_27] : memref<11x8x16xbf16, #tpu.memory_space<vmem>>, vector<1x8x16xbf16>
    %26 = vector.shape_cast %25 : vector<1x8x16xbf16> to vector<8x16xbf16>
    %cst_28 = arith.constant dense<0.000000e+00> : vector<119x16xf32>
    %27 = tpu.matmul %24, %26, %cst_28 {dimension_numbers = #tpu.dot_dimension_numbers<[1], [0], [0], [1], [0, 0, 1, 1], [], []>} : vector<119x8xbf16>, vector<8x16xbf16>, vector<119x16xf32> -> vector<119x16xf32>
    %28 = arith.addf %22, %27 : vector<119x16xf32>
    %c0_29 = arith.constant 0 : index
    %c5 = arith.constant 5 : index
    %c0_30 = arith.constant 0 : index
    %29 = vector.load %arg1[%c0_29, %c5, %c0_30] : memref<1x129x8xbf16, #tpu.memory_space<vmem>>, vector<1x119x8xbf16>
    %30 = vector.shape_cast %29 : vector<1x119x8xbf16> to vector<119x8xbf16>
    %c5_31 = arith.constant 5 : index
    %c0_32 = arith.constant 0 : index
    %c0_33 = arith.constant 0 : index
    %31 = vector.load %arg2[%c5_31, %c0_32, %c0_33] : memref<11x8x16xbf16, #tpu.memory_space<vmem>>, vector<1x8x16xbf16>
    %32 = vector.shape_cast %31 : vector<1x8x16xbf16> to vector<8x16xbf16>
    %cst_34 = arith.constant dense<0.000000e+00> : vector<119x16xf32>
    %33 = tpu.matmul %30, %32, %cst_34 {dimension_numbers = #tpu.dot_dimension_numbers<[1], [0], [0], [1], [0, 0, 1, 1], [], []>} : vector<119x8xbf16>, vector<8x16xbf16>, vector<119x16xf32> -> vector<119x16xf32>
    %34 = arith.addf %28, %33 : vector<119x16xf32>
    %c0_35 = arith.constant 0 : index
    %c6 = arith.constant 6 : index
    %c0_36 = arith.constant 0 : index
    %35 = vector.load %arg1[%c0_35, %c6, %c0_36] : memref<1x129x8xbf16, #tpu.memory_space<vmem>>, vector<1x119x8xbf16>
    %36 = vector.shape_cast %35 : vector<1x119x8xbf16> to vector<119x8xbf16>
    %c6_37 = arith.constant 6 : index
    %c0_38 = arith.constant 0 : index
    %c0_39 = arith.constant 0 : index
    %37 = vector.load %arg2[%c6_37, %c0_38, %c0_39] : memref<11x8x16xbf16, #tpu.memory_space<vmem>>, vector<1x8x16xbf16>
    %38 = vector.shape_cast %37 : vector<1x8x16xbf16> to vector<8x16xbf16>
    %cst_40 = arith.constant dense<0.000000e+00> : vector<119x16xf32>
    %39 = tpu.matmul %36, %38, %cst_40 {dimension_numbers = #tpu.dot_dimension_numbers<[1], [0], [0], [1], [0, 0, 1, 1], [], []>} : vector<119x8xbf16>, vector<8x16xbf16>, vector<119x16xf32> -> vector<119x16xf32>
    %40 = arith.addf %34, %39 : vector<119x16xf32>
    %c0_41 = arith.constant 0 : index
    %c7 = arith.constant 7 : index
    %c0_42 = arith.constant 0 : index
    %41 = vector.load %arg1[%c0_41, %c7, %c0_42] : memref<1x129x8xbf16, #tpu.memory_space<vmem>>, vector<1x119x8xbf16>
    %42 = vector.shape_cast %41 : vector<1x119x8xbf16> to vector<119x8xbf16>
    %c7_43 = arith.constant 7 : index
    %c0_44 = arith.constant 0 : index
    %c0_45 = arith.constant 0 : index
    %43 = vector.load %arg2[%c7_43, %c0_44, %c0_45] : memref<11x8x16xbf16, #tpu.memory_space<vmem>>, vector<1x8x16xbf16>
    %44 = vector.shape_cast %43 : vector<1x8x16xbf16> to vector<8x16xbf16>
    %cst_46 = arith.constant dense<0.000000e+00> : vector<119x16xf32>
    %45 = tpu.matmul %42, %44, %cst_46 {dimension_numbers = #tpu.dot_dimension_numbers<[1], [0], [0], [1], [0, 0, 1, 1], [], []>} : vector<119x8xbf16>, vector<8x16xbf16>, vector<119x16xf32> -> vector<119x16xf32>
    %46 = arith.addf %40, %45 : vector<119x16xf32>
    %c0_47 = arith.constant 0 : index
    %c8 = arith.constant 8 : index
    %c0_48 = arith.constant 0 : index
    %47 = vector.load %arg1[%c0_47, %c8, %c0_48] : memref<1x129x8xbf16, #tpu.memory_space<vmem>>, vector<1x119x8xbf16>
    %48 = vector.shape_cast %47 : vector<1x119x8xbf16> to vector<119x8xbf16>
    %c8_49 = arith.constant 8 : index
    %c0_50 = arith.constant 0 : index
    %c0_51 = arith.constant 0 : index
    %49 = vector.load %arg2[%c8_49, %c0_50, %c0_51] : memref<11x8x16xbf16, #tpu.memory_space<vmem>>, vector<1x8x16xbf16>
    %50 = vector.shape_cast %49 : vector<1x8x16xbf16> to vector<8x16xbf16>
    %cst_52 = arith.constant dense<0.000000e+00> : vector<119x16xf32>
    %51 = tpu.matmul %48, %50, %cst_52 {dimension_numbers = #tpu.dot_dimension_numbers<[1], [0], [0], [1], [0, 0, 1, 1], [], []>} : vector<119x8xbf16>, vector<8x16xbf16>, vector<119x16xf32> -> vector<119x16xf32>
    %52 = arith.addf %46, %51 : vector<119x16xf32>
    %c0_53 = arith.constant 0 : index
    %c9 = arith.constant 9 : index
    %c0_54 = arith.constant 0 : index
    %53 = vector.load %arg1[%c0_53, %c9, %c0_54] : memref<1x129x8xbf16, #tpu.memory_space<vmem>>, vector<1x119x8xbf16>
    %54 = vector.shape_cast %53 : vector<1x119x8xbf16> to vector<119x8xbf16>
    %c9_55 = arith.constant 9 : index
    %c0_56 = arith.constant 0 : index
    %c0_57 = arith.constant 0 : index
    %55 = vector.load %arg2[%c9_55, %c0_56, %c0_57] : memref<11x8x16xbf16, #tpu.memory_space<vmem>>, vector<1x8x16xbf16>
    %56 = vector.shape_cast %55 : vector<1x8x16xbf16> to vector<8x16xbf16>
    %cst_58 = arith.constant dense<0.000000e+00> : vector<119x16xf32>
    %57 = tpu.matmul %54, %56, %cst_58 {dimension_numbers = #tpu.dot_dimension_numbers<[1], [0], [0], [1], [0, 0, 1, 1], [], []>} : vector<119x8xbf16>, vector<8x16xbf16>, vector<119x16xf32> -> vector<119x16xf32>
    %58 = arith.addf %52, %57 : vector<119x16xf32>
    %c0_59 = arith.constant 0 : index
    %c10 = arith.constant 10 : index
    %c0_60 = arith.constant 0 : index
    %59 = vector.load %arg1[%c0_59, %c10, %c0_60] : memref<1x129x8xbf16, #tpu.memory_space<vmem>>, vector<1x119x8xbf16>
    %60 = vector.shape_cast %59 : vector<1x119x8xbf16> to vector<119x8xbf16>
    %c10_61 = arith.constant 10 : index
    %c0_62 = arith.constant 0 : index
    %c0_63 = arith.constant 0 : index
    %61 = vector.load %arg2[%c10_61, %c0_62, %c0_63] : memref<11x8x16xbf16, #tpu.memory_space<vmem>>, vector<1x8x16xbf16>
    %62 = vector.shape_cast %61 : vector<1x8x16xbf16> to vector<8x16xbf16>
    %cst_64 = arith.constant dense<0.000000e+00> : vector<119x16xf32>
    %63 = tpu.matmul %60, %62, %cst_64 {dimension_numbers = #tpu.dot_dimension_numbers<[1], [0], [0], [1], [0, 0, 1, 1], [], []>} : vector<119x8xbf16>, vector<8x16xbf16>, vector<119x16xf32> -> vector<119x16xf32>
    %64 = arith.addf %58, %63 : vector<119x16xf32>
    %c0_65 = arith.constant 0 : index
    %c0_66 = arith.constant 0 : index
    %65 = vector.load %arg7[%c0_65, %c0_66] : memref<1x16xf32, #tpu.memory_space<vmem>>, vector<1x16xf32>
    %66 = vector.broadcast %65 : vector<1x16xf32> to vector<119x16xf32>
    %67 = arith.mulf %64, %66 : vector<119x16xf32>
    %c0_67 = arith.constant 0 : index
    %c0_68 = arith.constant 0 : index
    %68 = vector.load %arg8[%c0_67, %c0_68] : memref<1x16xf32, #tpu.memory_space<vmem>>, vector<1x16xf32>
    %69 = vector.broadcast %68 : vector<1x16xf32> to vector<119x16xf32>
    %70 = arith.addf %67, %69 : vector<119x16xf32>
    %cst_69 = arith.constant 0.000000e+00 : f32
    %71 = vector.broadcast %cst_69 : f32 to vector<119x16xf32>
    %72 = arith.maximumf %70, %71 : vector<119x16xf32>
    %cst_70 = arith.constant 0.000000e+00 : f32
    %73 = vector.broadcast %cst_70 : f32 to vector<128x16xf32>
    %c0_71 = arith.constant 0 : index
    %c0_72 = arith.constant 0 : index
    %74 = vector.load %arg18[%c0_71, %c0_72] : memref<128x16xf32, #tpu.memory_space<vmem>>, vector<128x16xf32>
    tpu.vector_store %arg18[%c0_71, %c0_72], %73 {strides = array<i32>} : memref<128x16xf32, #tpu.memory_space<vmem>>, vector<128x16xf32>,
    %c8_73 = arith.constant 8 : index
    %c0_74 = arith.constant 0 : index
    %75 = vector.load %arg18[%c8_73, %c0_74] : memref<128x16xf32, #tpu.memory_space<vmem>>, vector<119x16xf32>
    tpu.vector_store %arg18[%c8_73, %c0_74], %72 {strides = array<i32>} : memref<128x16xf32, #tpu.memory_space<vmem>>, vector<119x16xf32>,
    %c7_75 = arith.constant 7 : index
    %c0_76 = arith.constant 0 : index
    %76 = tpu.strided_load %arg18[%c7_75, %c0_76] {strides = array<i32: 2, 1>} : memref<128x16xf32, #tpu.memory_space<vmem>>, vector<60x16xf32>
    %c8_77 = arith.constant 8 : index
    %c0_78 = arith.constant 0 : index
    %77 = tpu.strided_load %arg18[%c8_77, %c0_78] {strides = array<i32: 2, 1>} : memref<128x16xf32, #tpu.memory_space<vmem>>, vector<60x16xf32>
    %78 = arith.maximumf %76, %77 : vector<60x16xf32>
    %cst_79 = arith.constant 0.000000e+00 : f32
    %79 = vector.broadcast %cst_79 : f32 to vector<69x16xf32>
    %c0_80 = arith.constant 0 : index
    %c0_81 = arith.constant 0 : index
    %80 = vector.load %arg19[%c0_80, %c0_81] : memref<69x16xf32, #tpu.memory_space<vmem>>, vector<69x16xf32>
    tpu.vector_store %arg19[%c0_80, %c0_81], %79 {strides = array<i32>} : memref<69x16xf32, #tpu.memory_space<vmem>>, vector<69x16xf32>,
    %c8_82 = arith.constant 8 : index
    %c0_83 = arith.constant 0 : index
    %81 = vector.load %arg19[%c8_82, %c0_83] : memref<69x16xf32, #tpu.memory_space<vmem>>, vector<60x16xf32>
    tpu.vector_store %arg19[%c8_82, %c0_83], %78 {strides = array<i32>} : memref<69x16xf32, #tpu.memory_space<vmem>>, vector<60x16xf32>,
    %c7_84 = arith.constant 7 : index
    %c0_85 = arith.constant 0 : index
    %82 = vector.load %arg19[%c7_84, %c0_85] : memref<69x16xf32, #tpu.memory_space<vmem>>, vector<60x16xf32>
    %83 = arith.truncf %82 : vector<60x16xf32> to vector<60x16xbf16>
    %c0_86 = arith.constant 0 : index
    %c0_87 = arith.constant 0 : index
    %c0_88 = arith.constant 0 : index
    %84 = vector.load %arg3[%c0_86, %c0_87, %c0_88] : memref<3x16x32xbf16, #tpu.memory_space<vmem>>, vector<1x16x32xbf16>
    %85 = vector.shape_cast %84 : vector<1x16x32xbf16> to vector<16x32xbf16>
    %cst_89 = arith.constant dense<0.000000e+00> : vector<60x32xf32>
    %86 = tpu.matmul %83, %85, %cst_89 {dimension_numbers = #tpu.dot_dimension_numbers<[1], [0], [0], [1], [0, 0, 1, 1], [], []>} : vector<60x16xbf16>, vector<16x32xbf16>, vector<60x32xf32> -> vector<60x32xf32>
    %c8_90 = arith.constant 8 : index
    %c0_91 = arith.constant 0 : index
    %87 = vector.load %arg19[%c8_90, %c0_91] : memref<69x16xf32, #tpu.memory_space<vmem>>, vector<60x16xf32>
    %88 = arith.truncf %87 : vector<60x16xf32> to vector<60x16xbf16>
    %c1_92 = arith.constant 1 : index
    %c0_93 = arith.constant 0 : index
    %c0_94 = arith.constant 0 : index
    %89 = vector.load %arg3[%c1_92, %c0_93, %c0_94] : memref<3x16x32xbf16, #tpu.memory_space<vmem>>, vector<1x16x32xbf16>
    %90 = vector.shape_cast %89 : vector<1x16x32xbf16> to vector<16x32xbf16>
    %cst_95 = arith.constant dense<0.000000e+00> : vector<60x32xf32>
    %91 = tpu.matmul %88, %90, %cst_95 {dimension_numbers = #tpu.dot_dimension_numbers<[1], [0], [0], [1], [0, 0, 1, 1], [], []>} : vector<60x16xbf16>, vector<16x32xbf16>, vector<60x32xf32> -> vector<60x32xf32>
    %92 = arith.addf %86, %91 : vector<60x32xf32>
    %c9_96 = arith.constant 9 : index
    %c0_97 = arith.constant 0 : index
    %93 = vector.load %arg19[%c9_96, %c0_97] : memref<69x16xf32, #tpu.memory_space<vmem>>, vector<60x16xf32>
    %94 = arith.truncf %93 : vector<60x16xf32> to vector<60x16xbf16>
    %c2_98 = arith.constant 2 : index
    %c0_99 = arith.constant 0 : index
    %c0_100 = arith.constant 0 : index
    %95 = vector.load %arg3[%c2_98, %c0_99, %c0_100] : memref<3x16x32xbf16, #tpu.memory_space<vmem>>, vector<1x16x32xbf16>
    %96 = vector.shape_cast %95 : vector<1x16x32xbf16> to vector<16x32xbf16>
    %cst_101 = arith.constant dense<0.000000e+00> : vector<60x32xf32>
    %97 = tpu.matmul %94, %96, %cst_101 {dimension_numbers = #tpu.dot_dimension_numbers<[1], [0], [0], [1], [0, 0, 1, 1], [], []>} : vector<60x16xbf16>, vector<16x32xbf16>, vector<60x32xf32> -> vector<60x32xf32>
    %98 = arith.addf %92, %97 : vector<60x32xf32>
    %c0_102 = arith.constant 0 : index
    %c0_103 = arith.constant 0 : index
    %99 = vector.load %arg9[%c0_102, %c0_103] : memref<1x32xf32, #tpu.memory_space<vmem>>, vector<1x32xf32>
    %100 = vector.broadcast %99 : vector<1x32xf32> to vector<60x32xf32>
    %101 = arith.mulf %98, %100 : vector<60x32xf32>
    %c0_104 = arith.constant 0 : index
    %c0_105 = arith.constant 0 : index
    %102 = vector.load %arg10[%c0_104, %c0_105] : memref<1x32xf32, #tpu.memory_space<vmem>>, vector<1x32xf32>
    %103 = vector.broadcast %102 : vector<1x32xf32> to vector<60x32xf32>
    %104 = arith.addf %101, %103 : vector<60x32xf32>
    %cst_106 = arith.constant 0.000000e+00 : f32
    %105 = vector.broadcast %cst_106 : f32 to vector<60x32xf32>
    %106 = arith.maximumf %104, %105 : vector<60x32xf32>
    %c0_107 = arith.constant 0 : index
    %c0_108 = arith.constant 0 : index
    %107 = vector.load %arg20[%c0_107, %c0_108] : memref<60x32xf32, #tpu.memory_space<vmem>>, vector<60x32xf32>
    tpu.vector_store %arg20[%c0_107, %c0_108], %106 {strides = array<i32>} : memref<60x32xf32, #tpu.memory_space<vmem>>, vector<60x32xf32>,
    %c0_109 = arith.constant 0 : index
    %c0_110 = arith.constant 0 : index
    %108 = tpu.strided_load %arg20[%c0_109, %c0_110] {strides = array<i32: 2, 1>} : memref<60x32xf32, #tpu.memory_space<vmem>>, vector<30x32xf32>
    %c1_111 = arith.constant 1 : index
    %c0_112 = arith.constant 0 : index
    %109 = tpu.strided_load %arg20[%c1_111, %c0_112] {strides = array<i32: 2, 1>} : memref<60x32xf32, #tpu.memory_space<vmem>>, vector<30x32xf32>
    %110 = arith.maximumf %108, %109 : vector<30x32xf32>
    %cst_113 = arith.constant 0.000000e+00 : f32
    %111 = vector.broadcast %cst_113 : f32 to vector<39x32xf32>
    %c0_114 = arith.constant 0 : index
    %c0_115 = arith.constant 0 : index
    %112 = vector.load %arg21[%c0_114, %c0_115] : memref<39x32xf32, #tpu.memory_space<vmem>>, vector<39x32xf32>
    tpu.vector_store %arg21[%c0_114, %c0_115], %111 {strides = array<i32>} : memref<39x32xf32, #tpu.memory_space<vmem>>, vector<39x32xf32>,
    %c8_116 = arith.constant 8 : index
    %c0_117 = arith.constant 0 : index
    %113 = vector.load %arg21[%c8_116, %c0_117] : memref<39x32xf32, #tpu.memory_space<vmem>>, vector<30x32xf32>
    tpu.vector_store %arg21[%c8_116, %c0_117], %110 {strides = array<i32>} : memref<39x32xf32, #tpu.memory_space<vmem>>, vector<30x32xf32>,
    %c7_118 = arith.constant 7 : index
    %c0_119 = arith.constant 0 : index
    %114 = vector.load %arg21[%c7_118, %c0_119] : memref<39x32xf32, #tpu.memory_space<vmem>>, vector<30x32xf32>
    %115 = arith.truncf %114 : vector<30x32xf32> to vector<30x32xbf16>
    %c0_120 = arith.constant 0 : index
    %c0_121 = arith.constant 0 : index
    %c0_122 = arith.constant 0 : index
    %116 = vector.load %arg4[%c0_120, %c0_121, %c0_122] : memref<3x32x64xbf16, #tpu.memory_space<vmem>>, vector<1x32x64xbf16>
    %117 = vector.shape_cast %116 : vector<1x32x64xbf16> to vector<32x64xbf16>
    %cst_123 = arith.constant dense<0.000000e+00> : vector<30x64xf32>
    %118 = tpu.matmul %115, %117, %cst_123 {dimension_numbers = #tpu.dot_dimension_numbers<[1], [0], [0], [1], [0, 0, 1, 1], [], []>} : vector<30x32xbf16>, vector<32x64xbf16>, vector<30x64xf32> -> vector<30x64xf32>
    %c8_124 = arith.constant 8 : index
    %c0_125 = arith.constant 0 : index
    %119 = vector.load %arg21[%c8_124, %c0_125] : memref<39x32xf32, #tpu.memory_space<vmem>>, vector<30x32xf32>
    %120 = arith.truncf %119 : vector<30x32xf32> to vector<30x32xbf16>
    %c1_126 = arith.constant 1 : index
    %c0_127 = arith.constant 0 : index
    %c0_128 = arith.constant 0 : index
    %121 = vector.load %arg4[%c1_126, %c0_127, %c0_128] : memref<3x32x64xbf16, #tpu.memory_space<vmem>>, vector<1x32x64xbf16>
    %122 = vector.shape_cast %121 : vector<1x32x64xbf16> to vector<32x64xbf16>
    %cst_129 = arith.constant dense<0.000000e+00> : vector<30x64xf32>
    %123 = tpu.matmul %120, %122, %cst_129 {dimension_numbers = #tpu.dot_dimension_numbers<[1], [0], [0], [1], [0, 0, 1, 1], [], []>} : vector<30x32xbf16>, vector<32x64xbf16>, vector<30x64xf32> -> vector<30x64xf32>
    %124 = arith.addf %118, %123 : vector<30x64xf32>
    %c9_130 = arith.constant 9 : index
    %c0_131 = arith.constant 0 : index
    %125 = vector.load %arg21[%c9_130, %c0_131] : memref<39x32xf32, #tpu.memory_space<vmem>>, vector<30x32xf32>
    %126 = arith.truncf %125 : vector<30x32xf32> to vector<30x32xbf16>
    %c2_132 = arith.constant 2 : index
    %c0_133 = arith.constant 0 : index
    %c0_134 = arith.constant 0 : index
    %127 = vector.load %arg4[%c2_132, %c0_133, %c0_134] : memref<3x32x64xbf16, #tpu.memory_space<vmem>>, vector<1x32x64xbf16>
    %128 = vector.shape_cast %127 : vector<1x32x64xbf16> to vector<32x64xbf16>
    %cst_135 = arith.constant dense<0.000000e+00> : vector<30x64xf32>
    %129 = tpu.matmul %126, %128, %cst_135 {dimension_numbers = #tpu.dot_dimension_numbers<[1], [0], [0], [1], [0, 0, 1, 1], [], []>} : vector<30x32xbf16>, vector<32x64xbf16>, vector<30x64xf32> -> vector<30x64xf32>
    %130 = arith.addf %124, %129 : vector<30x64xf32>
    %c0_136 = arith.constant 0 : index
    %c0_137 = arith.constant 0 : index
    %131 = vector.load %arg11[%c0_136, %c0_137] : memref<1x64xf32, #tpu.memory_space<vmem>>, vector<1x64xf32>
    %132 = vector.broadcast %131 : vector<1x64xf32> to vector<30x64xf32>
    %133 = arith.mulf %130, %132 : vector<30x64xf32>
    %c0_138 = arith.constant 0 : index
    %c0_139 = arith.constant 0 : index
    %134 = vector.load %arg12[%c0_138, %c0_139] : memref<1x64xf32, #tpu.memory_space<vmem>>, vector<1x64xf32>
    %135 = vector.broadcast %134 : vector<1x64xf32> to vector<30x64xf32>
    %136 = arith.addf %133, %135 : vector<30x64xf32>
    %cst_140 = arith.constant 0.000000e+00 : f32
    %137 = vector.broadcast %cst_140 : f32 to vector<30x64xf32>
    %138 = arith.maximumf %136, %137 : vector<30x64xf32>
    %c0_141 = arith.constant 0 : index
    %c0_142 = arith.constant 0 : index
    %139 = vector.load %arg22[%c0_141, %c0_142] : memref<30x64xf32, #tpu.memory_space<vmem>>, vector<30x64xf32>
    tpu.vector_store %arg22[%c0_141, %c0_142], %138 {strides = array<i32>} : memref<30x64xf32, #tpu.memory_space<vmem>>, vector<30x64xf32>,
    %c0_143 = arith.constant 0 : index
    %c0_144 = arith.constant 0 : index
    %140 = tpu.strided_load %arg22[%c0_143, %c0_144] {strides = array<i32: 2, 1>} : memref<30x64xf32, #tpu.memory_space<vmem>>, vector<15x64xf32>
    %c1_145 = arith.constant 1 : index
    %c0_146 = arith.constant 0 : index
    %141 = tpu.strided_load %arg22[%c1_145, %c0_146] {strides = array<i32: 2, 1>} : memref<30x64xf32, #tpu.memory_space<vmem>>, vector<15x64xf32>
    %142 = arith.maximumf %140, %141 : vector<15x64xf32>
    %cst_147 = arith.constant 0.000000e+00 : f32
    %143 = vector.broadcast %cst_147 : f32 to vector<24x64xf32>
    %c0_148 = arith.constant 0 : index
    %c0_149 = arith.constant 0 : index
    %144 = vector.load %arg23[%c0_148, %c0_149] : memref<24x64xf32, #tpu.memory_space<vmem>>, vector<24x64xf32>
    tpu.vector_store %arg23[%c0_148, %c0_149], %143 {strides = array<i32>} : memref<24x64xf32, #tpu.memory_space<vmem>>, vector<24x64xf32>,
    %c8_150 = arith.constant 8 : index
    %c0_151 = arith.constant 0 : index
    %145 = vector.load %arg23[%c8_150, %c0_151] : memref<24x64xf32, #tpu.memory_space<vmem>>, vector<15x64xf32>
    tpu.vector_store %arg23[%c8_150, %c0_151], %142 {strides = array<i32>} : memref<24x64xf32, #tpu.memory_space<vmem>>, vector<15x64xf32>,
    %c7_152 = arith.constant 7 : index
    %c0_153 = arith.constant 0 : index
    %146 = vector.load %arg23[%c7_152, %c0_153] : memref<24x64xf32, #tpu.memory_space<vmem>>, vector<15x64xf32>
    %147 = arith.truncf %146 : vector<15x64xf32> to vector<15x64xbf16>
    %c0_154 = arith.constant 0 : index
    %c0_155 = arith.constant 0 : index
    %c0_156 = arith.constant 0 : index
    %148 = vector.load %arg5[%c0_154, %c0_155, %c0_156] : memref<3x64x64xbf16, #tpu.memory_space<vmem>>, vector<1x64x64xbf16>
    %149 = vector.shape_cast %148 : vector<1x64x64xbf16> to vector<64x64xbf16>
    %cst_157 = arith.constant dense<0.000000e+00> : vector<15x64xf32>
    %150 = tpu.matmul %147, %149, %cst_157 {dimension_numbers = #tpu.dot_dimension_numbers<[1], [0], [0], [1], [0, 0, 1, 1], [], []>} : vector<15x64xbf16>, vector<64x64xbf16>, vector<15x64xf32> -> vector<15x64xf32>
    %c8_158 = arith.constant 8 : index
    %c0_159 = arith.constant 0 : index
    %151 = vector.load %arg23[%c8_158, %c0_159] : memref<24x64xf32, #tpu.memory_space<vmem>>, vector<15x64xf32>
    %152 = arith.truncf %151 : vector<15x64xf32> to vector<15x64xbf16>
    %c1_160 = arith.constant 1 : index
    %c0_161 = arith.constant 0 : index
    %c0_162 = arith.constant 0 : index
    %153 = vector.load %arg5[%c1_160, %c0_161, %c0_162] : memref<3x64x64xbf16, #tpu.memory_space<vmem>>, vector<1x64x64xbf16>
    %154 = vector.shape_cast %153 : vector<1x64x64xbf16> to vector<64x64xbf16>
    %cst_163 = arith.constant dense<0.000000e+00> : vector<15x64xf32>
    %155 = tpu.matmul %152, %154, %cst_163 {dimension_numbers = #tpu.dot_dimension_numbers<[1], [0], [0], [1], [0, 0, 1, 1], [], []>} : vector<15x64xbf16>, vector<64x64xbf16>, vector<15x64xf32> -> vector<15x64xf32>
    %156 = arith.addf %150, %155 : vector<15x64xf32>
    %c9_164 = arith.constant 9 : index
    %c0_165 = arith.constant 0 : index
    %157 = vector.load %arg23[%c9_164, %c0_165] : memref<24x64xf32, #tpu.memory_space<vmem>>, vector<15x64xf32>
    %158 = arith.truncf %157 : vector<15x64xf32> to vector<15x64xbf16>
    %c2_166 = arith.constant 2 : index
    %c0_167 = arith.constant 0 : index
    %c0_168 = arith.constant 0 : index
    %159 = vector.load %arg5[%c2_166, %c0_167, %c0_168] : memref<3x64x64xbf16, #tpu.memory_space<vmem>>, vector<1x64x64xbf16>
    %160 = vector.shape_cast %159 : vector<1x64x64xbf16> to vector<64x64xbf16>
    %cst_169 = arith.constant dense<0.000000e+00> : vector<15x64xf32>
    %161 = tpu.matmul %158, %160, %cst_169 {dimension_numbers = #tpu.dot_dimension_numbers<[1], [0], [0], [1], [0, 0, 1, 1], [], []>} : vector<15x64xbf16>, vector<64x64xbf16>, vector<15x64xf32> -> vector<15x64xf32>
    %162 = arith.addf %156, %161 : vector<15x64xf32>
    %c0_170 = arith.constant 0 : index
    %c0_171 = arith.constant 0 : index
    %163 = vector.load %arg13[%c0_170, %c0_171] : memref<1x64xf32, #tpu.memory_space<vmem>>, vector<1x64xf32>
    %164 = vector.broadcast %163 : vector<1x64xf32> to vector<15x64xf32>
    %165 = arith.mulf %162, %164 : vector<15x64xf32>
    %c0_172 = arith.constant 0 : index
    %c0_173 = arith.constant 0 : index
    %166 = vector.load %arg14[%c0_172, %c0_173] : memref<1x64xf32, #tpu.memory_space<vmem>>, vector<1x64xf32>
    %167 = vector.broadcast %166 : vector<1x64xf32> to vector<15x64xf32>
    %168 = arith.addf %165, %167 : vector<15x64xf32>
    %cst_174 = arith.constant 0.000000e+00 : f32
    %169 = vector.broadcast %cst_174 : f32 to vector<15x64xf32>
    %170 = arith.maximumf %168, %169 : vector<15x64xf32>
    %c0_175 = arith.constant 0 : index
    %c0_176 = arith.constant 0 : index
    %171 = vector.load %arg24[%c0_175, %c0_176] : memref<15x64xf32, #tpu.memory_space<vmem>>, vector<15x64xf32>
    tpu.vector_store %arg24[%c0_175, %c0_176], %170 {strides = array<i32>} : memref<15x64xf32, #tpu.memory_space<vmem>>, vector<15x64xf32>,
    %c0_177 = arith.constant 0 : index
    %c0_178 = arith.constant 0 : index
    %172 = tpu.strided_load %arg24[%c0_177, %c0_178] {strides = array<i32: 2, 1>} : memref<15x64xf32, #tpu.memory_space<vmem>>, vector<7x64xf32>
    %c1_179 = arith.constant 1 : index
    %c0_180 = arith.constant 0 : index
    %173 = tpu.strided_load %arg24[%c1_179, %c0_180] {strides = array<i32: 2, 1>} : memref<15x64xf32, #tpu.memory_space<vmem>>, vector<7x64xf32>
    %174 = arith.maximumf %172, %173 : vector<7x64xf32>
    %cst_181 = arith.constant 0.000000e+00 : f32
    %175 = vector.broadcast %cst_181 : f32 to vector<16x64xf32>
    %c0_182 = arith.constant 0 : index
    %c0_183 = arith.constant 0 : index
    %176 = vector.load %arg25[%c0_182, %c0_183] : memref<16x64xf32, #tpu.memory_space<vmem>>, vector<16x64xf32>
    tpu.vector_store %arg25[%c0_182, %c0_183], %175 {strides = array<i32>} : memref<16x64xf32, #tpu.memory_space<vmem>>, vector<16x64xf32>,
    %c8_184 = arith.constant 8 : index
    %c0_185 = arith.constant 0 : index
    %177 = vector.load %arg25[%c8_184, %c0_185] : memref<16x64xf32, #tpu.memory_space<vmem>>, vector<7x64xf32>
    tpu.vector_store %arg25[%c8_184, %c0_185], %174 {strides = array<i32>} : memref<16x64xf32, #tpu.memory_space<vmem>>, vector<7x64xf32>,
    %c7_186 = arith.constant 7 : index
    %c0_187 = arith.constant 0 : index
    %178 = vector.load %arg25[%c7_186, %c0_187] : memref<16x64xf32, #tpu.memory_space<vmem>>, vector<7x64xf32>
    %179 = arith.truncf %178 : vector<7x64xf32> to vector<7x64xbf16>
    %c0_188 = arith.constant 0 : index
    %c0_189 = arith.constant 0 : index
    %c0_190 = arith.constant 0 : index
    %180 = vector.load %arg6[%c0_188, %c0_189, %c0_190] : memref<3x64x64xbf16, #tpu.memory_space<vmem>>, vector<1x64x64xbf16>
    %181 = vector.shape_cast %180 : vector<1x64x64xbf16> to vector<64x64xbf16>
    %cst_191 = arith.constant dense<0.000000e+00> : vector<7x64xf32>
    %182 = tpu.matmul %179, %181, %cst_191 {dimension_numbers = #tpu.dot_dimension_numbers<[1], [0], [0], [1], [0, 0, 1, 1], [], []>} : vector<7x64xbf16>, vector<64x64xbf16>, vector<7x64xf32> -> vector<7x64xf32>
    %c8_192 = arith.constant 8 : index
    %c0_193 = arith.constant 0 : index
    %183 = vector.load %arg25[%c8_192, %c0_193] : memref<16x64xf32, #tpu.memory_space<vmem>>, vector<7x64xf32>
    %184 = arith.truncf %183 : vector<7x64xf32> to vector<7x64xbf16>
    %c1_194 = arith.constant 1 : index
    %c0_195 = arith.constant 0 : index
    %c0_196 = arith.constant 0 : index
    %185 = vector.load %arg6[%c1_194, %c0_195, %c0_196] : memref<3x64x64xbf16, #tpu.memory_space<vmem>>, vector<1x64x64xbf16>
    %186 = vector.shape_cast %185 : vector<1x64x64xbf16> to vector<64x64xbf16>
    %cst_197 = arith.constant dense<0.000000e+00> : vector<7x64xf32>
    %187 = tpu.matmul %184, %186, %cst_197 {dimension_numbers = #tpu.dot_dimension_numbers<[1], [0], [0], [1], [0, 0, 1, 1], [], []>} : vector<7x64xbf16>, vector<64x64xbf16>, vector<7x64xf32> -> vector<7x64xf32>
    %188 = arith.addf %182, %187 : vector<7x64xf32>
    %c9_198 = arith.constant 9 : index
    %c0_199 = arith.constant 0 : index
    %189 = vector.load %arg25[%c9_198, %c0_199] : memref<16x64xf32, #tpu.memory_space<vmem>>, vector<7x64xf32>
    %190 = arith.truncf %189 : vector<7x64xf32> to vector<7x64xbf16>
    %c2_200 = arith.constant 2 : index
    %c0_201 = arith.constant 0 : index
    %c0_202 = arith.constant 0 : index
    %191 = vector.load %arg6[%c2_200, %c0_201, %c0_202] : memref<3x64x64xbf16, #tpu.memory_space<vmem>>, vector<1x64x64xbf16>
    %192 = vector.shape_cast %191 : vector<1x64x64xbf16> to vector<64x64xbf16>
    %cst_203 = arith.constant dense<0.000000e+00> : vector<7x64xf32>
    %193 = tpu.matmul %190, %192, %cst_203 {dimension_numbers = #tpu.dot_dimension_numbers<[1], [0], [0], [1], [0, 0, 1, 1], [], []>} : vector<7x64xbf16>, vector<64x64xbf16>, vector<7x64xf32> -> vector<7x64xf32>
    %194 = arith.addf %188, %193 : vector<7x64xf32>
    %c0_204 = arith.constant 0 : index
    %c0_205 = arith.constant 0 : index
    %195 = vector.load %arg15[%c0_204, %c0_205] : memref<1x64xf32, #tpu.memory_space<vmem>>, vector<1x64xf32>
    %196 = vector.broadcast %195 : vector<1x64xf32> to vector<7x64xf32>
    %197 = arith.mulf %194, %196 : vector<7x64xf32>
    %c0_206 = arith.constant 0 : index
    %c0_207 = arith.constant 0 : index
    %198 = vector.load %arg16[%c0_206, %c0_207] : memref<1x64xf32, #tpu.memory_space<vmem>>, vector<1x64xf32>
    %199 = vector.broadcast %198 : vector<1x64xf32> to vector<7x64xf32>
    %200 = arith.addf %197, %199 : vector<7x64xf32>
    %cst_208 = arith.constant 0.000000e+00 : f32
    %201 = vector.broadcast %cst_208 : f32 to vector<7x64xf32>
    %202 = arith.maximumf %200, %201 : vector<7x64xf32>
    %c0_209 = arith.constant 0 : index
    %c0_210 = arith.constant 0 : index
    %203 = vector.load %arg26[%c0_209, %c0_210] : memref<7x64xf32, #tpu.memory_space<vmem>>, vector<7x64xf32>
    tpu.vector_store %arg26[%c0_209, %c0_210], %202 {strides = array<i32>} : memref<7x64xf32, #tpu.memory_space<vmem>>, vector<7x64xf32>,
    %c0_211 = arith.constant 0 : index
    %c0_212 = arith.constant 0 : index
    %204 = tpu.strided_load %arg26[%c0_211, %c0_212] {strides = array<i32: 2, 1>} : memref<7x64xf32, #tpu.memory_space<vmem>>, vector<3x64xf32>
    %c1_213 = arith.constant 1 : index
    %c0_214 = arith.constant 0 : index
    %205 = tpu.strided_load %arg26[%c1_213, %c0_214] {strides = array<i32: 2, 1>} : memref<7x64xf32, #tpu.memory_space<vmem>>, vector<3x64xf32>
    %206 = arith.maximumf %204, %205 : vector<3x64xf32>
    %c0_215 = arith.constant 0 : index
    %c0_216 = arith.constant 0 : index
    %c0_217 = arith.constant 0 : index
    %207 = vector.load %arg17[%c0_215, %c0_216, %c0_217] : memref<1x3x64xf32, #tpu.memory_space<vmem>>, vector<1x3x64xf32>
    %208 = vector.shape_cast %207 : vector<1x3x64xf32> to vector<3x64xf32>
    %209 = vector.shape_cast %206 : vector<3x64xf32> to vector<1x3x64xf32>
    tpu.vector_store %arg17[%c0_215, %c0_216, %c0_217], %209 {strides = array<i32>} : memref<1x3x64xf32, #tpu.memory_space<vmem>>, vector<1x3x64xf32>,
    return
  }
  func.func @transform_0(%arg0: i32) -> (i32, i32, i32) {
    %c0_i32 = arith.constant 0 : i32
    %c0_i32_0 = arith.constant 0 : i32
    %c0_i32_1 = arith.constant 0 : i32
    return %arg0, %c0_i32, %c0_i32_0 : i32, i32, i32
  }
  func.func @transform_1(%arg0: i32) -> (i32, i32, i32) {
    %c0_i32 = arith.constant 0 : i32
    %c0_i32_0 = arith.constant 0 : i32
    %c0_i32_1 = arith.constant 0 : i32
    %c0_i32_2 = arith.constant 0 : i32
    return %c0_i32, %c0_i32_0, %c0_i32_1 : i32, i32, i32
  }
  func.func @transform_2(%arg0: i32) -> (i32, i32, i32) {
    %c0_i32 = arith.constant 0 : i32
    %c0_i32_0 = arith.constant 0 : i32
    %c0_i32_1 = arith.constant 0 : i32
    %c0_i32_2 = arith.constant 0 : i32
    return %c0_i32, %c0_i32_0, %c0_i32_1 : i32, i32, i32
  }
  func.func @transform_3(%arg0: i32) -> (i32, i32, i32) {
    %c0_i32 = arith.constant 0 : i32
    %c0_i32_0 = arith.constant 0 : i32
    %c0_i32_1 = arith.constant 0 : i32
    %c0_i32_2 = arith.constant 0 : i32
    return %c0_i32, %c0_i32_0, %c0_i32_1 : i32, i32, i32
  }
  func.func @transform_4(%arg0: i32) -> (i32, i32, i32) {
    %c0_i32 = arith.constant 0 : i32
    %c0_i32_0 = arith.constant 0 : i32
    %c0_i32_1 = arith.constant 0 : i32
    %c0_i32_2 = arith.constant 0 : i32
    return %c0_i32, %c0_i32_0, %c0_i32_1 : i32, i32, i32
  }
  func.func @transform_5(%arg0: i32) -> (i32, i32, i32) {
    %c0_i32 = arith.constant 0 : i32
    %c0_i32_0 = arith.constant 0 : i32
    %c0_i32_1 = arith.constant 0 : i32
    %c0_i32_2 = arith.constant 0 : i32
    return %c0_i32, %c0_i32_0, %c0_i32_1 : i32, i32, i32
  }
  func.func @transform_6(%arg0: i32) -> (i32, i32) {
    %c0_i32 = arith.constant 0 : i32
    %c0_i32_0 = arith.constant 0 : i32
    %c0_i32_1 = arith.constant 0 : i32
    return %c0_i32, %c0_i32_0 : i32, i32
  }
  func.func @transform_7(%arg0: i32) -> (i32, i32) {
    %c0_i32 = arith.constant 0 : i32
    %c0_i32_0 = arith.constant 0 : i32
    %c0_i32_1 = arith.constant 0 : i32
    return %c0_i32, %c0_i32_0 : i32, i32
  }
  func.func @transform_8(%arg0: i32) -> (i32, i32) {
    %c0_i32 = arith.constant 0 : i32
    %c0_i32_0 = arith.constant 0 : i32
    %c0_i32_1 = arith.constant 0 : i32
    return %c0_i32, %c0_i32_0 : i32, i32
  }
  func.func @transform_9(%arg0: i32) -> (i32, i32) {
    %c0_i32 = arith.constant 0 : i32
    %c0_i32_0 = arith.constant 0 : i32
    %c0_i32_1 = arith.constant 0 : i32
    return %c0_i32, %c0_i32_0 : i32, i32
  }
  func.func @transform_10(%arg0: i32) -> (i32, i32) {
    %c0_i32 = arith.constant 0 : i32
    %c0_i32_0 = arith.constant 0 : i32
    %c0_i32_1 = arith.constant 0 : i32
    return %c0_i32, %c0_i32_0 : i32, i32
  }
  func.func @transform_11(%arg0: i32) -> (i32, i32) {
    %c0_i32 = arith.constant 0 : i32
    %c0_i32_0 = arith.constant 0 : i32
    %c0_i32_1 = arith.constant 0 : i32
    return %c0_i32, %c0_i32_0 : i32, i32
  }
  func.func @transform_12(%arg0: i32) -> (i32, i32) {
    %c0_i32 = arith.constant 0 : i32
    %c0_i32_0 = arith.constant 0 : i32
    %c0_i32_1 = arith.constant 0 : i32
    return %c0_i32, %c0_i32_0 : i32, i32
  }
  func.func @transform_13(%arg0: i32) -> (i32, i32) {
    %c0_i32 = arith.constant 0 : i32
    %c0_i32_0 = arith.constant 0 : i32
    %c0_i32_1 = arith.constant 0 : i32
    return %c0_i32, %c0_i32_0 : i32, i32
  }
  func.func @transform_14(%arg0: i32) -> (i32, i32) {
    %c0_i32 = arith.constant 0 : i32
    %c0_i32_0 = arith.constant 0 : i32
    %c0_i32_1 = arith.constant 0 : i32
    return %c0_i32, %c0_i32_0 : i32, i32
  }
  func.func @transform_15(%arg0: i32) -> (i32, i32) {
    %c0_i32 = arith.constant 0 : i32
    %c0_i32_0 = arith.constant 0 : i32
    %c0_i32_1 = arith.constant 0 : i32
    return %c0_i32, %c0_i32_0 : i32, i32
  }
  func.func @transform_16(%arg0: i32) -> (i32, i32, i32) {
    %c0_i32 = arith.constant 0 : i32
    %c0_i32_0 = arith.constant 0 : i32
    %c0_i32_1 = arith.constant 0 : i32
    return %arg0, %c0_i32, %c0_i32_0 : i32, i32, i32
  }
}

</mosaic_0001>

<llo_original>
// kernel: conv_autoencoder_encoder.1
$region0: #{conv_autoencoder_encoder.1}
  #allocation0 [shape = 'u32[]', space=smem, size = 0x4, offset = 0x4, fixed_abs, tag = 'smem constant byte address 0x4 - core index']
  #allocation1 [shape = 'u32[144,128]{1,0:T(1,128)}', space=vmem, size = 0x12000, scoped, tag = 'internal scratch']
  #allocation2 [shape = 'f32[128,16]{1,0:T(8,128)}', space=vmem, size = 0x10000, scoped, tag = 'scratch operand']
  #allocation3 [shape = 'f32[69,16]{1,0:T(8,128)}', space=vmem, size = 0x9000, scoped, tag = 'scratch operand']
  #allocation4 [shape = 'f32[60,32]{1,0:T(8,128)}', space=vmem, size = 0x8000, scoped, tag = 'scratch operand']
  #allocation5 [shape = 'f32[39,32]{1,0:T(8,128)}', space=vmem, size = 0x5000, scoped, tag = 'scratch operand']
  #allocation6 [shape = 'f32[30,64]{1,0:T(8,128)}', space=vmem, size = 0x4000, scoped, tag = 'scratch operand']
  #allocation7 [shape = 'f32[24,64]{1,0:T(8,128)}', space=vmem, size = 0x3000, scoped, tag = 'scratch operand']
  #allocation8 [shape = 'f32[15,64]{1,0:T(8,128)}', space=vmem, size = 0x2000, scoped, tag = 'scratch operand']
  #allocation9 [shape = 'f32[16,64]{1,0:T(8,128)}', space=vmem, size = 0x2000, scoped, tag = 'scratch operand']
  #allocation10 [shape = 'f32[7,64]{1,0:T(8,128)}', space=vmem, size = 0x1000, scoped, tag = 'scratch operand']
  %s0 = inlined_call_operand.vmem [shape: bf16[2,129,8], index: 0, kind: input, shape index: {}]
  %s1 = inlined_call_operand.hbm [shape: bf16[11,8,16], index: 1, kind: input, shape index: {}]
  %s2 = inlined_call_operand.vmem [shape: bf16[3,16,32], index: 2, kind: input, shape index: {}]
  %s3 = inlined_call_operand.hbm [shape: bf16[3,32,64], index: 3, kind: input, shape index: {}]
  %s4 = inlined_call_operand.vmem [shape: bf16[3,64,64], index: 4, kind: input, shape index: {}]
  %s5 = inlined_call_operand.vmem [shape: bf16[3,64,64], index: 5, kind: input, shape index: {}]
  %s6 = inlined_call_operand.vmem [shape: f32[1,16], index: 6, kind: input, shape index: {}]
  %s7 = inlined_call_operand.vmem [shape: f32[1,16], index: 7, kind: input, shape index: {}]
  %s8 = inlined_call_operand.vmem [shape: f32[1,32], index: 8, kind: input, shape index: {}]
  %s9 = inlined_call_operand.vmem [shape: f32[1,32], index: 9, kind: input, shape index: {}]
  %s10 = inlined_call_operand.vmem [shape: f32[1,64], index: 10, kind: input, shape index: {}]
  %s11 = inlined_call_operand.vmem [shape: f32[1,64], index: 11, kind: input, shape index: {}]
  %s12 = inlined_call_operand.vmem [shape: f32[1,64], index: 12, kind: input, shape index: {}]
  %s13 = inlined_call_operand.vmem [shape: f32[1,64], index: 13, kind: input, shape index: {}]
  %s14 = inlined_call_operand.vmem [shape: f32[1,64], index: 14, kind: input, shape index: {}]
  %s15 = inlined_call_operand.vmem [shape: f32[1,64], index: 15, kind: input, shape index: {}]
  %s16 = inlined_call_operand.vmem [shape: f32[2,3,64], index: 16, kind: output, shape index: {}]
  %s17 = sld [smem:[#allocation0]]
  $region105: #{conv_autoencoder_encoder.1} parent=0
    _
  %s19 = ssub.s32 1, %s17
  %s20 = scalar_select 0, %s19, %s17
  $region1: #{conv_autoencoder_encoder.1} parent=0
    #allocation11 [shape = 'u8[22528]{0}', space=vmem, size = 0x5800, scoped, tag = 'input window, operand 1, single buffered']
    #allocation12 [shape = 's32[2]{0}', space=sflag, size = 0x8, scoped, tag = 'scoped memory for conv_autoencoder_encoder.1']
    #allocation13 [shape = 'u8[24576]{0}', space=vmem, size = 0x6000, scoped, tag = 'input window, operand 3, single buffered']
    #allocation14 [shape = 's32[1]{0}', space=sflag, size = 0x4, scoped, tag = 'scoped memory for conv_autoencoder_encoder.1']
    %21 = vsyncpa [#allocation12], 0
    %22 = vsyncpa [#allocation14], 0
    loop: start=0, step=1, limit=4
    $region2: #{conv_autoencoder_encoder.1} parent=1 // loop_pre_header
      _
    $region3: #{conv_autoencoder_encoder.1} parent=1 // loop_header
      %s24 = sphi 0, %s28
      %p25 = scmp.ge.s32.totalorder %s24, 4
      %s34 = sphi 0, %s36
      %s37 = sphi 0, %s34
      %s38 = sphi 0, %s37
      %s54 = sphi 0, %s38
      %s58 = sphi 0, %s58
      %s60 = sphi 0, %s58
      %s61 = sphi 0, %s60
      %s75 = sphi 0, %s61
      %s79 = sphi 0, %s79
      %s81 = sphi 0, %s79
      %s82 = sphi 0, %s81
      %s96 = sphi 0, %s82
      %s100 = sphi 0, %s100
      %s102 = sphi 0, %s100
      %s103 = sphi 0, %s102
      %s117 = sphi 0, %s103
      %s121 = sphi 0, %s121
      %s123 = sphi 0, %s121
      %s124 = sphi 0, %s123
      %s138 = sphi 0, %s124
      %s142 = sphi 0, %s142
      %s144 = sphi 0, %s142
      %s145 = sphi 0, %s144
      %s159 = sphi 0, %s145
      %s163 = sphi 0, %s163
      %s165 = sphi 0, %s163
      %s166 = sphi 0, %s165
      %s180 = sphi 0, %s166
      %s184 = sphi 0, %s184
      %s186 = sphi 0, %s184
      %s187 = sphi 0, %s186
      %s201 = sphi 0, %s187
      %s205 = sphi 0, %s205
      %s207 = sphi 0, %s205
      %s208 = sphi 0, %s207
      %s222 = sphi 0, %s208
      %s226 = sphi 0, %s226
      %s228 = sphi 0, %s226
      %s229 = sphi 0, %s228
      %s243 = sphi 0, %s229
      %s247 = sphi 0, %s247
      %s249 = sphi 0, %s247
      %s250 = sphi 0, %s249
      %s264 = sphi 0, %s250
      %s268 = sphi 0, %s268
      %s270 = sphi 0, %s268
      %s271 = sphi 0, %s270
      %s285 = sphi 0, %s271
      %s289 = sphi 0, %s289
      %s291 = sphi 0, %s289
      %s292 = sphi 0, %s291
      %s306 = sphi 0, %s292
      %s310 = sphi 0, %s310
      %s312 = sphi 0, %s310
      %s313 = sphi 0, %s312
      %s327 = sphi 0, %s313
      %s331 = sphi 0, %s331
      %s333 = sphi 0, %s331
      %s334 = sphi 0, %s333
      %s348 = sphi 0, %s334
      %s352 = sphi 0, %s352
      %s354 = sphi 0, %s352
      %s355 = sphi 0, %s354
      %s369 = sphi 0, %s355
      %s375 = sphi 0, %s377
      %s378 = sphi 0, %s375
      %s379 = sphi 0, %s378
      %s395 = sphi 0, %s379
    $region4: #{conv_autoencoder_encoder.1} parent=1 // loop_header_branch
      %27 = sbr.rel (%p25) target = $region8
    $region5: #{conv_autoencoder_encoder.1} parent=1 // loop_body
      %s29 = ssub.s32 %s24, 1
      %s30 = ssub.s32 %s24, 2
      %s31 = sadd.s32 %s24, 1
      %s32 = ssub.s32 %s24, %s31
      %p33 = scmp.eq.s32.totalorder %s32, 0
      %s35 = sadd.s32 %s34, 1
      %s36 = scalar_select %p33, %s34, %s35
      %p39 = pneg %p33
      %p40 = scmp.eq.s32.totalorder %s24, 1
      %p41 = por %p39, %p40
      %p42 = scmp.ne.s32.totalorder %s34, %s37
      %p43 = scmp.eq.s32.totalorder %s24, 0
      %p44 = por %p42, %p43
      %p45 = scmp.ne.s32.totalorder %s34, %s37
      %p46 = scmp.eq.s32.totalorder %s29, 1
      %p47 = por %p45, %p46
      %p48 = scmp.ne.s32.totalorder %s37, %s38
      %p49 = scmp.eq.s32.totalorder %s29, 0
      %p50 = por %p48, %p49
      %p51 = scmp.ne.s32.totalorder %s37, %s38
      %p52 = scmp.eq.s32.totalorder %s30, 1
      %p53 = por %p51, %p52
      %p55 = scmp.ne.s32.totalorder %s38, %s54
      %p56 = scmp.eq.s32.totalorder %s30, 0
      %p57 = por %p55, %p56
      %s59 = sadd.s32 %s58, 1
      %p62 = scmp.eq.s32.totalorder %s24, 1
      %p63 = scmp.ne.s32.totalorder %s58, %s60
      %p64 = scmp.eq.s32.totalorder %s24, 0
      %p65 = por %p63, %p64
      %p66 = scmp.ne.s32.totalorder %s58, %s60
      %p67 = scmp.eq.s32.totalorder %s29, 1
      %p68 = por %p66, %p67
      %p69 = scmp.ne.s32.totalorder %s60, %s61
      %p70 = scmp.eq.s32.totalorder %s29, 0
      %p71 = por %p69, %p70
      %p72 = scmp.ne.s32.totalorder %s60, %s61
      %p73 = scmp.eq.s32.totalorder %s30, 1
      %p74 = por %p72, %p73
      %p76 = scmp.ne.s32.totalorder %s61, %s75
      %p77 = scmp.eq.s32.totalorder %s30, 0
      %p78 = por %p76, %p77
      %s80 = sadd.s32 %s79, 1
      %p83 = scmp.eq.s32.totalorder %s24, 1
      %p84 = scmp.ne.s32.totalorder %s79, %s81
      %p85 = scmp.eq.s32.totalorder %s24, 0
      %p86 = por %p84, %p85
      %p87 = scmp.ne.s32.totalorder %s79, %s81
      %p88 = scmp.eq.s32.totalorder %s29, 1
      %p89 = por %p87, %p88
      %p90 = scmp.ne.s32.totalorder %s81, %s82
      %p91 = scmp.eq.s32.totalorder %s29, 0
      %p92 = por %p90, %p91
      %p93 = scmp.ne.s32.totalorder %s81, %s82
      %p94 = scmp.eq.s32.totalorder %s30, 1
      %p95 = por %p93, %p94
      %p97 = scmp.ne.s32.totalorder %s82, %s96
      %p98 = scmp.eq.s32.totalorder %s30, 0
      %p99 = por %p97, %p98
      %s101 = sadd.s32 %s100, 1
      %p104 = scmp.eq.s32.totalorder %s24, 1
      %p105 = scmp.ne.s32.totalorder %s100, %s102
      %p106 = scmp.eq.s32.totalorder %s24, 0
      %p107 = por %p105, %p106
      %p108 = scmp.ne.s32.totalorder %s100, %s102
      %p109 = scmp.eq.s32.totalorder %s29, 1
      %p110 = por %p108, %p109
      %p111 = scmp.ne.s32.totalorder %s102, %s103
      %p112 = scmp.eq.s32.totalorder %s29, 0
      %p113 = por %p111, %p112
      %p114 = scmp.ne.s32.totalorder %s102, %s103
      %p115 = scmp.eq.s32.totalorder %s30, 1
      %p116 = por %p114, %p115
      %p118 = scmp.ne.s32.totalorder %s103, %s117
      %p119 = scmp.eq.s32.totalorder %s30, 0
      %p120 = por %p118, %p119
      %s122 = sadd.s32 %s121, 1
      %p125 = scmp.eq.s32.totalorder %s24, 1
      %p126 = scmp.ne.s32.totalorder %s121, %s123
      %p127 = scmp.eq.s32.totalorder %s24, 0
      %p128 = por %p126, %p127
      %p129 = scmp.ne.s32.totalorder %s121, %s123
      %p130 = scmp.eq.s32.totalorder %s29, 1
      %p131 = por %p129, %p130
      %p132 = scmp.ne.s32.totalorder %s123, %s124
      %p133 = scmp.eq.s32.totalorder %s29, 0
      %p134 = por %p132, %p133
      %p135 = scmp.ne.s32.totalorder %s123, %s124
      %p136 = scmp.eq.s32.totalorder %s30, 1
      %p137 = por %p135, %p136
      %p139 = scmp.ne.s32.totalorder %s124, %s138
      %p140 = scmp.eq.s32.totalorder %s30, 0
      %p141 = por %p139, %p140
      %s143 = sadd.s32 %s142, 1
      %p146 = scmp.eq.s32.totalorder %s24, 1
      %p147 = scmp.ne.s32.totalorder %s142, %s144
      %p148 = scmp.eq.s32.totalorder %s24, 0
      %p149 = por %p147, %p148
      %p150 = scmp.ne.s32.totalorder %s142, %s144
      %p151 = scmp.eq.s32.totalorder %s29, 1
      %p152 = por %p150, %p151
      %p153 = scmp.ne.s32.totalorder %s144, %s145
      %p154 = scmp.eq.s32.totalorder %s29, 0
      %p155 = por %p153, %p154
      %p156 = scmp.ne.s32.totalorder %s144, %s145
      %p157 = scmp.eq.s32.totalorder %s30, 1
      %p158 = por %p156, %p157
      %p160 = scmp.ne.s32.totalorder %s145, %s159
      %p161 = scmp.eq.s32.totalorder %s30, 0
      %p162 = por %p160, %p161
      %s164 = sadd.s32 %s163, 1
      %p167 = scmp.eq.s32.totalorder %s24, 1
      %p168 = scmp.ne.s32.totalorder %s163, %s165
      %p169 = scmp.eq.s32.totalorder %s24, 0
      %p170 = por %p168, %p169
      %p171 = scmp.ne.s32.totalorder %s163, %s165
      %p172 = scmp.eq.s32.totalorder %s29, 1
      %p173 = por %p171, %p172
      %p174 = scmp.ne.s32.totalorder %s165, %s166
      %p175 = scmp.eq.s32.totalorder %s29, 0
      %p176 = por %p174, %p175
      %p177 = scmp.ne.s32.totalorder %s165, %s166
      %p178 = scmp.eq.s32.totalorder %s30, 1
      %p179 = por %p177, %p178
      %p181 = scmp.ne.s32.totalorder %s166, %s180
      %p182 = scmp.eq.s32.totalorder %s30, 0
      %p183 = por %p181, %p182
      %s185 = sadd.s32 %s184, 1
      %p188 = scmp.eq.s32.totalorder %s24, 1
      %p189 = scmp.ne.s32.totalorder %s184, %s186
      %p190 = scmp.eq.s32.totalorder %s24, 0
      %p191 = por %p189, %p190
      %p192 = scmp.ne.s32.totalorder %s184, %s186
      %p193 = scmp.eq.s32.totalorder %s29, 1
      %p194 = por %p192, %p193
      %p195 = scmp.ne.s32.totalorder %s186, %s187
      %p196 = scmp.eq.s32.totalorder %s29, 0
      %p197 = por %p195, %p196
      %p198 = scmp.ne.s32.totalorder %s186, %s187
      %p199 = scmp.eq.s32.totalorder %s30, 1
      %p200 = por %p198, %p199
      %p202 = scmp.ne.s32.totalorder %s187, %s201
      %p203 = scmp.eq.s32.totalorder %s30, 0
      %p204 = por %p202, %p203
      %s206 = sadd.s32 %s205, 1
      %p209 = scmp.eq.s32.totalorder %s24, 1
      %p210 = scmp.ne.s32.totalorder %s205, %s207
      %p211 = scmp.eq.s32.totalorder %s24, 0
      %p212 = por %p210, %p211
      %p213 = scmp.ne.s32.totalorder %s205, %s207
      %p214 = scmp.eq.s32.totalorder %s29, 1
      %p215 = por %p213, %p214
      %p216 = scmp.ne.s32.totalorder %s207, %s208
      %p217 = scmp.eq.s32.totalorder %s29, 0
      %p218 = por %p216, %p217
      %p219 = scmp.ne.s32.totalorder %s207, %s208
      %p220 = scmp.eq.s32.totalorder %s30, 1
      %p221 = por %p219, %p220
      %p223 = scmp.ne.s32.totalorder %s208, %s222
      %p224 = scmp.eq.s32.totalorder %s30, 0
      %p225 = por %p223, %p224
      %s227 = sadd.s32 %s226, 1
      %p230 = scmp.eq.s32.totalorder %s24, 1
      %p231 = scmp.ne.s32.totalorder %s226, %s228
      %p232 = scmp.eq.s32.totalorder %s24, 0
      %p233 = por %p231, %p232
      %p234 = scmp.ne.s32.totalorder %s226, %s228
      %p235 = scmp.eq.s32.totalorder %s29, 1
      %p236 = por %p234, %p235
      %p237 = scmp.ne.s32.totalorder %s228, %s229
      %p238 = scmp.eq.s32.totalorder %s29, 0
      %p239 = por %p237, %p238
      %p240 = scmp.ne.s32.totalorder %s228, %s229
      %p241 = scmp.eq.s32.totalorder %s30, 1
      %p242 = por %p240, %p241
      %p244 = scmp.ne.s32.totalorder %s229, %s243
      %p245 = scmp.eq.s32.totalorder %s30, 0
      %p246 = por %p244, %p245
      %s248 = sadd.s32 %s247, 1
      %p251 = scmp.eq.s32.totalorder %s24, 1
      %p252 = scmp.ne.s32.totalorder %s247, %s249
      %p253 = scmp.eq.s32.totalorder %s24, 0
      %p254 = por %p252, %p253
      %p255 = scmp.ne.s32.totalorder %s247, %s249
      %p256 = scmp.eq.s32.totalorder %s29, 1
      %p257 = por %p255, %p256
      %p258 = scmp.ne.s32.totalorder %s249, %s250
      %p259 = scmp.eq.s32.totalorder %s29, 0
      %p260 = por %p258, %p259
      %p261 = scmp.ne.s32.totalorder %s249, %s250
      %p262 = scmp.eq.s32.totalorder %s30, 1
      %p263 = por %p261, %p262
      %p265 = scmp.ne.s32.totalorder %s250, %s264
      %p266 = scmp.eq.s32.totalorder %s30, 0
      %p267 = por %p265, %p266
      %s269 = sadd.s32 %s268, 1
      %p272 = scmp.eq.s32.totalorder %s24, 1
      %p273 = scmp.ne.s32.totalorder %s268, %s270
      %p274 = scmp.eq.s32.totalorder %s24, 0
      %p275 = por %p273, %p274
      %p276 = scmp.ne.s32.totalorder %s268, %s270
      %p277 = scmp.eq.s32.totalorder %s29, 1
      %p278 = por %p276, %p277
      %p279 = scmp.ne.s32.totalorder %s270, %s271
      %p280 = scmp.eq.s32.totalorder %s29, 0
      %p281 = por %p279, %p280
      %p282 = scmp.ne.s32.totalorder %s270, %s271
      %p283 = scmp.eq.s32.totalorder %s30, 1
      %p284 = por %p282, %p283
      %p286 = scmp.ne.s32.totalorder %s271, %s285
      %p287 = scmp.eq.s32.totalorder %s30, 0
      %p288 = por %p286, %p287
      %s290 = sadd.s32 %s289, 1
      %p293 = scmp.eq.s32.totalorder %s24, 1
      %p294 = scmp.ne.s32.totalorder %s289, %s291
      %p295 = scmp.eq.s32.totalorder %s24, 0
      %p296 = por %p294, %p295
      %p297 = scmp.ne.s32.totalorder %s289, %s291
      %p298 = scmp.eq.s32.totalorder %s29, 1
      %p299 = por %p297, %p298
      %p300 = scmp.ne.s32.totalorder %s291, %s292
      %p301 = scmp.eq.s32.totalorder %s29, 0
      %p302 = por %p300, %p301
      %p303 = scmp.ne.s32.totalorder %s291, %s292
      %p304 = scmp.eq.s32.totalorder %s30, 1
      %p305 = por %p303, %p304
      %p307 = scmp.ne.s32.totalorder %s292, %s306
      %p308 = scmp.eq.s32.totalorder %s30, 0
      %p309 = por %p307, %p308
      %s311 = sadd.s32 %s310, 1
      %p314 = scmp.eq.s32.totalorder %s24, 1
      %p315 = scmp.ne.s32.totalorder %s310, %s312
      %p316 = scmp.eq.s32.totalorder %s24, 0
      %p317 = por %p315, %p316
      %p318 = scmp.ne.s32.totalorder %s310, %s312
      %p319 = scmp.eq.s32.totalorder %s29, 1
      %p320 = por %p318, %p319
      %p321 = scmp.ne.s32.totalorder %s312, %s313
      %p322 = scmp.eq.s32.totalorder %s29, 0
      %p323 = por %p321, %p322
      %p324 = scmp.ne.s32.totalorder %s312, %s313
      %p325 = scmp.eq.s32.totalorder %s30, 1
      %p326 = por %p324, %p325
      %p328 = scmp.ne.s32.totalorder %s313, %s327
      %p329 = scmp.eq.s32.totalorder %s30, 0
      %p330 = por %p328, %p329
      %s332 = sadd.s32 %s331, 1
      %p335 = scmp.eq.s32.totalorder %s24, 1
      %p336 = scmp.ne.s32.totalorder %s331, %s333
      %p337 = scmp.eq.s32.totalorder %s24, 0
      %p338 = por %p336, %p337
      %p339 = scmp.ne.s32.totalorder %s331, %s333
      %p340 = scmp.eq.s32.totalorder %s29, 1
      %p341 = por %p339, %p340
      %p342 = scmp.ne.s32.totalorder %s333, %s334
      %p343 = scmp.eq.s32.totalorder %s29, 0
      %p344 = por %p342, %p343
      %p345 = scmp.ne.s32.totalorder %s333, %s334
      %p346 = scmp.eq.s32.totalorder %s30, 1
      %p347 = por %p345, %p346
      %p349 = scmp.ne.s32.totalorder %s334, %s348
      %p350 = scmp.eq.s32.totalorder %s30, 0
      %p351 = por %p349, %p350
      %s353 = sadd.s32 %s352, 1
      %p356 = scmp.eq.s32.totalorder %s24, 1
      %p357 = scmp.ne.s32.totalorder %s352, %s354
      %p358 = scmp.eq.s32.totalorder %s24, 0
      %p359 = por %p357, %p358
      %p360 = scmp.ne.s32.totalorder %s352, %s354
      %p361 = scmp.eq.s32.totalorder %s29, 1
      %p362 = por %p360, %p361
      %p363 = scmp.ne.s32.totalorder %s354, %s355
      %p364 = scmp.eq.s32.totalorder %s29, 0
      %p365 = por %p363, %p364
      %p366 = scmp.ne.s32.totalorder %s354, %s355
      %p367 = scmp.eq.s32.totalorder %s30, 1
      %p368 = por %p366, %p367
      %p370 = scmp.ne.s32.totalorder %s355, %s369
      %p371 = scmp.eq.s32.totalorder %s30, 0
      %p372 = por %p370, %p371
      %s373 = ssub.s32 %s24, %s31
      %p374 = scmp.eq.s32.totalorder %s373, 0
      %s376 = sadd.s32 %s375, 1
      %s377 = scalar_select %p374, %s375, %s376
      %p380 = pneg %p374
      %p381 = scmp.eq.s32.totalorder %s24, 1
      %p382 = por %p380, %p381
      %p383 = scmp.ne.s32.totalorder %s375, %s378
      %p384 = scmp.eq.s32.totalorder %s24, 0
      %p385 = por %p383, %p384
      %p386 = scmp.ne.s32.totalorder %s375, %s378
      %p387 = scmp.eq.s32.totalorder %s29, 1
      %p388 = por %p386, %p387
      %p389 = scmp.ne.s32.totalorder %s378, %s379
      %p390 = scmp.eq.s32.totalorder %s29, 0
      %p391 = por %p389, %p390
      %p392 = scmp.ne.s32.totalorder %s378, %s379
      %p393 = scmp.eq.s32.totalorder %s30, 1
      %p394 = por %p392, %p393
      %p396 = scmp.ne.s32.totalorder %s379, %s395
      %p397 = scmp.eq.s32.totalorder %s30, 0
      %p398 = por %p396, %p397
      %p399 = scmp.le.s32.totalorder 1, %s24
      %p400 = scmp.lt.s32.totalorder %s24, 3
      %p401 = pnand %p399, %p400
      %p402 = pneg %p401
      // Predicated region
      $region9: #{conv_autoencoder_encoder.1} parent=5 // pred_check
        _
      $region10: #{conv_autoencoder_encoder.1} parent=5 // pred_check_branch
        %404 = sbr.rel (%p401) target = $region12
      $region11: #{conv_autoencoder_encoder.1} parent=5 // pred_region
        %s405 = ssub.s32 %s24, 1
        // Predicated region
        $region13: #{conv_autoencoder_encoder.1} parent=11 // pred_check
          %p406 = pneg %p71
        $region14: #{conv_autoencoder_encoder.1} parent=11 // pred_check_branch
          %408 = sbr.rel (%p406) target = $region16
        $region15: #{conv_autoencoder_encoder.1} parent=11 // pred_region
          %s410 = ssub.s32 704, 704
          %411 = vsyncadd [#allocation12], %s410
          %s412 = sshll.u32 [#allocation11], 4
          %s413 = int_to_ptr.vmem [resolvable:$true] %s412
          %418 = dma.hbm_to_vmem [thread:$0]  %s1, 704, %s413, [#allocation12], 64, 64, 4
        $region16: #{conv_autoencoder_encoder.1} parent=11 // pred_fallthru
          _
        // Predicated region
        $region17: #{conv_autoencoder_encoder.1} parent=11 // pred_check
          %p419 = pneg %p92
        $region18: #{conv_autoencoder_encoder.1} parent=11 // pred_check_branch
          %421 = sbr.rel (%p419) target = $region20
        $region19: #{conv_autoencoder_encoder.1} parent=11 // pred_region
          _
        $region20: #{conv_autoencoder_encoder.1} parent=11 // pred_fallthru
          _
        // Predicated region
        $region21: #{conv_autoencoder_encoder.1} parent=11 // pred_check
          %p422 = pneg %p113
        $region22: #{conv_autoencoder_encoder.1} parent=11 // pred_check_branch
          %424 = sbr.rel (%p422) target = $region24
        $region23: #{conv_autoencoder_encoder.1} parent=11 // pred_region
          %s426 = ssub.s32 768, 768
          %427 = vsyncadd [#allocation14], %s426
          %s428 = sshll.u32 [#allocation13], 4
          %s429 = int_to_ptr.vmem [resolvable:$true] %s428
          %434 = dma.hbm_to_vmem [thread:$0]  %s3, 768, %s429, [#allocation14], 64, 64, 4
        $region24: #{conv_autoencoder_encoder.1} parent=11 // pred_fallthru
          _
        // Predicated region
        $region25: #{conv_autoencoder_encoder.1} parent=11 // pred_check
          %p435 = pneg %p134
        $region26: #{conv_autoencoder_encoder.1} parent=11 // pred_check_branch
          %437 = sbr.rel (%p435) target = $region28
        $region27: #{conv_autoencoder_encoder.1} parent=11 // pred_region
          _
        $region28: #{conv_autoencoder_encoder.1} parent=11 // pred_fallthru
          _
        // Predicated region
        $region29: #{conv_autoencoder_encoder.1} parent=11 // pred_check
          %p438 = pneg %p155
        $region30: #{conv_autoencoder_encoder.1} parent=11 // pred_check_branch
          %440 = sbr.rel (%p438) target = $region32
        $region31: #{conv_autoencoder_encoder.1} parent=11 // pred_region
          _
        $region32: #{conv_autoencoder_encoder.1} parent=11 // pred_fallthru
          _
        // Predicated region
        $region33: #{conv_autoencoder_encoder.1} parent=11 // pred_check
          %p441 = pneg %p176
        $region34: #{conv_autoencoder_encoder.1} parent=11 // pred_check_branch
          %443 = sbr.rel (%p441) target = $region36
        $region35: #{conv_autoencoder_encoder.1} parent=11 // pred_region
          _
        $region36: #{conv_autoencoder_encoder.1} parent=11 // pred_fallthru
          _
        // Predicated region
        $region37: #{conv_autoencoder_encoder.1} parent=11 // pred_check
          %p444 = pneg %p197
        $region38: #{conv_autoencoder_encoder.1} parent=11 // pred_check_branch
          %446 = sbr.rel (%p444) target = $region40
        $region39: #{conv_autoencoder_encoder.1} parent=11 // pred_region
          _
        $region40: #{conv_autoencoder_encoder.1} parent=11 // pred_fallthru
          _
        // Predicated region
        $region41: #{conv_autoencoder_encoder.1} parent=11 // pred_check
          %p447 = pneg %p218
        $region42: #{conv_autoencoder_encoder.1} parent=11 // pred_check_branch
          %449 = sbr.rel (%p447) target = $region44
        $region43: #{conv_autoencoder_encoder.1} parent=11 // pred_region
          _
        $region44: #{conv_autoencoder_encoder.1} parent=11 // pred_fallthru
          _
        // Predicated region
        $region45: #{conv_autoencoder_encoder.1} parent=11 // pred_check
          %p450 = pneg %p239
        $region46: #{conv_autoencoder_encoder.1} parent=11 // pred_check_branch
          %452 = sbr.rel (%p450) target = $region48
        $region47: #{conv_autoencoder_encoder.1} parent=11 // pred_region
          _
        $region48: #{conv_autoencoder_encoder.1} parent=11 // pred_fallthru
          _
        // Predicated region
        $region49: #{conv_autoencoder_encoder.1} parent=11 // pred_check
          %p453 = pneg %p260
        $region50: #{conv_autoencoder_encoder.1} parent=11 // pred_check_branch
          %455 = sbr.rel (%p453) target = $region52
        $region51: #{conv_autoencoder_encoder.1} parent=11 // pred_region
          _
        $region52: #{conv_autoencoder_encoder.1} parent=11 // pred_fallthru
          _
        // Predicated region
        $region53: #{conv_autoencoder_encoder.1} parent=11 // pred_check
          %p456 = pneg %p281
        $region54: #{conv_autoencoder_encoder.1} parent=11 // pred_check_branch
          %458 = sbr.rel (%p456) target = $region56
        $region55: #{conv_autoencoder_encoder.1} parent=11 // pred_region
          _
        $region56: #{conv_autoencoder_encoder.1} parent=11 // pred_fallthru
          _
        // Predicated region
        $region57: #{conv_autoencoder_encoder.1} parent=11 // pred_check
          %p459 = pneg %p302
        $region58: #{conv_autoencoder_encoder.1} parent=11 // pred_check_branch
          %461 = sbr.rel (%p459) target = $region60
        $region59: #{conv_autoencoder_encoder.1} parent=11 // pred_region
          _
        $region60: #{conv_autoencoder_encoder.1} parent=11 // pred_fallthru
          _
        // Predicated region
        $region61: #{conv_autoencoder_encoder.1} parent=11 // pred_check
          %p462 = pneg %p323
        $region62: #{conv_autoencoder_encoder.1} parent=11 // pred_check_branch
          %464 = sbr.rel (%p462) target = $region64
        $region63: #{conv_autoencoder_encoder.1} parent=11 // pred_region
          _
        $region64: #{conv_autoencoder_encoder.1} parent=11 // pred_fallthru
          _
        // Predicated region
        $region65: #{conv_autoencoder_encoder.1} parent=11 // pred_check
          %p465 = pneg %p344
        $region66: #{conv_autoencoder_encoder.1} parent=11 // pred_check_branch
          %467 = sbr.rel (%p465) target = $region68
        $region67: #{conv_autoencoder_encoder.1} parent=11 // pred_region
          _
        $region68: #{conv_autoencoder_encoder.1} parent=11 // pred_fallthru
          _
        // Predicated region
        $region69: #{conv_autoencoder_encoder.1} parent=11 // pred_check
          %p468 = pneg %p365
        $region70: #{conv_autoencoder_encoder.1} parent=11 // pred_check_branch
          %470 = sbr.rel (%p468) target = $region72
        $region71: #{conv_autoencoder_encoder.1} parent=11 // pred_region
          _
        $region72: #{conv_autoencoder_encoder.1} parent=11 // pred_fallthru
          _
      $region12: #{conv_autoencoder_encoder.1} parent=5 // pred_fallthru
        _
      %p471 = scmp.lt.s32.totalorder %s24, 2
      // Predicated region
      $region73: #{conv_autoencoder_encoder.1} parent=5 // pred_check
        %p472 = pneg %p471
      $region74: #{conv_autoencoder_encoder.1} parent=5 // pred_check_branch
        %474 = sbr.rel (%p472) target = $region76
      $region75: #{conv_autoencoder_encoder.1} parent=5 // pred_region
        // Predicated region
        $region77: #{conv_autoencoder_encoder.1} parent=75 // pred_check
          %p475 = pneg %p44
        $region78: #{conv_autoencoder_encoder.1} parent=75 // pred_check_branch
          %477 = sbr.rel (%p475) target = $region80
        $region79: #{conv_autoencoder_encoder.1} parent=75 // pred_region
          %p478 = scmp.lt.s32.totalorder %s24, 1
          %s479 = scalar_select %p478, %s24, 1
          %s480 = smul.addr %s479, 17
          %s481 = smul.addr %s480, 4
          %s482 = scalar_lea.vmem %s0, %s481
        $region80: #{conv_autoencoder_encoder.1} parent=75 // pred_fallthru
          _
      $region76: #{conv_autoencoder_encoder.1} parent=5 // pred_fallthru
        _
      %p483 = scmp.le.s32.totalorder 1, %s24
      %p484 = scmp.lt.s32.totalorder %s24, 3
      %p485 = pnand %p483, %p484
      %p486 = pneg %p485
      // Predicated region
      $region81: #{conv_autoencoder_encoder.1} parent=5 // pred_check
        _
      $region82: #{conv_autoencoder_encoder.1} parent=5 // pred_check_branch
        %488 = sbr.rel (%p485) target = $region84
      $region83: #{conv_autoencoder_encoder.1} parent=5 // pred_region
        %s489 = ssub.s32 %s24, 1
        // Predicated region
        $region85: #{conv_autoencoder_encoder.1} parent=83 // pred_check
          %p490 = pneg %p71
        $region86: #{conv_autoencoder_encoder.1} parent=83 // pred_check_branch
          %492 = sbr.rel (%p490) target = $region88
        $region87: #{conv_autoencoder_encoder.1} parent=83 // pred_region
          %493 = dma.done [#allocation12], 704
        $region88: #{conv_autoencoder_encoder.1} parent=83 // pred_fallthru
          _
        // Predicated region
        $region89: #{conv_autoencoder_encoder.1} parent=83 // pred_check
          %p494 = pneg %p113
        $region90: #{conv_autoencoder_encoder.1} parent=83 // pred_check_branch
          %496 = sbr.rel (%p494) target = $region92
        $region91: #{conv_autoencoder_encoder.1} parent=83 // pred_region
          %497 = dma.done [#allocation14], 768
        $region92: #{conv_autoencoder_encoder.1} parent=83 // pred_fallthru
          _
        %p498 = scmp.lt.s32.totalorder %s29, 1
        %s499 = scalar_select %p498, %s29, 1
        %s500 = smul.addr %s499, 17
        %s501 = smul.addr %s500, 4
        %s502 = scalar_lea.vmem %s0, %s501
        %p503 = pneg %p50
        %p504 = pneg %p47
        %p505 = pneg %p71
        %p506 = pneg %p68
        %p507 = pneg %p92
        %p508 = pneg %p89
        %p509 = pneg %p113
        %p510 = pneg %p110
        %p511 = pneg %p134
        %p512 = pneg %p131
        %p513 = pneg %p155
        %p514 = pneg %p152
        %p515 = pneg %p176
        %p516 = pneg %p173
        %p517 = pneg %p197
        %p518 = pneg %p194
        %p519 = pneg %p218
        %p520 = pneg %p215
        %p521 = pneg %p239
        %p522 = pneg %p236
        %p523 = pneg %p260
        %p524 = pneg %p257
        %p525 = pneg %p281
        %p526 = pneg %p278
        %p527 = pneg %p302
        %p528 = pneg %p299
        %p529 = pneg %p323
        %p530 = pneg %p320
        %p531 = pneg %p344
        %p532 = pneg %p341
        %p533 = pneg %p365
        %p534 = pneg %p362
        %p535 = pneg %p391
        %p536 = pneg %p388
        %p537 = scmp.lt.s32.totalorder %s29, 1
        %s538 = scalar_select %p537, %s29, 1
        %s539 = smul.addr %s538, 4
        %s540 = scalar_lea.vmem %s16, %s539
        %p541 = scmp.lt.s32.totalorder %s29, 1
        %s542 = scalar_select %p541, %s29, 1
        %s543 = smul.addr %s542, 17
        %s544 = smul.addr %s543, 4
        %s545 = scalar_lea.vmem %s0, %s544
        %p546 = scmp.lt.s32.totalorder %s29, 1
        %s547 = scalar_select %p546, %s29, 1
        %s548 = smul.addr %s547, 4
        %s549 = scalar_lea.vmem %s16, %s548
        %v551 = vld [vmem:[%s545] sm:$0xf]
        %v552 = vld [vmem:[%s545 + $0x4] sm:$0xf]
        %v553 = vld [vmem:[%s545 + $0x8] sm:$0xf]
        %v554 = vld [vmem:[%s545 + $0xc] sm:$0xf]
        %v555 = vld [vmem:[%s545 + $0x10] sm:$0xf]
        %v556 = vld [vmem:[%s545 + $0x14] sm:$0xf]
        %v557 = vld [vmem:[%s545 + $0x18] sm:$0xf]
        %v558 = vld [vmem:[%s545 + $0x1c] sm:$0xf]
        %v559 = vld [vmem:[%s545 + $0x20] sm:$0xf]
        %v560 = vld [vmem:[%s545 + $0x24] sm:$0xf]
        %v561 = vld [vmem:[%s545 + $0x28] sm:$0xf]
        %v562 = vld [vmem:[%s545 + $0x2c] sm:$0xf]
        %v563 = vld [vmem:[%s545 + $0x30] sm:$0xf]
        %v564 = vld [vmem:[%s545 + $0x34] sm:$0xf]
        %v565 = vld [vmem:[%s545 + $0x38] sm:$0xf]
        %v566 = vld [vmem:[#allocation11] sm:$0xf]
        %s567 = scalar_lea.vmem [#allocation11], 4
        %v568 = vld [vmem:[%s567] sm:$0xf]
        %v584 = vunpack.c.l.b16 %v551
        %v585 = vunpack.c.l.b16 %v552
        %v586 = vunpack.c.l.b16 %v553
        %v587 = vunpack.c.l.b16 %v554
        %v588 = vunpack.c.l.b16 %v555
        %v589 = vunpack.c.l.b16 %v556
        %v590 = vunpack.c.l.b16 %v557
        %v591 = vunpack.c.l.b16 %v558
        %v592 = vunpack.c.l.b16 %v559
        %v593 = vunpack.c.l.b16 %v560
        %v594 = vunpack.c.l.b16 %v561
        %v595 = vunpack.c.l.b16 %v562
        %v596 = vunpack.c.l.b16 %v563
        %v597 = vunpack.c.l.b16 %v564
        %v598 = vunpack.c.l.b16 %v565
        %v599 = vpack.c.b16 %v585, %v584
        %v600 = vpack.c.b16 %v587, %v586
        %v601 = vpack.c.b16 %v589, %v588
        %v602 = vpack.c.b16 %v591, %v590
        %v603 = vpack.c.b16 %v593, %v592
        %v604 = vpack.c.b16 %v595, %v594
        %v605 = vpack.c.b16 %v597, %v596
        %v606 = vpack.c.b16 %v598, %v598
        %vm607 = vsmask.f32 7424
        %v609 = vshrl.u32 %v599, 16
        %v611 = vshll.u32 %v599, 16
        %v613 = vrot.slane %v611, 1
        %v614 = vor.u32 %v609, %v613
        %v616 = vshll.u32 %v600, 16
        %v618 = vrot.slane %v616, 1
        %v619 = vsel %vm607, %v614, %v618
        %v620 = vshrl.u32 %v600, 16
        %v622 = vor.u32 %v620, %v618
        %v624 = vshll.u32 %v601, 16
        %v626 = vrot.slane %v624, 1
        %v627 = vsel %vm607, %v622, %v626
        %v628 = vshrl.u32 %v601, 16
        %v630 = vor.u32 %v628, %v626
        %v632 = vshll.u32 %v602, 16
        %v634 = vrot.slane %v632, 1
        %v635 = vsel %vm607, %v630, %v634
        %v636 = vshrl.u32 %v602, 16
        %v638 = vor.u32 %v636, %v634
        %v640 = vshll.u32 %v603, 16
        %v642 = vrot.slane %v640, 1
        %v643 = vsel %vm607, %v638, %v642
        %v644 = vshrl.u32 %v603, 16
        %v646 = vor.u32 %v644, %v642
        %v648 = vshll.u32 %v604, 16
        %v650 = vrot.slane %v648, 1
        %v651 = vsel %vm607, %v646, %v650
        %v652 = vshrl.u32 %v604, 16
        %v654 = vor.u32 %v652, %v650
        %v656 = vshll.u32 %v605, 16
        %v658 = vrot.slane %v656, 1
        %v659 = vsel %vm607, %v654, %v658
        %v660 = vshrl.u32 %v605, 16
        %v662 = vor.u32 %v660, %v658
        %v664 = vshll.u32 %v606, 16
        %v666 = vrot.slane %v664, 1
        %v667 = vsel %vm607, %v662, %v666
        %v668 = vshrl.u32 %v606, 16
        %v670 = vor.u32 %v668, %v666
        %vm671 = vcmask 64512
        %v673 = vsel %vm671, %v619, 0
        %v676 = vsel %vm671, %v627, 0
        %v679 = vsel %vm671, %v635, 0
        %v682 = vsel %vm671, %v643, 0
        %v685 = vsel %vm671, %v651, 0
        %v688 = vsel %vm671, %v659, 0
        %v691 = vsel %vm671, %v667, 0
        %v694 = vsel %vm671, %v670, 0
        %vm696 = vcmask 1043456
        %v698 = vsel %vm696, %v568, 0
        %700 = vmatprep.subr.bf16.mxu0 0
        %701 = vmatpush1.bf16.msra.mxu0 %v698
        %702 = vmatprep.subr.bf16.mxu0 0
        %703 = vmatpush1.bf16.msra.mxu0 0
        %704 = vmatprep.subr.bf16.mxu0 0
        %705 = vmatpush1.bf16.msra.mxu0 0
        %706 = vmatprep.subr.bf16.mxu0 0
        %707 = vmatpush1.bf16.msra.mxu0 0
        %708 = vmatprep.subr.bf16.mxu0 0
        %709 = vmatpush1.bf16.msra.mxu0 0
        %710 = vmatprep.subr.bf16.mxu0 0
        %711 = vmatpush1.bf16.msra.mxu0 0
        %712 = vmatprep.subr.bf16.mxu0 0
        %713 = vmatpush1.bf16.msra.mxu0 0
        %714 = vmatprep.subr.bf16.mxu0 0
        %715 = vmatpush1.bf16.msra.mxu0 0
        %716 = vmatprep.subr.bf16.mxu0 0
        %717 = vmatpush1.bf16.msra.mxu0 0
        %718 = vmatprep.subr.bf16.mxu0 0
        %719 = vmatpush1.bf16.msra.mxu0 0
        %720 = vmatprep.subr.bf16.mxu0 0
        %721 = vmatpush1.bf16.msra.mxu0 0
        %722 = vmatprep.subr.bf16.mxu0 0
        %723 = vmatpush1.bf16.msra.mxu0 0
        %724 = vmatprep.subr.bf16.mxu0 0
        %725 = vmatpush1.bf16.msra.mxu0 0
        %726 = vmatprep.subr.bf16.mxu0 0
        %727 = vmatpush1.bf16.msra.mxu0 0
        %728 = vmatprep.subr.bf16.mxu0 0
        %729 = vmatpush1.bf16.msra.mxu0 0
        %730 = vmatprep.subr.bf16.mxu0 0
        %731 = vmatpush1.bf16.msra.mxu0 0
        %732 = vmatprep.mubr.bf16.mxu0 0
        %733 = vmatmul.mubr.bf16.gmra.mrb[0].mxu0 %v673
        %v734 = vpop.f32.mrb[0].mxu0
        %v735 = vadd.f32 0.0, %v734
        %v736 = vpop.f32.mrb[0].mxu0
        %v737 = vpop.f32.mrb[0].mxu0
        %v738 = vadd.f32 0.0, %v737
        %v739 = vpop.f32.mrb[0].mxu0
        %740 = vmatprep.mubr.bf16.mxu0 0
        %741 = vmatmul.mubr.bf16.gmra.mrb[0].mxu0 %v676
        %v742 = vpop.f32.mrb[0].mxu0
        %v743 = vadd.f32 0.0, %v742
        %v744 = vpop.f32.mrb[0].mxu0
        %v745 = vpop.f32.mrb[0].mxu0
        %v746 = vadd.f32 0.0, %v745
        %v747 = vpop.f32.mrb[0].mxu0
        %748 = vmatprep.mubr.bf16.mxu0 0
        %749 = vmatmul.mubr.bf16.gmra.mrb[0].mxu0 %v679
        %v750 = vpop.f32.mrb[0].mxu0
        %v751 = vadd.f32 0.0, %v750
        %v752 = vpop.f32.mrb[0].mxu0
        %v753 = vpop.f32.mrb[0].mxu0
        %v754 = vadd.f32 0.0, %v753
        %v755 = vpop.f32.mrb[0].mxu0
        %756 = vmatprep.mubr.bf16.mxu0 0
        %757 = vmatmul.mubr.bf16.gmra.mrb[0].mxu0 %v682
        %v758 = vpop.f32.mrb[0].mxu0
        %v759 = vadd.f32 0.0, %v758
        %v760 = vpop.f32.mrb[0].mxu0
        %v761 = vpop.f32.mrb[0].mxu0
        %v762 = vadd.f32 0.0, %v761
        %v763 = vpop.f32.mrb[0].mxu0
        %764 = vmatprep.mubr.bf16.mxu0 0
        %765 = vmatmul.mubr.bf16.gmra.mrb[0].mxu0 %v685
        %v766 = vpop.f32.mrb[0].mxu0
        %v767 = vadd.f32 0.0, %v766
        %v768 = vpop.f32.mrb[0].mxu0
        %v769 = vpop.f32.mrb[0].mxu0
        %v770 = vadd.f32 0.0, %v769
        %v771 = vpop.f32.mrb[0].mxu0
        %772 = vmatprep.mubr.bf16.mxu0 0
        %773 = vmatmul.mubr.bf16.gmra.mrb[0].mxu0 %v688
        %v774 = vpop.f32.mrb[0].mxu0
        %v775 = vadd.f32 0.0, %v774
        %v776 = vpop.f32.mrb[0].mxu0
        %v777 = vpop.f32.mrb[0].mxu0
        %v778 = vadd.f32 0.0, %v777
        %v779 = vpop.f32.mrb[0].mxu0
        %780 = vmatprep.mubr.bf16.mxu0 0
        %781 = vmatmul.mubr.bf16.gmra.mrb[0].mxu0 %v691
        %v782 = vpop.f32.mrb[0].mxu0
        %v783 = vadd.f32 0.0, %v782
        %v784 = vpop.f32.mrb[0].mxu0
        %v785 = vpop.f32.mrb[0].mxu0
        %v786 = vadd.f32 0.0, %v785
        %v787 = vpop.f32.mrb[0].mxu0
        %788 = vmatprep.mubr.bf16.mxu0 0
        %789 = vmatmul.mubr.bf16.gmra.mrb[0].mxu0 %v694
        %v790 = vpop.f32.mrb[0].mxu0
        %v791 = vadd.f32 0.0, %v790
        %v792 = vpop.f32.mrb[0].mxu0
        %v793 = vpop.f32.mrb[0].mxu0
        %v794 = vpop.f32.mrb[0].mxu0
        %795 = vdwg.mxu0
        %v796 = vsel %vm671, %v599, 0
        %v798 = vsel %vm671, %v600, 0
        %v800 = vsel %vm671, %v601, 0
        %v802 = vsel %vm671, %v602, 0
        %v804 = vsel %vm671, %v603, 0
        %v806 = vsel %vm671, %v604, 0
        %v808 = vsel %vm671, %v605, 0
        %v810 = vsel %vm671, %v606, 0
        %v813 = vsel %vm696, %v566, 0
        %815 = vmatprep.subr.bf16.mxu0 0
        %816 = vmatpush1.bf16.msra.mxu0 %v813
        %817 = vmatprep.subr.bf16.mxu0 0
        %818 = vmatpush1.bf16.msra.mxu0 0
        %819 = vmatprep.subr.bf16.mxu0 0
        %820 = vmatpush1.bf16.msra.mxu0 0
        %821 = vmatprep.subr.bf16.mxu0 0
        %822 = vmatpush1.bf16.msra.mxu0 0
        %823 = vmatprep.subr.bf16.mxu0 0
        %824 = vmatpush1.bf16.msra.mxu0 0
        %825 = vmatprep.subr.bf16.mxu0 0
        %826 = vmatpush1.bf16.msra.mxu0 0
        %827 = vmatprep.subr.bf16.mxu0 0
        %828 = vmatpush1.bf16.msra.mxu0 0
        %829 = vmatprep.subr.bf16.mxu0 0
        %830 = vmatpush1.bf16.msra.mxu0 0
        %831 = vmatprep.subr.bf16.mxu0 0
        %832 = vmatpush1.bf16.msra.mxu0 0
        %833 = vmatprep.subr.bf16.mxu0 0
        %834 = vmatpush1.bf16.msra.mxu0 0
        %835 = vmatprep.subr.bf16.mxu0 0
        %836 = vmatpush1.bf16.msra.mxu0 0
        %837 = vmatprep.subr.bf16.mxu0 0
        %838 = vmatpush1.bf16.msra.mxu0 0
        %839 = vmatprep.subr.bf16.mxu0 0
        %840 = vmatpush1.bf16.msra.mxu0 0
        %841 = vmatprep.subr.bf16.mxu0 0
        %842 = vmatpush1.bf16.msra.mxu0 0
        %843 = vmatprep.subr.bf16.mxu0 0
        %844 = vmatpush1.bf16.msra.mxu0 0
        %845 = vmatprep.subr.bf16.mxu0 0
        %846 = vmatpush1.bf16.msra.mxu0 0
        %847 = vmatprep.mubr.bf16.mxu0 0
        %848 = vmatmul.mubr.bf16.gmra.mrb[0].mxu0 %v796
        %v849 = vpop.f32.mrb[0].mxu0
        %v850 = vadd.f32 %v735, %v849
        %v851 = vpop.f32.mrb[0].mxu0
        %v852 = vpop.f32.mrb[0].mxu0
        %v853 = vadd.f32 %v738, %v852
        %v854 = vpop.f32.mrb[0].mxu0
        %855 = vmatprep.mubr.bf16.mxu0 0
        %856 = vmatmul.mubr.bf16.gmra.mrb[0].mxu0 %v798
        %v857 = vpop.f32.mrb[0].mxu0
        %v858 = vadd.f32 %v743, %v857
        %v859 = vpop.f32.mrb[0].mxu0
        %v860 = vpop.f32.mrb[0].mxu0
        %v861 = vadd.f32 %v746, %v860
        %v862 = vpop.f32.mrb[0].mxu0
        %863 = vmatprep.mubr.bf16.mxu0 0
        %864 = vmatmul.mubr.bf16.gmra.mrb[0].mxu0 %v800
        %v865 = vpop.f32.mrb[0].mxu0
        %v866 = vadd.f32 %v751, %v865
        %v867 = vpop.f32.mrb[0].mxu0
        %v868 = vpop.f32.mrb[0].mxu0
        %v869 = vadd.f32 %v754, %v868
        %v870 = vpop.f32.mrb[0].mxu0
        %871 = vmatprep.mubr.bf16.mxu0 0
        %872 = vmatmul.mubr.bf16.gmra.mrb[0].mxu0 %v802
        %v873 = vpop.f32.mrb[0].mxu0
        %v874 = vadd.f32 %v759, %v873
        %v875 = vpop.f32.mrb[0].mxu0
        %v876 = vpop.f32.mrb[0].mxu0
        %v877 = vadd.f32 %v762, %v876
        %v878 = vpop.f32.mrb[0].mxu0
        %879 = vmatprep.mubr.bf16.mxu0 0
        %880 = vmatmul.mubr.bf16.gmra.mrb[0].mxu0 %v804
        %v881 = vpop.f32.mrb[0].mxu0
        %v882 = vadd.f32 %v767, %v881
        %v883 = vpop.f32.mrb[0].mxu0
        %v884 = vpop.f32.mrb[0].mxu0
        %v885 = vadd.f32 %v770, %v884
        %v886 = vpop.f32.mrb[0].mxu0
        %887 = vmatprep.mubr.bf16.mxu0 0
        %888 = vmatmul.mubr.bf16.gmra.mrb[0].mxu0 %v806
        %v889 = vpop.f32.mrb[0].mxu0
        %v890 = vadd.f32 %v775, %v889
        %v891 = vpop.f32.mrb[0].mxu0
        %v892 = vpop.f32.mrb[0].mxu0
        %v893 = vadd.f32 %v778, %v892
        %v894 = vpop.f32.mrb[0].mxu0
        %895 = vmatprep.mubr.bf16.mxu0 0
        %896 = vmatmul.mubr.bf16.gmra.mrb[0].mxu0 %v808
        %v897 = vpop.f32.mrb[0].mxu0
        %v898 = vadd.f32 %v783, %v897
        %v899 = vpop.f32.mrb[0].mxu0
        %v900 = vpop.f32.mrb[0].mxu0
        %v901 = vadd.f32 %v786, %v900
        %v902 = vpop.f32.mrb[0].mxu0
        %903 = vmatprep.mubr.bf16.mxu0 0
        %904 = vmatmul.mubr.bf16.gmra.mrb[0].mxu0 %v810
        %v905 = vpop.f32.mrb[0].mxu0
        %v906 = vadd.f32 %v791, %v905
        %v907 = vpop.f32.mrb[0].mxu0
        %v908 = vpop.f32.mrb[0].mxu0
        %v909 = vpop.f32.mrb[0].mxu0
        %910 = vdwg.mxu0
        %v911 = vld [vmem:[%s545] sm:$0xe]
        %v912 = vld [vmem:[%s545 + $0x4] sm:$0xf]
        %v913 = vld [vmem:[%s545 + $0x8] sm:$0xf]
        %v914 = vld [vmem:[%s545 + $0xc] sm:$0xf]
        %v915 = vld [vmem:[%s545 + $0x10] sm:$0xf]
        %v916 = vld [vmem:[%s545 + $0x14] sm:$0xf]
        %v917 = vld [vmem:[%s545 + $0x18] sm:$0xf]
        %v918 = vld [vmem:[%s545 + $0x1c] sm:$0xf]
        %v919 = vld [vmem:[%s545 + $0x20] sm:$0xf]
        %v920 = vld [vmem:[%s545 + $0x24] sm:$0xf]
        %v921 = vld [vmem:[%s545 + $0x28] sm:$0xf]
        %v922 = vld [vmem:[%s545 + $0x2c] sm:$0xf]
        %v923 = vld [vmem:[%s545 + $0x30] sm:$0xf]
        %v924 = vld [vmem:[%s545 + $0x34] sm:$0xf]
        %v925 = vld [vmem:[%s545 + $0x38] sm:$0xf]
        %v926 = vld [vmem:[%s545 + $0x3c] sm:$0x1]
        %s927 = scalar_lea.vmem [#allocation11], 8
        %v928 = vld [vmem:[%s927] sm:$0xf]
        %v945 = vunpack.c.l.b16 %v911
        %v946 = vunpack.c.l.b16 %v912
        %v947 = vunpack.c.l.b16 %v913
        %v948 = vunpack.c.l.b16 %v914
        %v949 = vunpack.c.l.b16 %v915
        %v950 = vunpack.c.l.b16 %v916
        %v951 = vunpack.c.l.b16 %v917
        %v952 = vunpack.c.l.b16 %v918
        %v953 = vunpack.c.l.b16 %v919
        %v954 = vunpack.c.l.b16 %v920
        %v955 = vunpack.c.l.b16 %v921
        %v956 = vunpack.c.l.b16 %v922
        %v957 = vunpack.c.l.b16 %v923
        %v958 = vunpack.c.l.b16 %v924
        %v959 = vunpack.c.l.b16 %v925
        %v960 = vunpack.c.l.b16 %v926
        %v961 = vpack.c.b16 %v946, %v945
        %v962 = vpack.c.b16 %v948, %v947
        %v963 = vpack.c.b16 %v950, %v949
        %v964 = vpack.c.b16 %v952, %v951
        %v965 = vpack.c.b16 %v954, %v953
        %v966 = vpack.c.b16 %v956, %v955
        %v967 = vpack.c.b16 %v958, %v957
        %v968 = vpack.c.b16 %v960, %v959
        %vm969 = vcmask 1046528
        %v970 = vrot.slane %v961, 1
        %v971 = vrot.slane %v962, 1
        %v972 = vsel %vm969, %v970, %v971
        %v973 = vrot.slane %v963, 1
        %v974 = vsel %vm969, %v971, %v973
        %v975 = vrot.slane %v964, 1
        %v976 = vsel %vm969, %v973, %v975
        %v977 = vrot.slane %v965, 1
        %v978 = vsel %vm969, %v975, %v977
        %v979 = vrot.slane %v966, 1
        %v980 = vsel %vm969, %v977, %v979
        %v981 = vrot.slane %v967, 1
        %v982 = vsel %vm969, %v979, %v981
        %v983 = vrot.slane %v968, 1
        %v984 = vsel %vm969, %v981, %v983
        %v986 = vsel %vm671, %v972, 0
        %v989 = vsel %vm671, %v974, 0
        %v992 = vsel %vm671, %v976, 0
        %v995 = vsel %vm671, %v978, 0
        %v998 = vsel %vm671, %v980, 0
        %v1001 = vsel %vm671, %v982, 0
        %v1004 = vsel %vm671, %v984, 0
        %v1007 = vsel %vm671, %v983, 0
        %v1010 = vsel %vm696, %v928, 0
        %1012 = vmatprep.subr.bf16.mxu0 0
        %1013 = vmatpush1.bf16.msra.mxu0 %v1010
        %1014 = vmatprep.subr.bf16.mxu0 0
        %1015 = vmatpush1.bf16.msra.mxu0 0
        %1016 = vmatprep.subr.bf16.mxu0 0
        %1017 = vmatpush1.bf16.msra.mxu0 0
        %1018 = vmatprep.subr.bf16.mxu0 0
        %1019 = vmatpush1.bf16.msra.mxu0 0
        %1020 = vmatprep.subr.bf16.mxu0 0
        %1021 = vmatpush1.bf16.msra.mxu0 0
        %1022 = vmatprep.subr.bf16.mxu0 0
        %1023 = vmatpush1.bf16.msra.mxu0 0
        %1024 = vmatprep.subr.bf16.mxu0 0
        %1025 = vmatpush1.bf16.msra.mxu0 0
        %1026 = vmatprep.subr.bf16.mxu0 0
        %1027 = vmatpush1.bf16.msra.mxu0 0
        %1028 = vmatprep.subr.bf16.mxu0 0
        %1029 = vmatpush1.bf16.msra.mxu0 0
        %1030 = vmatprep.subr.bf16.mxu0 0
        %1031 = vmatpush1.bf16.msra.mxu0 0
        %1032 = vmatprep.subr.bf16.mxu0 0
        %1033 = vmatpush1.bf16.msra.mxu0 0
        %1034 = vmatprep.subr.bf16.mxu0 0
        %1035 = vmatpush1.bf16.msra.mxu0 0
        %1036 = vmatprep.subr.bf16.mxu0 0
        %1037 = vmatpush1.bf16.msra.mxu0 0
        %1038 = vmatprep.subr.bf16.mxu0 0
        %1039 = vmatpush1.bf16.msra.mxu0 0
        %1040 = vmatprep.subr.bf16.mxu0 0
        %1041 = vmatpush1.bf16.msra.mxu0 0
        %1042 = vmatprep.subr.bf16.mxu0 0
        %1043 = vmatpush1.bf16.msra.mxu0 0
        %1044 = vmatprep.mubr.bf16.mxu0 0
        %1045 = vmatmul.mubr.bf16.gmra.mrb[0].mxu0 %v986
        %v1046 = vpop.f32.mrb[0].mxu0
        %v1047 = vadd.f32 0.0, %v1046
        %v1048 = vpop.f32.mrb[0].mxu0
        %v1049 = vpop.f32.mrb[0].mxu0
        %v1050 = vadd.f32 0.0, %v1049
        %v1051 = vpop.f32.mrb[0].mxu0
        %1052 = vmatprep.mubr.bf16.mxu0 0
        %1053 = vmatmul.mubr.bf16.gmra.mrb[0].mxu0 %v989
        %v1054 = vpop.f32.mrb[0].mxu0
        %v1055 = vadd.f32 0.0, %v1054
        %v1056 = vpop.f32.mrb[0].mxu0
        %v1057 = vpop.f32.mrb[0].mxu0
        %v1058 = vadd.f32 0.0, %v1057
        %v1059 = vpop.f32.mrb[0].mxu0
        %1060 = vmatprep.mubr.bf16.mxu0 0
        %1061 = vmatmul.mubr.bf16.gmra.mrb[0].mxu0 %v992
        %v1062 = vpop.f32.mrb[0].mxu0
        %v1063 = vadd.f32 0.0, %v1062
        %v1064 = vpop.f32.mrb[0].mxu0
        %v1065 = vpop.f32.mrb[0].mxu0
        %v1066 = vadd.f32 0.0, %v1065
        %v1067 = vpop.f32.mrb[0].mxu0
        %1068 = vmatprep.mubr.bf16.mxu0 0
        %1069 = vmatmul.mubr.bf16.gmra.mrb[0].mxu0 %v995
        %v1070 = vpop.f32.mrb[0].mxu0
        %v1071 = vadd.f32 0.0, %v1070
        %v1072 = vpop.f32.mrb[0].mxu0
        %v1073 = vpop.f32.mrb[0].mxu0
        %v1074 = vadd.f32 0.0, %v1073
        %v1075 = vpop.f32.mrb[0].mxu0
        %1076 = vmatprep.mubr.bf16.mxu0 0
        %1077 = vmatmul.mubr.bf16.gmra.mrb[0].mxu0 %v998
        %v1078 = vpop.f32.mrb[0].mxu0
        %v1079 = vadd.f32 0.0, %v1078
        %v1080 = vpop.f32.mrb[0].mxu0
        %v1081 = vpop.f32.mrb[0].mxu0
        %v1082 = vadd.f32 0.0, %v1081
        %v1083 = vpop.f32.mrb[0].mxu0
        %1084 = vmatprep.mubr.bf16.mxu0 0
        %1085 = vmatmul.mubr.bf16.gmra.mrb[0].mxu0 %v1001
        %v1086 = vpop.f32.mrb[0].mxu0
        %v1087 = vadd.f32 0.0, %v1086
        %v1088 = vpop.f32.mrb[0].mxu0
        %v1089 = vpop.f32.mrb[0].mxu0
        %v1090 = vadd.f32 0.0, %v1089
        %v1091 = vpop.f32.mrb[0].mxu0
        %1092 = vmatprep.mubr.bf16.mxu0 0
        %1093 = vmatmul.mubr.bf16.gmra.mrb[0].mxu0 %v1004
        %v1094 = vpop.f32.mrb[0].mxu0
        %v1095 = vadd.f32 0.0, %v1094
        %v1096 = vpop.f32.mrb[0].mxu0
        %v1097 = vpop.f32.mrb[0].mxu0
        %v1098 = vadd.f32 0.0, %v1097
        %v1099 = vpop.f32.mrb[0].mxu0
        %1100 = vmatprep.mubr.bf16.mxu0 0
        %1101 = vmatmul.mubr.bf16.gmra.mrb[0].mxu0 %v1007
        %v1102 = vpop.f32.mrb[0].mxu0
        %v1103 = vadd.f32 0.0, %v1102
        %v1104 = vpop.f32.mrb[0].mxu0
        %v1105 = vpop.f32.mrb[0].mxu0
        %v1106 = vpop.f32.mrb[0].mxu0
        %1107 = vdwg.mxu0
        %v1108 = vadd.f32 %v850, %v1047
        %v1109 = vadd.f32 %v853, %v1050
        %v1110 = vadd.f32 %v858, %v1055
        %v1111 = vadd.f32 %v861, %v1058
        %v1112 = vadd.f32 %v866, %v1063
        %v1113 = vadd.f32 %v869, %v1066
        %v1114 = vadd.f32 %v874, %v1071
        %v1115 = vadd.f32 %v877, %v1074
        %v1116 = vadd.f32 %v882, %v1079
        %v1117 = vadd.f32 %v885, %v1082
        %v1118 = vadd.f32 %v890, %v1087
        %v1119 = vadd.f32 %v893, %v1090
        %v1120 = vadd.f32 %v898, %v1095
        %v1121 = vadd.f32 %v901, %v1098
        %v1122 = vadd.f32 %v906, %v1103
        %s1123 = scalar_lea.vmem [#allocation11], 12
        %v1124 = vld [vmem:[%s1123] sm:$0xf]
        %vm1125 = vsmask.f32 6400
        %v1127 = vshrl.u32 %v961, 16
        %v1129 = vrot.slane %v1127, 1
        %v1130 = vshll.u32 %v961, 16
        %v1132 = vrot.slane %v1130, 2
        %v1133 = vor.u32 %v1129, %v1132
        %v1135 = vshrl.u32 %v962, 16
        %v1137 = vrot.slane %v1135, 1
        %v1138 = vshll.u32 %v962, 16
        %v1140 = vrot.slane %v1138, 2
        %v1141 = vor.u32 %v1137, %v1140
        %v1142 = vsel %vm1125, %v1133, %v1141
        %v1144 = vshrl.u32 %v963, 16
        %v1146 = vrot.slane %v1144, 1
        %v1147 = vshll.u32 %v963, 16
        %v1149 = vrot.slane %v1147, 2
        %v1150 = vor.u32 %v1146, %v1149
        %v1151 = vsel %vm1125, %v1141, %v1150
        %v1153 = vshrl.u32 %v964, 16
        %v1155 = vrot.slane %v1153, 1
        %v1156 = vshll.u32 %v964, 16
        %v1158 = vrot.slane %v1156, 2
        %v1159 = vor.u32 %v1155, %v1158
        %v1160 = vsel %vm1125, %v1150, %v1159
        %v1162 = vshrl.u32 %v965, 16
        %v1164 = vrot.slane %v1162, 1
        %v1165 = vshll.u32 %v965, 16
        %v1167 = vrot.slane %v1165, 2
        %v1168 = vor.u32 %v1164, %v1167
        %v1169 = vsel %vm1125, %v1159, %v1168
        %v1171 = vshrl.u32 %v966, 16
        %v1173 = vrot.slane %v1171, 1
        %v1174 = vshll.u32 %v966, 16
        %v1176 = vrot.slane %v1174, 2
        %v1177 = vor.u32 %v1173, %v1176
        %v1178 = vsel %vm1125, %v1168, %v1177
        %v1180 = vshrl.u32 %v967, 16
        %v1182 = vrot.slane %v1180, 1
        %v1183 = vshll.u32 %v967, 16
        %v1185 = vrot.slane %v1183, 2
        %v1186 = vor.u32 %v1182, %v1185
        %v1187 = vsel %vm1125, %v1177, %v1186
        %v1189 = vshrl.u32 %v968, 16
        %v1191 = vrot.slane %v1189, 1
        %v1192 = vshll.u32 %v968, 16
        %v1194 = vrot.slane %v1192, 2
        %v1195 = vor.u32 %v1191, %v1194
        %v1196 = vsel %vm1125, %v1186, %v1195
        %v1198 = vsel %vm671, %v1142, 0
        %v1201 = vsel %vm671, %v1151, 0
        %v1204 = vsel %vm671, %v1160, 0
        %v1207 = vsel %vm671, %v1169, 0
        %v1210 = vsel %vm671, %v1178, 0
        %v1213 = vsel %vm671, %v1187, 0
        %v1216 = vsel %vm671, %v1196, 0
        %v1219 = vsel %vm671, %v1195, 0
        %v1222 = vsel %vm696, %v1124, 0
        %1224 = vmatprep.subr.bf16.mxu0 0
        %1225 = vmatpush1.bf16.msra.mxu0 %v1222
        %1226 = vmatprep.subr.bf16.mxu0 0
        %1227 = vmatpush1.bf16.msra.mxu0 0
        %1228 = vmatprep.subr.bf16.mxu0 0
        %1229 = vmatpush1.bf16.msra.mxu0 0
        %1230 = vmatprep.subr.bf16.mxu0 0
        %1231 = vmatpush1.bf16.msra.mxu0 0
        %1232 = vmatprep.subr.bf16.mxu0 0
        %1233 = vmatpush1.bf16.msra.mxu0 0
        %1234 = vmatprep.subr.bf16.mxu0 0
        %1235 = vmatpush1.bf16.msra.mxu0 0
        %1236 = vmatprep.subr.bf16.mxu0 0
        %1237 = vmatpush1.bf16.msra.mxu0 0
        %1238 = vmatprep.subr.bf16.mxu0 0
        %1239 = vmatpush1.bf16.msra.mxu0 0
        %1240 = vmatprep.subr.bf16.mxu0 0
        %1241 = vmatpush1.bf16.msra.mxu0 0
        %1242 = vmatprep.subr.bf16.mxu0 0
        %1243 = vmatpush1.bf16.msra.mxu0 0
        %1244 = vmatprep.subr.bf16.mxu0 0
        %1245 = vmatpush1.bf16.msra.mxu0 0
        %1246 = vmatprep.subr.bf16.mxu0 0
        %1247 = vmatpush1.bf16.msra.mxu0 0
        %1248 = vmatprep.subr.bf16.mxu0 0
        %1249 = vmatpush1.bf16.msra.mxu0 0
        %1250 = vmatprep.subr.bf16.mxu0 0
        %1251 = vmatpush1.bf16.msra.mxu0 0
        %1252 = vmatprep.subr.bf16.mxu0 0
        %1253 = vmatpush1.bf16.msra.mxu0 0
        %1254 = vmatprep.subr.bf16.mxu0 0
        %1255 = vmatpush1.bf16.msra.mxu0 0
        %1256 = vmatprep.mubr.bf16.mxu0 0
        %1257 = vmatmul.mubr.bf16.gmra.mrb[0].mxu0 %v1198
        %v1258 = vpop.f32.mrb[0].mxu0
        %v1259 = vadd.f32 0.0, %v1258
        %v1260 = vpop.f32.mrb[0].mxu0
        %v1261 = vpop.f32.mrb[0].mxu0
        %v1262 = vadd.f32 0.0, %v1261
        %v1263 = vpop.f32.mrb[0].mxu0
        %1264 = vmatprep.mubr.bf16.mxu0 0
        %1265 = vmatmul.mubr.bf16.gmra.mrb[0].mxu0 %v1201
        %v1266 = vpop.f32.mrb[0].mxu0
        %v1267 = vadd.f32 0.0, %v1266
        %v1268 = vpop.f32.mrb[0].mxu0
        %v1269 = vpop.f32.mrb[0].mxu0
        %v1270 = vadd.f32 0.0, %v1269
        %v1271 = vpop.f32.mrb[0].mxu0
        %1272 = vmatprep.mubr.bf16.mxu0 0
        %1273 = vmatmul.mubr.bf16.gmra.mrb[0].mxu0 %v1204
        %v1274 = vpop.f32.mrb[0].mxu0
        %v1275 = vadd.f32 0.0, %v1274
        %v1276 = vpop.f32.mrb[0].mxu0
        %v1277 = vpop.f32.mrb[0].mxu0
        %v1278 = vadd.f32 0.0, %v1277
        %v1279 = vpop.f32.mrb[0].mxu0
        %1280 = vmatprep.mubr.bf16.mxu0 0
        %1281 = vmatmul.mubr.bf16.gmra.mrb[0].mxu0 %v1207
        %v1282 = vpop.f32.mrb[0].mxu0
        %v1283 = vadd.f32 0.0, %v1282
        %v1284 = vpop.f32.mrb[0].mxu0
        %v1285 = vpop.f32.mrb[0].mxu0
        %v1286 = vadd.f32 0.0, %v1285
        %v1287 = vpop.f32.mrb[0].mxu0
        %1288 = vmatprep.mubr.bf16.mxu0 0
        %1289 = vmatmul.mubr.bf16.gmra.mrb[0].mxu0 %v1210
        %v1290 = vpop.f32.mrb[0].mxu0
        %v1291 = vadd.f32 0.0, %v1290
        %v1292 = vpop.f32.mrb[0].mxu0
        %v1293 = vpop.f32.mrb[0].mxu0
        %v1294 = vadd.f32 0.0, %v1293
        %v1295 = vpop.f32.mrb[0].mxu0
        %1296 = vmatprep.mubr.bf16.mxu0 0
        %1297 = vmatmul.mubr.bf16.gmra.mrb[0].mxu0 %v1213
        %v1298 = vpop.f32.mrb[0].mxu0
        %v1299 = vadd.f32 0.0, %v1298
        %v1300 = vpop.f32.mrb[0].mxu0
        %v1301 = vpop.f32.mrb[0].mxu0
        %v1302 = vadd.f32 0.0, %v1301
        %v1303 = vpop.f32.mrb[0].mxu0
        %1304 = vmatprep.mubr.bf16.mxu0 0
        %1305 = vmatmul.mubr.bf16.gmra.mrb[0].mxu0 %v1216
        %v1306 = vpop.f32.mrb[0].mxu0
        %v1307 = vadd.f32 0.0, %v1306
        %v1308 = vpop.f32.mrb[0].mxu0
        %v1309 = vpop.f32.mrb[0].mxu0
        %v1310 = vadd.f32 0.0, %v1309
        %v1311 = vpop.f32.mrb[0].mxu0
        %1312 = vmatprep.mubr.bf16.mxu0 0
        %1313 = vmatmul.mubr.bf16.gmra.mrb[0].mxu0 %v1219
        %v1314 = vpop.f32.mrb[0].mxu0
        %v1315 = vadd.f32 0.0, %v1314
        %v1316 = vpop.f32.mrb[0].mxu0
        %v1317 = vpop.f32.mrb[0].mxu0
        %v1318 = vpop.f32.mrb[0].mxu0
        %1319 = vdwg.mxu0
        %v1320 = vadd.f32 %v1108, %v1259
        %v1321 = vadd.f32 %v1109, %v1262
        %v1322 = vadd.f32 %v1110, %v1267
        %v1323 = vadd.f32 %v1111, %v1270
        %v1324 = vadd.f32 %v1112, %v1275
        %v1325 = vadd.f32 %v1113, %v1278
        %v1326 = vadd.f32 %v1114, %v1283
        %v1327 = vadd.f32 %v1115, %v1286
        %v1328 = vadd.f32 %v1116, %v1291
        %v1329 = vadd.f32 %v1117, %v1294
        %v1330 = vadd.f32 %v1118, %v1299
        %v1331 = vadd.f32 %v1119, %v1302
        %v1332 = vadd.f32 %v1120, %v1307
        %v1333 = vadd.f32 %v1121, %v1310
        %v1334 = vadd.f32 %v1122, %v1315
        %v1335 = vld [vmem:[%s545] sm:$0xc]
        %v1336 = vld [vmem:[%s545 + $0x3c] sm:$0x3]
        %s1337 = scalar_lea.vmem [#allocation11], 16
        %v1338 = vld [vmem:[%s1337] sm:$0xf]
        %v1341 = vunpack.c.l.b16 %v1335
        %v1342 = vunpack.c.l.b16 %v1336
        %v1343 = vpack.c.b16 %v946, %v1341
        %v1344 = vpack.c.b16 %v1342, %v959
        %vm1345 = vcmask 1045504
        %v1346 = vrot.slane %v1343, 2
        %v1347 = vrot.slane %v962, 2
        %v1348 = vsel %vm1345, %v1346, %v1347
        %v1349 = vrot.slane %v963, 2
        %v1350 = vsel %vm1345, %v1347, %v1349
        %v1351 = vrot.slane %v964, 2
        %v1352 = vsel %vm1345, %v1349, %v1351
        %v1353 = vrot.slane %v965, 2
        %v1354 = vsel %vm1345, %v1351, %v1353
        %v1355 = vrot.slane %v966, 2
        %v1356 = vsel %vm1345, %v1353, %v1355
        %v1357 = vrot.slane %v967, 2
        %v1358 = vsel %vm1345, %v1355, %v1357
        %v1359 = vrot.slane %v1344, 2
        %v1360 = vsel %vm1345, %v1357, %v1359
        %v1362 = vsel %vm671, %v1348, 0
        %v1365 = vsel %vm671, %v1350, 0
        %v1368 = vsel %vm671, %v1352, 0
        %v1371 = vsel %vm671, %v1354, 0
        %v1374 = vsel %vm671, %v1356, 0
        %v1377 = vsel %vm671, %v1358, 0
        %v1380 = vsel %vm671, %v1360, 0
        %v1383 = vsel %vm671, %v1359, 0
        %v1386 = vsel %vm696, %v1338, 0
        %1388 = vmatprep.subr.bf16.mxu0 0
        %1389 = vmatpush1.bf16.msra.mxu0 %v1386
        %1390 = vmatprep.subr.bf16.mxu0 0
        %1391 = vmatpush1.bf16.msra.mxu0 0
        %1392 = vmatprep.subr.bf16.mxu0 0
        %1393 = vmatpush1.bf16.msra.mxu0 0
        %1394 = vmatprep.subr.bf16.mxu0 0
        %1395 = vmatpush1.bf16.msra.mxu0 0
        %1396 = vmatprep.subr.bf16.mxu0 0
        %1397 = vmatpush1.bf16.msra.mxu0 0
        %1398 = vmatprep.subr.bf16.mxu0 0
        %1399 = vmatpush1.bf16.msra.mxu0 0
        %1400 = vmatprep.subr.bf16.mxu0 0
        %1401 = vmatpush1.bf16.msra.mxu0 0
        %1402 = vmatprep.subr.bf16.mxu0 0
        %1403 = vmatpush1.bf16.msra.mxu0 0
        %1404 = vmatprep.subr.bf16.mxu0 0
        %1405 = vmatpush1.bf16.msra.mxu0 0
        %1406 = vmatprep.subr.bf16.mxu0 0
        %1407 = vmatpush1.bf16.msra.mxu0 0
        %1408 = vmatprep.subr.bf16.mxu0 0
        %1409 = vmatpush1.bf16.msra.mxu0 0
        %1410 = vmatprep.subr.bf16.mxu0 0
        %1411 = vmatpush1.bf16.msra.mxu0 0
        %1412 = vmatprep.subr.bf16.mxu0 0
        %1413 = vmatpush1.bf16.msra.mxu0 0
        %1414 = vmatprep.subr.bf16.mxu0 0
        %1415 = vmatpush1.bf16.msra.mxu0 0
        %1416 = vmatprep.subr.bf16.mxu0 0
        %1417 = vmatpush1.bf16.msra.mxu0 0
        %1418 = vmatprep.subr.bf16.mxu0 0
        %1419 = vmatpush1.bf16.msra.mxu0 0
        %1420 = vmatprep.mubr.bf16.mxu0 0
        %1421 = vmatmul.mubr.bf16.gmra.mrb[0].mxu0 %v1362
        %v1422 = vpop.f32.mrb[0].mxu0
        %v1423 = vadd.f32 0.0, %v1422
        %v1424 = vpop.f32.mrb[0].mxu0
        %v1425 = vpop.f32.mrb[0].mxu0
        %v1426 = vadd.f32 0.0, %v1425
        %v1427 = vpop.f32.mrb[0].mxu0
        %1428 = vmatprep.mubr.bf16.mxu0 0
        %1429 = vmatmul.mubr.bf16.gmra.mrb[0].mxu0 %v1365
        %v1430 = vpop.f32.mrb[0].mxu0
        %v1431 = vadd.f32 0.0, %v1430
        %v1432 = vpop.f32.mrb[0].mxu0
        %v1433 = vpop.f32.mrb[0].mxu0
        %v1434 = vadd.f32 0.0, %v1433
        %v1435 = vpop.f32.mrb[0].mxu0
        %1436 = vmatprep.mubr.bf16.mxu0 0
        %1437 = vmatmul.mubr.bf16.gmra.mrb[0].mxu0 %v1368
        %v1438 = vpop.f32.mrb[0].mxu0
        %v1439 = vadd.f32 0.0, %v1438
        %v1440 = vpop.f32.mrb[0].mxu0
        %v1441 = vpop.f32.mrb[0].mxu0
        %v1442 = vadd.f32 0.0, %v1441
        %v1443 = vpop.f32.mrb[0].mxu0
        %1444 = vmatprep.mubr.bf16.mxu0 0
        %1445 = vmatmul.mubr.bf16.gmra.mrb[0].mxu0 %v1371
        %v1446 = vpop.f32.mrb[0].mxu0
        %v1447 = vadd.f32 0.0, %v1446
        %v1448 = vpop.f32.mrb[0].mxu0
        %v1449 = vpop.f32.mrb[0].mxu0
        %v1450 = vadd.f32 0.0, %v1449
        %v1451 = vpop.f32.mrb[0].mxu0
        %1452 = vmatprep.mubr.bf16.mxu0 0
        %1453 = vmatmul.mubr.bf16.gmra.mrb[0].mxu0 %v1374
        %v1454 = vpop.f32.mrb[0].mxu0
        %v1455 = vadd.f32 0.0, %v1454
        %v1456 = vpop.f32.mrb[0].mxu0
        %v1457 = vpop.f32.mrb[0].mxu0
        %v1458 = vadd.f32 0.0, %v1457
        %v1459 = vpop.f32.mrb[0].mxu0
        %1460 = vmatprep.mubr.bf16.mxu0 0
        %1461 = vmatmul.mubr.bf16.gmra.mrb[0].mxu0 %v1377
        %v1462 = vpop.f32.mrb[0].mxu0
        %v1463 = vadd.f32 0.0, %v1462
        %v1464 = vpop.f32.mrb[0].mxu0
        %v1465 = vpop.f32.mrb[0].mxu0
        %v1466 = vadd.f32 0.0, %v1465
        %v1467 = vpop.f32.mrb[0].mxu0
        %1468 = vmatprep.mubr.bf16.mxu0 0
        %1469 = vmatmul.mubr.bf16.gmra.mrb[0].mxu0 %v1380
        %v1470 = vpop.f32.mrb[0].mxu0
        %v1471 = vadd.f32 0.0, %v1470
        %v1472 = vpop.f32.mrb[0].mxu0
        %v1473 = vpop.f32.mrb[0].mxu0
        %v1474 = vadd.f32 0.0, %v1473
        %v1475 = vpop.f32.mrb[0].mxu0
        %1476 = vmatprep.mubr.bf16.mxu0 0
        %1477 = vmatmul.mubr.bf16.gmra.mrb[0].mxu0 %v1383
        %v1478 = vpop.f32.mrb[0].mxu0
        %v1479 = vadd.f32 0.0, %v1478
        %v1480 = vpop.f32.mrb[0].mxu0
        %v1481 = vpop.f32.mrb[0].mxu0
        %v1482 = vpop.f32.mrb[0].mxu0
        %1483 = vdwg.mxu0
        %v1484 = vadd.f32 %v1320, %v1423
        %v1485 = vadd.f32 %v1321, %v1426
        %v1486 = vadd.f32 %v1322, %v1431
        %v1487 = vadd.f32 %v1323, %v1434
        %v1488 = vadd.f32 %v1324, %v1439
        %v1489 = vadd.f32 %v1325, %v1442
        %v1490 = vadd.f32 %v1326, %v1447
        %v1491 = vadd.f32 %v1327, %v1450
        %v1492 = vadd.f32 %v1328, %v1455
        %v1493 = vadd.f32 %v1329, %v1458
        %v1494 = vadd.f32 %v1330, %v1463
        %v1495 = vadd.f32 %v1331, %v1466
        %v1496 = vadd.f32 %v1332, %v1471
        %v1497 = vadd.f32 %v1333, %v1474
        %v1498 = vadd.f32 %v1334, %v1479
        %s1499 = scalar_lea.vmem [#allocation11], 20
        %v1500 = vld [vmem:[%s1499] sm:$0xf]
        %vm1501 = vsmask.f32 5376
        %v1503 = vshrl.u32 %v1343, 16
        %v1505 = vrot.slane %v1503, 2
        %v1506 = vshll.u32 %v1343, 16
        %v1508 = vrot.slane %v1506, 3
        %v1509 = vor.u32 %v1505, %v1508
        %v1510 = vrot.slane %v1135, 2
        %v1511 = vrot.slane %v1138, 3
        %v1512 = vor.u32 %v1510, %v1511
        %v1513 = vsel %vm1501, %v1509, %v1512
        %v1514 = vrot.slane %v1144, 2
        %v1515 = vrot.slane %v1147, 3
        %v1516 = vor.u32 %v1514, %v1515
        %v1517 = vsel %vm1501, %v1512, %v1516
        %v1518 = vrot.slane %v1153, 2
        %v1519 = vrot.slane %v1156, 3
        %v1520 = vor.u32 %v1518, %v1519
        %v1521 = vsel %vm1501, %v1516, %v1520
        %v1522 = vrot.slane %v1162, 2
        %v1523 = vrot.slane %v1165, 3
        %v1524 = vor.u32 %v1522, %v1523
        %v1525 = vsel %vm1501, %v1520, %v1524
        %v1526 = vrot.slane %v1171, 2
        %v1527 = vrot.slane %v1174, 3
        %v1528 = vor.u32 %v1526, %v1527
        %v1529 = vsel %vm1501, %v1524, %v1528
        %v1530 = vrot.slane %v1180, 2
        %v1531 = vrot.slane %v1183, 3
        %v1532 = vor.u32 %v1530, %v1531
        %v1533 = vsel %vm1501, %v1528, %v1532
        %v1535 = vshrl.u32 %v1344, 16
        %v1537 = vrot.slane %v1535, 2
        %v1538 = vshll.u32 %v1344, 16
        %v1540 = vrot.slane %v1538, 3
        %v1541 = vor.u32 %v1537, %v1540
        %v1542 = vsel %vm1501, %v1532, %v1541
        %v1544 = vsel %vm671, %v1513, 0
        %v1547 = vsel %vm671, %v1517, 0
        %v1550 = vsel %vm671, %v1521, 0
        %v1553 = vsel %vm671, %v1525, 0
        %v1556 = vsel %vm671, %v1529, 0
        %v1559 = vsel %vm671, %v1533, 0
        %v1562 = vsel %vm671, %v1542, 0
        %v1565 = vsel %vm671, %v1541, 0
        %v1568 = vsel %vm696, %v1500, 0
        %1570 = vmatprep.subr.bf16.mxu0 0
        %1571 = vmatpush1.bf16.msra.mxu0 %v1568
        %1572 = vmatprep.subr.bf16.mxu0 0
        %1573 = vmatpush1.bf16.msra.mxu0 0
        %1574 = vmatprep.subr.bf16.mxu0 0
        %1575 = vmatpush1.bf16.msra.mxu0 0
        %1576 = vmatprep.subr.bf16.mxu0 0
        %1577 = vmatpush1.bf16.msra.mxu0 0
        %1578 = vmatprep.subr.bf16.mxu0 0
        %1579 = vmatpush1.bf16.msra.mxu0 0
        %1580 = vmatprep.subr.bf16.mxu0 0
        %1581 = vmatpush1.bf16.msra.mxu0 0
        %1582 = vmatprep.subr.bf16.mxu0 0
        %1583 = vmatpush1.bf16.msra.mxu0 0
        %1584 = vmatprep.subr.bf16.mxu0 0
        %1585 = vmatpush1.bf16.msra.mxu0 0
        %1586 = vmatprep.subr.bf16.mxu0 0
        %1587 = vmatpush1.bf16.msra.mxu0 0
        %1588 = vmatprep.subr.bf16.mxu0 0
        %1589 = vmatpush1.bf16.msra.mxu0 0
        %1590 = vmatprep.subr.bf16.mxu0 0
        %1591 = vmatpush1.bf16.msra.mxu0 0
        %1592 = vmatprep.subr.bf16.mxu0 0
        %1593 = vmatpush1.bf16.msra.mxu0 0
        %1594 = vmatprep.subr.bf16.mxu0 0
        %1595 = vmatpush1.bf16.msra.mxu0 0
        %1596 = vmatprep.subr.bf16.mxu0 0
        %1597 = vmatpush1.bf16.msra.mxu0 0
        %1598 = vmatprep.subr.bf16.mxu0 0
        %1599 = vmatpush1.bf16.msra.mxu0 0
        %1600 = vmatprep.subr.bf16.mxu0 0
        %1601 = vmatpush1.bf16.msra.mxu0 0
        %1602 = vmatprep.mubr.bf16.mxu0 0
        %1603 = vmatmul.mubr.bf16.gmra.mrb[0].mxu0 %v1544
        %v1604 = vpop.f32.mrb[0].mxu0
        %v1605 = vadd.f32 0.0, %v1604
        %v1606 = vpop.f32.mrb[0].mxu0
        %v1607 = vpop.f32.mrb[0].mxu0
        %v1608 = vadd.f32 0.0, %v1607
        %v1609 = vpop.f32.mrb[0].mxu0
        %1610 = vmatprep.mubr.bf16.mxu0 0
        %1611 = vmatmul.mubr.bf16.gmra.mrb[0].mxu0 %v1547
        %v1612 = vpop.f32.mrb[0].mxu0
        %v1613 = vadd.f32 0.0, %v1612
        %v1614 = vpop.f32.mrb[0].mxu0
        %v1615 = vpop.f32.mrb[0].mxu0
        %v1616 = vadd.f32 0.0, %v1615
        %v1617 = vpop.f32.mrb[0].mxu0
        %1618 = vmatprep.mubr.bf16.mxu0 0
        %1619 = vmatmul.mubr.bf16.gmra.mrb[0].mxu0 %v1550
        %v1620 = vpop.f32.mrb[0].mxu0
        %v1621 = vadd.f32 0.0, %v1620
        %v1622 = vpop.f32.mrb[0].mxu0
        %v1623 = vpop.f32.mrb[0].mxu0
        %v1624 = vadd.f32 0.0, %v1623
        %v1625 = vpop.f32.mrb[0].mxu0
        %1626 = vmatprep.mubr.bf16.mxu0 0
        %1627 = vmatmul.mubr.bf16.gmra.mrb[0].mxu0 %v1553
        %v1628 = vpop.f32.mrb[0].mxu0
        %v1629 = vadd.f32 0.0, %v1628
        %v1630 = vpop.f32.mrb[0].mxu0
        %v1631 = vpop.f32.mrb[0].mxu0
        %v1632 = vadd.f32 0.0, %v1631
        %v1633 = vpop.f32.mrb[0].mxu0
        %1634 = vmatprep.mubr.bf16.mxu0 0
        %1635 = vmatmul.mubr.bf16.gmra.mrb[0].mxu0 %v1556
        %v1636 = vpop.f32.mrb[0].mxu0
        %v1637 = vadd.f32 0.0, %v1636
        %v1638 = vpop.f32.mrb[0].mxu0
        %v1639 = vpop.f32.mrb[0].mxu0
        %v1640 = vadd.f32 0.0, %v1639
        %v1641 = vpop.f32.mrb[0].mxu0
        %1642 = vmatprep.mubr.bf16.mxu0 0
        %1643 = vmatmul.mubr.bf16.gmra.mrb[0].mxu0 %v1559
        %v1644 = vpop.f32.mrb[0].mxu0
        %v1645 = vadd.f32 0.0, %v1644
        %v1646 = vpop.f32.mrb[0].mxu0
        %v1647 = vpop.f32.mrb[0].mxu0
        %v1648 = vadd.f32 0.0, %v1647
        %v1649 = vpop.f32.mrb[0].mxu0
        %1650 = vmatprep.mubr.bf16.mxu0 0
        %1651 = vmatmul.mubr.bf16.gmra.mrb[0].mxu0 %v1562
        %v1652 = vpop.f32.mrb[0].mxu0
        %v1653 = vadd.f32 0.0, %v1652
        %v1654 = vpop.f32.mrb[0].mxu0
        %v1655 = vpop.f32.mrb[0].mxu0
        %v1656 = vadd.f32 0.0, %v1655
        %v1657 = vpop.f32.mrb[0].mxu0
        %1658 = vmatprep.mubr.bf16.mxu0 0
        %1659 = vmatmul.mubr.bf16.gmra.mrb[0].mxu0 %v1565
        %v1660 = vpop.f32.mrb[0].mxu0
        %v1661 = vadd.f32 0.0, %v1660
        %v1662 = vpop.f32.mrb[0].mxu0
        %v1663 = vpop.f32.mrb[0].mxu0
        %v1664 = vpop.f32.mrb[0].mxu0
        %1665 = vdwg.mxu0
        %v1666 = vadd.f32 %v1484, %v1605
        %v1667 = vadd.f32 %v1485, %v1608
        %v1668 = vadd.f32 %v1486, %v1613
        %v1669 = vadd.f32 %v1487, %v1616
        %v1670 = vadd.f32 %v1488, %v1621
        %v1671 = vadd.f32 %v1489, %v1624
        %v1672 = vadd.f32 %v1490, %v1629
        %v1673 = vadd.f32 %v1491, %v1632
        %v1674 = vadd.f32 %v1492, %v1637
        %v1675 = vadd.f32 %v1493, %v1640
        %v1676 = vadd.f32 %v1494, %v1645
        %v1677 = vadd.f32 %v1495, %v1648
        %v1678 = vadd.f32 %v1496, %v1653
        %v1679 = vadd.f32 %v1497, %v1656
        %v1680 = vadd.f32 %v1498, %v1661
        %v1681 = vld [vmem:[%s545] sm:$0x8]
        %v1682 = vld [vmem:[%s545 + $0x3c] sm:$0x7]
        %s1683 = scalar_lea.vmem [#allocation11], 24
        %v1684 = vld [vmem:[%s1683] sm:$0xf]
        %v1687 = vunpack.c.l.b16 %v1681
        %v1688 = vunpack.c.l.b16 %v1682
        %v1689 = vpack.c.b16 %v946, %v1687
        %v1690 = vpack.c.b16 %v1688, %v959
        %vm1691 = vcmask 1044480
        %v1692 = vrot.slane %v1689, 3
        %v1693 = vrot.slane %v962, 3
        %v1694 = vsel %vm1691, %v1692, %v1693
        %v1695 = vrot.slane %v963, 3
        %v1696 = vsel %vm1691, %v1693, %v1695
        %v1697 = vrot.slane %v964, 3
        %v1698 = vsel %vm1691, %v1695, %v1697
        %v1699 = vrot.slane %v965, 3
        %v1700 = vsel %vm1691, %v1697, %v1699
        %v1701 = vrot.slane %v966, 3
        %v1702 = vsel %vm1691, %v1699, %v1701
        %v1703 = vrot.slane %v967, 3
        %v1704 = vsel %vm1691, %v1701, %v1703
        %v1705 = vrot.slane %v1690, 3
        %v1706 = vsel %vm1691, %v1703, %v1705
        %v1708 = vsel %vm671, %v1694, 0
        %v1711 = vsel %vm671, %v1696, 0
        %v1714 = vsel %vm671, %v1698, 0
        %v1717 = vsel %vm671, %v1700, 0
        %v1720 = vsel %vm671, %v1702, 0
        %v1723 = vsel %vm671, %v1704, 0
        %v1726 = vsel %vm671, %v1706, 0
        %v1729 = vsel %vm671, %v1705, 0
        %v1732 = vsel %vm696, %v1684, 0
        %1734 = vmatprep.subr.bf16.mxu0 0
        %1735 = vmatpush1.bf16.msra.mxu0 %v1732
        %1736 = vmatprep.subr.bf16.mxu0 0
        %1737 = vmatpush1.bf16.msra.mxu0 0
        %1738 = vmatprep.subr.bf16.mxu0 0
        %1739 = vmatpush1.bf16.msra.mxu0 0
        %1740 = vmatprep.subr.bf16.mxu0 0
        %1741 = vmatpush1.bf16.msra.mxu0 0
        %1742 = vmatprep.subr.bf16.mxu0 0
        %1743 = vmatpush1.bf16.msra.mxu0 0
        %1744 = vmatprep.subr.bf16.mxu0 0
        %1745 = vmatpush1.bf16.msra.mxu0 0
        %1746 = vmatprep.subr.bf16.mxu0 0
        %1747 = vmatpush1.bf16.msra.mxu0 0
        %1748 = vmatprep.subr.bf16.mxu0 0
        %1749 = vmatpush1.bf16.msra.mxu0 0
        %1750 = vmatprep.subr.bf16.mxu0 0
        %1751 = vmatpush1.bf16.msra.mxu0 0
        %1752 = vmatprep.subr.bf16.mxu0 0
        %1753 = vmatpush1.bf16.msra.mxu0 0
        %1754 = vmatprep.subr.bf16.mxu0 0
        %1755 = vmatpush1.bf16.msra.mxu0 0
        %1756 = vmatprep.subr.bf16.mxu0 0
        %1757 = vmatpush1.bf16.msra.mxu0 0
        %1758 = vmatprep.subr.bf16.mxu0 0
        %1759 = vmatpush1.bf16.msra.mxu0 0
        %1760 = vmatprep.subr.bf16.mxu0 0
        %1761 = vmatpush1.bf16.msra.mxu0 0
        %1762 = vmatprep.subr.bf16.mxu0 0
        %1763 = vmatpush1.bf16.msra.mxu0 0
        %1764 = vmatprep.subr.bf16.mxu0 0
        %1765 = vmatpush1.bf16.msra.mxu0 0
        %1766 = vmatprep.mubr.bf16.mxu0 0
        %1767 = vmatmul.mubr.bf16.gmra.mrb[0].mxu0 %v1708
        %v1768 = vpop.f32.mrb[0].mxu0
        %v1769 = vadd.f32 0.0, %v1768
        %v1770 = vpop.f32.mrb[0].mxu0
        %v1771 = vpop.f32.mrb[0].mxu0
        %v1772 = vadd.f32 0.0, %v1771
        %v1773 = vpop.f32.mrb[0].mxu0
        %1774 = vmatprep.mubr.bf16.mxu0 0
        %1775 = vmatmul.mubr.bf16.gmra.mrb[0].mxu0 %v1711
        %v1776 = vpop.f32.mrb[0].mxu0
        %v1777 = vadd.f32 0.0, %v1776
        %v1778 = vpop.f32.mrb[0].mxu0
        %v1779 = vpop.f32.mrb[0].mxu0
        %v1780 = vadd.f32 0.0, %v1779
        %v1781 = vpop.f32.mrb[0].mxu0
        %1782 = vmatprep.mubr.bf16.mxu0 0
        %1783 = vmatmul.mubr.bf16.gmra.mrb[0].mxu0 %v1714
        %v1784 = vpop.f32.mrb[0].mxu0
        %v1785 = vadd.f32 0.0, %v1784
        %v1786 = vpop.f32.mrb[0].mxu0
        %v1787 = vpop.f32.mrb[0].mxu0
        %v1788 = vadd.f32 0.0, %v1787
        %v1789 = vpop.f32.mrb[0].mxu0
        %1790 = vmatprep.mubr.bf16.mxu0 0
        %1791 = vmatmul.mubr.bf16.gmra.mrb[0].mxu0 %v1717
        %v1792 = vpop.f32.mrb[0].mxu0
        %v1793 = vadd.f32 0.0, %v1792
        %v1794 = vpop.f32.mrb[0].mxu0
        %v1795 = vpop.f32.mrb[0].mxu0
        %v1796 = vadd.f32 0.0, %v1795
        %v1797 = vpop.f32.mrb[0].mxu0
        %1798 = vmatprep.mubr.bf16.mxu0 0
        %1799 = vmatmul.mubr.bf16.gmra.mrb[0].mxu0 %v1720
        %v1800 = vpop.f32.mrb[0].mxu0
        %v1801 = vadd.f32 0.0, %v1800
        %v1802 = vpop.f32.mrb[0].mxu0
        %v1803 = vpop.f32.mrb[0].mxu0
        %v1804 = vadd.f32 0.0, %v1803
        %v1805 = vpop.f32.mrb[0].mxu0
        %1806 = vmatprep.mubr.bf16.mxu0 0
        %1807 = vmatmul.mubr.bf16.gmra.mrb[0].mxu0 %v1723
        %v1808 = vpop.f32.mrb[0].mxu0
        %v1809 = vadd.f32 0.0, %v1808
        %v1810 = vpop.f32.mrb[0].mxu0
        %v1811 = vpop.f32.mrb[0].mxu0
        %v1812 = vadd.f32 0.0, %v1811
        %v1813 = vpop.f32.mrb[0].mxu0
        %1814 = vmatprep.mubr.bf16.mxu0 0
        %1815 = vmatmul.mubr.bf16.gmra.mrb[0].mxu0 %v1726
        %v1816 = vpop.f32.mrb[0].mxu0
        %v1817 = vadd.f32 0.0, %v1816
        %v1818 = vpop.f32.mrb[0].mxu0
        %v1819 = vpop.f32.mrb[0].mxu0
        %v1820 = vadd.f32 0.0, %v1819
        %v1821 = vpop.f32.mrb[0].mxu0
        %1822 = vmatprep.mubr.bf16.mxu0 0
        %1823 = vmatmul.mubr.bf16.gmra.mrb[0].mxu0 %v1729
        %v1824 = vpop.f32.mrb[0].mxu0
        %v1825 = vadd.f32 0.0, %v1824
        %v1826 = vpop.f32.mrb[0].mxu0
        %v1827 = vpop.f32.mrb[0].mxu0
        %v1828 = vpop.f32.mrb[0].mxu0
        %1829 = vdwg.mxu0
        %v1830 = vadd.f32 %v1666, %v1769
        %v1831 = vadd.f32 %v1667, %v1772
        %v1832 = vadd.f32 %v1668, %v1777
        %v1833 = vadd.f32 %v1669, %v1780
        %v1834 = vadd.f32 %v1670, %v1785
        %v1835 = vadd.f32 %v1671, %v1788
        %v1836 = vadd.f32 %v1672, %v1793
        %v1837 = vadd.f32 %v1673, %v1796
        %v1838 = vadd.f32 %v1674, %v1801
        %v1839 = vadd.f32 %v1675, %v1804
        %v1840 = vadd.f32 %v1676, %v1809
        %v1841 = vadd.f32 %v1677, %v1812
        %v1842 = vadd.f32 %v1678, %v1817
        %v1843 = vadd.f32 %v1679, %v1820
        %v1844 = vadd.f32 %v1680, %v1825
        %s1845 = scalar_lea.vmem [#allocation11], 28
        %v1846 = vld [vmem:[%s1845] sm:$0xf]
        %vm1847 = vsmask.f32 4352
        %v1849 = vshrl.u32 %v1689, 16
        %v1851 = vrot.slane %v1849, 3
        %v1852 = vshll.u32 %v1689, 16
        %v1854 = vrot.slane %v1852, 4
        %v1855 = vor.u32 %v1851, %v1854
        %v1856 = vrot.slane %v1135, 3
        %v1857 = vrot.slane %v1138, 4
        %v1858 = vor.u32 %v1856, %v1857
        %v1859 = vsel %vm1847, %v1855, %v1858
        %v1860 = vrot.slane %v1144, 3
        %v1861 = vrot.slane %v1147, 4
        %v1862 = vor.u32 %v1860, %v1861
        %v1863 = vsel %vm1847, %v1858, %v1862
        %v1864 = vrot.slane %v1153, 3
        %v1865 = vrot.slane %v1156, 4
        %v1866 = vor.u32 %v1864, %v1865
        %v1867 = vsel %vm1847, %v1862, %v1866
        %v1868 = vrot.slane %v1162, 3
        %v1869 = vrot.slane %v1165, 4
        %v1870 = vor.u32 %v1868, %v1869
        %v1871 = vsel %vm1847, %v1866, %v1870
        %v1872 = vrot.slane %v1171, 3
        %v1873 = vrot.slane %v1174, 4
        %v1874 = vor.u32 %v1872, %v1873
        %v1875 = vsel %vm1847, %v1870, %v1874
        %v1876 = vrot.slane %v1180, 3
        %v1877 = vrot.slane %v1183, 4
        %v1878 = vor.u32 %v1876, %v1877
        %v1879 = vsel %vm1847, %v1874, %v1878
        %v1881 = vshrl.u32 %v1690, 16
        %v1883 = vrot.slane %v1881, 3
        %v1884 = vshll.u32 %v1690, 16
        %v1886 = vrot.slane %v1884, 4
        %v1887 = vor.u32 %v1883, %v1886
        %v1888 = vsel %vm1847, %v1878, %v1887
        %v1890 = vsel %vm671, %v1859, 0
        %v1893 = vsel %vm671, %v1863, 0
        %v1896 = vsel %vm671, %v1867, 0
        %v1899 = vsel %vm671, %v1871, 0
        %v1902 = vsel %vm671, %v1875, 0
        %v1905 = vsel %vm671, %v1879, 0
        %v1908 = vsel %vm671, %v1888, 0
        %v1911 = vsel %vm671, %v1887, 0
        %v1914 = vsel %vm696, %v1846, 0
        %1916 = vmatprep.subr.bf16.mxu0 0
        %1917 = vmatpush1.bf16.msra.mxu0 %v1914
        %1918 = vmatprep.subr.bf16.mxu0 0
        %1919 = vmatpush1.bf16.msra.mxu0 0
        %1920 = vmatprep.subr.bf16.mxu0 0
        %1921 = vmatpush1.bf16.msra.mxu0 0
        %1922 = vmatprep.subr.bf16.mxu0 0
        %1923 = vmatpush1.bf16.msra.mxu0 0
        %1924 = vmatprep.subr.bf16.mxu0 0
        %1925 = vmatpush1.bf16.msra.mxu0 0
        %1926 = vmatprep.subr.bf16.mxu0 0
        %1927 = vmatpush1.bf16.msra.mxu0 0
        %1928 = vmatprep.subr.bf16.mxu0 0
        %1929 = vmatpush1.bf16.msra.mxu0 0
        %1930 = vmatprep.subr.bf16.mxu0 0
        %1931 = vmatpush1.bf16.msra.mxu0 0
        %1932 = vmatprep.subr.bf16.mxu0 0
        %1933 = vmatpush1.bf16.msra.mxu0 0
        %1934 = vmatprep.subr.bf16.mxu0 0
        %1935 = vmatpush1.bf16.msra.mxu0 0
        %1936 = vmatprep.subr.bf16.mxu0 0
        %1937 = vmatpush1.bf16.msra.mxu0 0
        %1938 = vmatprep.subr.bf16.mxu0 0
        %1939 = vmatpush1.bf16.msra.mxu0 0
        %1940 = vmatprep.subr.bf16.mxu0 0
        %1941 = vmatpush1.bf16.msra.mxu0 0
        %1942 = vmatprep.subr.bf16.mxu0 0
        %1943 = vmatpush1.bf16.msra.mxu0 0
        %1944 = vmatprep.subr.bf16.mxu0 0
        %1945 = vmatpush1.bf16.msra.mxu0 0
        %1946 = vmatprep.subr.bf16.mxu0 0
        %1947 = vmatpush1.bf16.msra.mxu0 0
        %1948 = vmatprep.mubr.bf16.mxu0 0
        %1949 = vmatmul.mubr.bf16.gmra.mrb[0].mxu0 %v1890
        %v1950 = vpop.f32.mrb[0].mxu0
        %v1951 = vadd.f32 0.0, %v1950
        %v1952 = vpop.f32.mrb[0].mxu0
        %v1953 = vpop.f32.mrb[0].mxu0
        %v1954 = vadd.f32 0.0, %v1953
        %v1955 = vpop.f32.mrb[0].mxu0
        %1956 = vmatprep.mubr.bf16.mxu0 0
        %1957 = vmatmul.mubr.bf16.gmra.mrb[0].mxu0 %v1893
        %v1958 = vpop.f32.mrb[0].mxu0
        %v1959 = vadd.f32 0.0, %v1958
        %v1960 = vpop.f32.mrb[0].mxu0
        %v1961 = vpop.f32.mrb[0].mxu0
        %v1962 = vadd.f32 0.0, %v1961
        %v1963 = vpop.f32.mrb[0].mxu0
        %1964 = vmatprep.mubr.bf16.mxu0 0
        %1965 = vmatmul.mubr.bf16.gmra.mrb[0].mxu0 %v1896
        %v1966 = vpop.f32.mrb[0].mxu0
        %v1967 = vadd.f32 0.0, %v1966
        %v1968 = vpop.f32.mrb[0].mxu0
        %v1969 = vpop.f32.mrb[0].mxu0
        %v1970 = vadd.f32 0.0, %v1969
        %v1971 = vpop.f32.mrb[0].mxu0
        %1972 = vmatprep.mubr.bf16.mxu0 0
        %1973 = vmatmul.mubr.bf16.gmra.mrb[0].mxu0 %v1899
        %v1974 = vpop.f32.mrb[0].mxu0
        %v1975 = vadd.f32 0.0, %v1974
        %v1976 = vpop.f32.mrb[0].mxu0
        %v1977 = vpop.f32.mrb[0].mxu0
        %v1978 = vadd.f32 0.0, %v1977
        %v1979 = vpop.f32.mrb[0].mxu0
        %1980 = vmatprep.mubr.bf16.mxu0 0
        %1981 = vmatmul.mubr.bf16.gmra.mrb[0].mxu0 %v1902
        %v1982 = vpop.f32.mrb[0].mxu0
        %v1983 = vadd.f32 0.0, %v1982
        %v1984 = vpop.f32.mrb[0].mxu0
        %v1985 = vpop.f32.mrb[0].mxu0
        %v1986 = vadd.f32 0.0, %v1985
        %v1987 = vpop.f32.mrb[0].mxu0
        %1988 = vmatprep.mubr.bf16.mxu0 0
        %1989 = vmatmul.mubr.bf16.gmra.mrb[0].mxu0 %v1905
        %v1990 = vpop.f32.mrb[0].mxu0
        %v1991 = vadd.f32 0.0, %v1990
        %v1992 = vpop.f32.mrb[0].mxu0
        %v1993 = vpop.f32.mrb[0].mxu0
        %v1994 = vadd.f32 0.0, %v1993
        %v1995 = vpop.f32.mrb[0].mxu0
        %1996 = vmatprep.mubr.bf16.mxu0 0
        %1997 = vmatmul.mubr.bf16.gmra.mrb[0].mxu0 %v1908
        %v1998 = vpop.f32.mrb[0].mxu0
        %v1999 = vadd.f32 0.0, %v1998
        %v2000 = vpop.f32.mrb[0].mxu0
        %v2001 = vpop.f32.mrb[0].mxu0
        %v2002 = vadd.f32 0.0, %v2001
        %v2003 = vpop.f32.mrb[0].mxu0
        %2004 = vmatprep.mubr.bf16.mxu0 0
        %2005 = vmatmul.mubr.bf16.gmra.mrb[0].mxu0 %v1911
        %v2006 = vpop.f32.mrb[0].mxu0
        %v2007 = vadd.f32 0.0, %v2006
        %v2008 = vpop.f32.mrb[0].mxu0
        %v2009 = vpop.f32.mrb[0].mxu0
        %v2010 = vpop.f32.mrb[0].mxu0
        %2011 = vdwg.mxu0
        %v2012 = vadd.f32 %v1830, %v1951
        %v2013 = vadd.f32 %v1831, %v1954
        %v2014 = vadd.f32 %v1832, %v1959
        %v2015 = vadd.f32 %v1833, %v1962
        %v2016 = vadd.f32 %v1834, %v1967
        %v2017 = vadd.f32 %v1835, %v1970
        %v2018 = vadd.f32 %v1836, %v1975
        %v2019 = vadd.f32 %v1837, %v1978
        %v2020 = vadd.f32 %v1838, %v1983
        %v2021 = vadd.f32 %v1839, %v1986
        %v2022 = vadd.f32 %v1840, %v1991
        %v2023 = vadd.f32 %v1841, %v1994
        %v2024 = vadd.f32 %v1842, %v1999
        %v2025 = vadd.f32 %v1843, %v2002
        %v2026 = vadd.f32 %v1844, %v2007
        %v2027 = vld [vmem:[%s545 + $0x3c] sm:$0xf]
        %s2028 = scalar_lea.vmem [#allocation11], 32
        %v2029 = vld [vmem:[%s2028] sm:$0xf]
        %v2031 = vunpack.c.l.b16 %v2027
        %v2032 = vpack.c.b16 %v947, %v946
        %v2033 = vpack.c.b16 %v949, %v948
        %v2034 = vpack.c.b16 %v951, %v950
        %v2035 = vpack.c.b16 %v953, %v952
        %v2036 = vpack.c.b16 %v955, %v954
        %v2037 = vpack.c.b16 %v957, %v956
        %v2038 = vpack.c.b16 %v959, %v958
        %v2039 = vpack.c.b16 %v2031, %v2031
        %v2041 = vsel %vm671, %v2032, 0
        %v2044 = vsel %vm671, %v2033, 0
        %v2047 = vsel %vm671, %v2034, 0
        %v2050 = vsel %vm671, %v2035, 0
        %v2053 = vsel %vm671, %v2036, 0
        %v2056 = vsel %vm671, %v2037, 0
        %v2059 = vsel %vm671, %v2038, 0
        %v2062 = vsel %vm671, %v2039, 0
        %v2065 = vsel %vm696, %v2029, 0
        %2067 = vmatprep.subr.bf16.mxu0 0
        %2068 = vmatpush1.bf16.msra.mxu0 %v2065
        %2069 = vmatprep.subr.bf16.mxu0 0
        %2070 = vmatpush1.bf16.msra.mxu0 0
        %2071 = vmatprep.subr.bf16.mxu0 0
        %2072 = vmatpush1.bf16.msra.mxu0 0
        %2073 = vmatprep.subr.bf16.mxu0 0
        %2074 = vmatpush1.bf16.msra.mxu0 0
        %2075 = vmatprep.subr.bf16.mxu0 0
        %2076 = vmatpush1.bf16.msra.mxu0 0
        %2077 = vmatprep.subr.bf16.mxu0 0
        %2078 = vmatpush1.bf16.msra.mxu0 0
        %2079 = vmatprep.subr.bf16.mxu0 0
        %2080 = vmatpush1.bf16.msra.mxu0 0
        %2081 = vmatprep.subr.bf16.mxu0 0
        %2082 = vmatpush1.bf16.msra.mxu0 0
        %2083 = vmatprep.subr.bf16.mxu0 0
        %2084 = vmatpush1.bf16.msra.mxu0 0
        %2085 = vmatprep.subr.bf16.mxu0 0
        %2086 = vmatpush1.bf16.msra.mxu0 0
        %2087 = vmatprep.subr.bf16.mxu0 0
        %2088 = vmatpush1.bf16.msra.mxu0 0
        %2089 = vmatprep.subr.bf16.mxu0 0
        %2090 = vmatpush1.bf16.msra.mxu0 0
        %2091 = vmatprep.subr.bf16.mxu0 0
        %2092 = vmatpush1.bf16.msra.mxu0 0
        %2093 = vmatprep.subr.bf16.mxu0 0
        %2094 = vmatpush1.bf16.msra.mxu0 0
        %2095 = vmatprep.subr.bf16.mxu0 0
        %2096 = vmatpush1.bf16.msra.mxu0 0
        %2097 = vmatprep.subr.bf16.mxu0 0
        %2098 = vmatpush1.bf16.msra.mxu0 0
        %2099 = vmatprep.mubr.bf16.mxu0 0
        %2100 = vmatmul.mubr.bf16.gmra.mrb[0].mxu0 %v2041
        %v2101 = vpop.f32.mrb[0].mxu0
        %v2102 = vadd.f32 0.0, %v2101
        %v2103 = vpop.f32.mrb[0].mxu0
        %v2104 = vpop.f32.mrb[0].mxu0
        %v2105 = vadd.f32 0.0, %v2104
        %v2106 = vpop.f32.mrb[0].mxu0
        %2107 = vmatprep.mubr.bf16.mxu0 0
        %2108 = vmatmul.mubr.bf16.gmra.mrb[0].mxu0 %v2044
        %v2109 = vpop.f32.mrb[0].mxu0
        %v2110 = vadd.f32 0.0, %v2109
        %v2111 = vpop.f32.mrb[0].mxu0
        %v2112 = vpop.f32.mrb[0].mxu0
        %v2113 = vadd.f32 0.0, %v2112
        %v2114 = vpop.f32.mrb[0].mxu0
        %2115 = vmatprep.mubr.bf16.mxu0 0
        %2116 = vmatmul.mubr.bf16.gmra.mrb[0].mxu0 %v2047
        %v2117 = vpop.f32.mrb[0].mxu0
        %v2118 = vadd.f32 0.0, %v2117
        %v2119 = vpop.f32.mrb[0].mxu0
        %v2120 = vpop.f32.mrb[0].mxu0
        %v2121 = vadd.f32 0.0, %v2120
        %v2122 = vpop.f32.mrb[0].mxu0
        %2123 = vmatprep.mubr.bf16.mxu0 0
        %2124 = vmatmul.mubr.bf16.gmra.mrb[0].mxu0 %v2050
        %v2125 = vpop.f32.mrb[0].mxu0
        %v2126 = vadd.f32 0.0, %v2125
        %v2127 = vpop.f32.mrb[0].mxu0
        %v2128 = vpop.f32.mrb[0].mxu0
        %v2129 = vadd.f32 0.0, %v2128
        %v2130 = vpop.f32.mrb[0].mxu0
        %2131 = vmatprep.mubr.bf16.mxu0 0
        %2132 = vmatmul.mubr.bf16.gmra.mrb[0].mxu0 %v2053
        %v2133 = vpop.f32.mrb[0].mxu0
        %v2134 = vadd.f32 0.0, %v2133
        %v2135 = vpop.f32.mrb[0].mxu0
        %v2136 = vpop.f32.mrb[0].mxu0
        %v2137 = vadd.f32 0.0, %v2136
        %v2138 = vpop.f32.mrb[0].mxu0
        %2139 = vmatprep.mubr.bf16.mxu0 0
        %2140 = vmatmul.mubr.bf16.gmra.mrb[0].mxu0 %v2056
        %v2141 = vpop.f32.mrb[0].mxu0
        %v2142 = vadd.f32 0.0, %v2141
        %v2143 = vpop.f32.mrb[0].mxu0
        %v2144 = vpop.f32.mrb[0].mxu0
        %v2145 = vadd.f32 0.0, %v2144
        %v2146 = vpop.f32.mrb[0].mxu0
        %2147 = vmatprep.mubr.bf16.mxu0 0
        %2148 = vmatmul.mubr.bf16.gmra.mrb[0].mxu0 %v2059
        %v2149 = vpop.f32.mrb[0].mxu0
        %v2150 = vadd.f32 0.0, %v2149
        %v2151 = vpop.f32.mrb[0].mxu0
        %v2152 = vpop.f32.mrb[0].mxu0
        %v2153 = vadd.f32 0.0, %v2152
        %v2154 = vpop.f32.mrb[0].mxu0
        %2155 = vmatprep.mubr.bf16.mxu0 0
        %2156 = vmatmul.mubr.bf16.gmra.mrb[0].mxu0 %v2062
        %v2157 = vpop.f32.mrb[0].mxu0
        %v2158 = vadd.f32 0.0, %v2157
        %v2159 = vpop.f32.mrb[0].mxu0
        %v2160 = vpop.f32.mrb[0].mxu0
        %v2161 = vpop.f32.mrb[0].mxu0
        %2162 = vdwg.mxu0
        %v2163 = vadd.f32 %v2012, %v2102
        %v2164 = vadd.f32 %v2013, %v2105
        %v2165 = vadd.f32 %v2014, %v2110
        %v2166 = vadd.f32 %v2015, %v2113
        %v2167 = vadd.f32 %v2016, %v2118
        %v2168 = vadd.f32 %v2017, %v2121
        %v2169 = vadd.f32 %v2018, %v2126
        %v2170 = vadd.f32 %v2019, %v2129
        %v2171 = vadd.f32 %v2020, %v2134
        %v2172 = vadd.f32 %v2021, %v2137
        %v2173 = vadd.f32 %v2022, %v2142
        %v2174 = vadd.f32 %v2023, %v2145
        %v2175 = vadd.f32 %v2024, %v2150
        %v2176 = vadd.f32 %v2025, %v2153
        %v2177 = vadd.f32 %v2026, %v2158
        %s2178 = scalar_lea.vmem [#allocation11], 36
        %v2179 = vld [vmem:[%s2178] sm:$0xf]
        %v2180 = vshrl.u32 %v2032, 16
        %v2182 = vshll.u32 %v2032, 16
        %v2184 = vrot.slane %v2182, 1
        %v2185 = vor.u32 %v2180, %v2184
        %v2186 = vshll.u32 %v2033, 16
        %v2188 = vrot.slane %v2186, 1
        %v2189 = vsel %vm607, %v2185, %v2188
        %v2190 = vshrl.u32 %v2033, 16
        %v2192 = vor.u32 %v2190, %v2188
        %v2193 = vshll.u32 %v2034, 16
        %v2195 = vrot.slane %v2193, 1
        %v2196 = vsel %vm607, %v2192, %v2195
        %v2197 = vshrl.u32 %v2034, 16
        %v2199 = vor.u32 %v2197, %v2195
        %v2200 = vshll.u32 %v2035, 16
        %v2202 = vrot.slane %v2200, 1
        %v2203 = vsel %vm607, %v2199, %v2202
        %v2204 = vshrl.u32 %v2035, 16
        %v2206 = vor.u32 %v2204, %v2202
        %v2207 = vshll.u32 %v2036, 16
        %v2209 = vrot.slane %v2207, 1
        %v2210 = vsel %vm607, %v2206, %v2209
        %v2211 = vshrl.u32 %v2036, 16
        %v2213 = vor.u32 %v2211, %v2209
        %v2214 = vshll.u32 %v2037, 16
        %v2216 = vrot.slane %v2214, 1
        %v2217 = vsel %vm607, %v2213, %v2216
        %v2218 = vshrl.u32 %v2037, 16
        %v2220 = vor.u32 %v2218, %v2216
        %v2221 = vshll.u32 %v2038, 16
        %v2223 = vrot.slane %v2221, 1
        %v2224 = vsel %vm607, %v2220, %v2223
        %v2225 = vshrl.u32 %v2038, 16
        %v2227 = vor.u32 %v2225, %v2223
        %v2228 = vshll.u32 %v2039, 16
        %v2230 = vrot.slane %v2228, 1
        %v2231 = vsel %vm607, %v2227, %v2230
        %v2232 = vshrl.u32 %v2039, 16
        %v2234 = vor.u32 %v2232, %v2230
        %v2236 = vsel %vm671, %v2189, 0
        %v2239 = vsel %vm671, %v2196, 0
        %v2242 = vsel %vm671, %v2203, 0
        %v2245 = vsel %vm671, %v2210, 0
        %v2248 = vsel %vm671, %v2217, 0
        %v2251 = vsel %vm671, %v2224, 0
        %v2254 = vsel %vm671, %v2231, 0
        %v2257 = vsel %vm671, %v2234, 0
        %v2260 = vsel %vm696, %v2179, 0
        %2262 = vmatprep.subr.bf16.mxu0 0
        %2263 = vmatpush1.bf16.msra.mxu0 %v2260
        %2264 = vmatprep.subr.bf16.mxu0 0
        %2265 = vmatpush1.bf16.msra.mxu0 0
        %2266 = vmatprep.subr.bf16.mxu0 0
        %2267 = vmatpush1.bf16.msra.mxu0 0
        %2268 = vmatprep.subr.bf16.mxu0 0
        %2269 = vmatpush1.bf16.msra.mxu0 0
        %2270 = vmatprep.subr.bf16.mxu0 0
        %2271 = vmatpush1.bf16.msra.mxu0 0
        %2272 = vmatprep.subr.bf16.mxu0 0
        %2273 = vmatpush1.bf16.msra.mxu0 0
        %2274 = vmatprep.subr.bf16.mxu0 0
        %2275 = vmatpush1.bf16.msra.mxu0 0
        %2276 = vmatprep.subr.bf16.mxu0 0
        %2277 = vmatpush1.bf16.msra.mxu0 0
        %2278 = vmatprep.subr.bf16.mxu0 0
        %2279 = vmatpush1.bf16.msra.mxu0 0
        %2280 = vmatprep.subr.bf16.mxu0 0
        %2281 = vmatpush1.bf16.msra.mxu0 0
        %2282 = vmatprep.subr.bf16.mxu0 0
        %2283 = vmatpush1.bf16.msra.mxu0 0
        %2284 = vmatprep.subr.bf16.mxu0 0
        %2285 = vmatpush1.bf16.msra.mxu0 0
        %2286 = vmatprep.subr.bf16.mxu0 0
        %2287 = vmatpush1.bf16.msra.mxu0 0
        %2288 = vmatprep.subr.bf16.mxu0 0
        %2289 = vmatpush1.bf16.msra.mxu0 0
        %2290 = vmatprep.subr.bf16.mxu0 0
        %2291 = vmatpush1.bf16.msra.mxu0 0
        %2292 = vmatprep.subr.bf16.mxu0 0
        %2293 = vmatpush1.bf16.msra.mxu0 0
        %2294 = vmatprep.mubr.bf16.mxu0 0
        %2295 = vmatmul.mubr.bf16.gmra.mrb[0].mxu0 %v2236
        %v2296 = vpop.f32.mrb[0].mxu0
        %v2297 = vadd.f32 0.0, %v2296
        %v2298 = vpop.f32.mrb[0].mxu0
        %v2299 = vpop.f32.mrb[0].mxu0
        %v2300 = vadd.f32 0.0, %v2299
        %v2301 = vpop.f32.mrb[0].mxu0
        %2302 = vmatprep.mubr.bf16.mxu0 0
        %2303 = vmatmul.mubr.bf16.gmra.mrb[0].mxu0 %v2239
        %v2304 = vpop.f32.mrb[0].mxu0
        %v2305 = vadd.f32 0.0, %v2304
        %v2306 = vpop.f32.mrb[0].mxu0
        %v2307 = vpop.f32.mrb[0].mxu0
        %v2308 = vadd.f32 0.0, %v2307
        %v2309 = vpop.f32.mrb[0].mxu0
        %2310 = vmatprep.mubr.bf16.mxu0 0
        %2311 = vmatmul.mubr.bf16.gmra.mrb[0].mxu0 %v2242
        %v2312 = vpop.f32.mrb[0].mxu0
        %v2313 = vadd.f32 0.0, %v2312
        %v2314 = vpop.f32.mrb[0].mxu0
        %v2315 = vpop.f32.mrb[0].mxu0
        %v2316 = vadd.f32 0.0, %v2315
        %v2317 = vpop.f32.mrb[0].mxu0
        %2318 = vmatprep.mubr.bf16.mxu0 0
        %2319 = vmatmul.mubr.bf16.gmra.mrb[0].mxu0 %v2245
        %v2320 = vpop.f32.mrb[0].mxu0
        %v2321 = vadd.f32 0.0, %v2320
        %v2322 = vpop.f32.mrb[0].mxu0
        %v2323 = vpop.f32.mrb[0].mxu0
        %v2324 = vadd.f32 0.0, %v2323
        %v2325 = vpop.f32.mrb[0].mxu0
        %2326 = vmatprep.mubr.bf16.mxu0 0
        %2327 = vmatmul.mubr.bf16.gmra.mrb[0].mxu0 %v2248
        %v2328 = vpop.f32.mrb[0].mxu0
        %v2329 = vadd.f32 0.0, %v2328
        %v2330 = vpop.f32.mrb[0].mxu0
        %v2331 = vpop.f32.mrb[0].mxu0
        %v2332 = vadd.f32 0.0, %v2331
        %v2333 = vpop.f32.mrb[0].mxu0
        %2334 = vmatprep.mubr.bf16.mxu0 0
        %2335 = vmatmul.mubr.bf16.gmra.mrb[0].mxu0 %v2251
        %v2336 = vpop.f32.mrb[0].mxu0
        %v2337 = vadd.f32 0.0, %v2336
        %v2338 = vpop.f32.mrb[0].mxu0
        %v2339 = vpop.f32.mrb[0].mxu0
        %v2340 = vadd.f32 0.0, %v2339
        %v2341 = vpop.f32.mrb[0].mxu0
        %2342 = vmatprep.mubr.bf16.mxu0 0
        %2343 = vmatmul.mubr.bf16.gmra.mrb[0].mxu0 %v2254
        %v2344 = vpop.f32.mrb[0].mxu0
        %v2345 = vadd.f32 0.0, %v2344
        %v2346 = vpop.f32.mrb[0].mxu0
        %v2347 = vpop.f32.mrb[0].mxu0
        %v2348 = vadd.f32 0.0, %v2347
        %v2349 = vpop.f32.mrb[0].mxu0
        %2350 = vmatprep.mubr.bf16.mxu0 0
        %2351 = vmatmul.mubr.bf16.gmra.mrb[0].mxu0 %v2257
        %v2352 = vpop.f32.mrb[0].mxu0
        %v2353 = vadd.f32 0.0, %v2352
        %v2354 = vpop.f32.mrb[0].mxu0
        %v2355 = vpop.f32.mrb[0].mxu0
        %v2356 = vpop.f32.mrb[0].mxu0
        %2357 = vdwg.mxu0
        %v2358 = vadd.f32 %v2163, %v2297
        %v2359 = vadd.f32 %v2164, %v2300
        %v2360 = vadd.f32 %v2165, %v2305
        %v2361 = vadd.f32 %v2166, %v2308
        %v2362 = vadd.f32 %v2167, %v2313
        %v2363 = vadd.f32 %v2168, %v2316
        %v2364 = vadd.f32 %v2169, %v2321
        %v2365 = vadd.f32 %v2170, %v2324
        %v2366 = vadd.f32 %v2171, %v2329
        %v2367 = vadd.f32 %v2172, %v2332
        %v2368 = vadd.f32 %v2173, %v2337
        %v2369 = vadd.f32 %v2174, %v2340
        %v2370 = vadd.f32 %v2175, %v2345
        %v2371 = vadd.f32 %v2176, %v2348
        %v2372 = vadd.f32 %v2177, %v2353
        %v2373 = vld [vmem:[%s545 + $0x4] sm:$0xe]
        %v2374 = vld [vmem:[%s545 + $0x8] sm:$0xf]
        %v2375 = vld [vmem:[%s545 + $0xc] sm:$0xf]
        %v2376 = vld [vmem:[%s545 + $0x10] sm:$0xf]
        %v2377 = vld [vmem:[%s545 + $0x14] sm:$0xf]
        %v2378 = vld [vmem:[%s545 + $0x18] sm:$0xf]
        %v2379 = vld [vmem:[%s545 + $0x1c] sm:$0xf]
        %v2380 = vld [vmem:[%s545 + $0x20] sm:$0xf]
        %v2381 = vld [vmem:[%s545 + $0x24] sm:$0xf]
        %v2382 = vld [vmem:[%s545 + $0x28] sm:$0xf]
        %v2383 = vld [vmem:[%s545 + $0x2c] sm:$0xf]
        %v2384 = vld [vmem:[%s545 + $0x30] sm:$0xf]
        %v2385 = vld [vmem:[%s545 + $0x34] sm:$0xf]
        %v2386 = vld [vmem:[%s545 + $0x38] sm:$0xf]
        %v2387 = vld [vmem:[%s545 + $0x3c] sm:$0xf]
        %v2388 = vld [vmem:[%s545 + $0x40] sm:$0x1]
        %s2389 = scalar_lea.vmem [#allocation11], 40
        %v2390 = vld [vmem:[%s2389] sm:$0xf]
        %v2407 = vunpack.c.l.b16 %v2373
        %v2408 = vunpack.c.l.b16 %v2374
        %v2409 = vunpack.c.l.b16 %v2375
        %v2410 = vunpack.c.l.b16 %v2376
        %v2411 = vunpack.c.l.b16 %v2377
        %v2412 = vunpack.c.l.b16 %v2378
        %v2413 = vunpack.c.l.b16 %v2379
        %v2414 = vunpack.c.l.b16 %v2380
        %v2415 = vunpack.c.l.b16 %v2381
        %v2416 = vunpack.c.l.b16 %v2382
        %v2417 = vunpack.c.l.b16 %v2383
        %v2418 = vunpack.c.l.b16 %v2384
        %v2419 = vunpack.c.l.b16 %v2385
        %v2420 = vunpack.c.l.b16 %v2386
        %v2421 = vunpack.c.l.b16 %v2387
        %v2422 = vunpack.c.l.b16 %v2388
        %v2423 = vpack.c.b16 %v2408, %v2407
        %v2424 = vpack.c.b16 %v2410, %v2409
        %v2425 = vpack.c.b16 %v2412, %v2411
        %v2426 = vpack.c.b16 %v2414, %v2413
        %v2427 = vpack.c.b16 %v2416, %v2415
        %v2428 = vpack.c.b16 %v2418, %v2417
        %v2429 = vpack.c.b16 %v2420, %v2419
        %v2430 = vpack.c.b16 %v2422, %v2421
        %v2431 = vrot.slane %v2423, 1
        %v2432 = vrot.slane %v2424, 1
        %v2433 = vsel %vm969, %v2431, %v2432
        %v2434 = vrot.slane %v2425, 1
        %v2435 = vsel %vm969, %v2432, %v2434
        %v2436 = vrot.slane %v2426, 1
        %v2437 = vsel %vm969, %v2434, %v2436
        %v2438 = vrot.slane %v2427, 1
        %v2439 = vsel %vm969, %v2436, %v2438
        %v2440 = vrot.slane %v2428, 1
        %v2441 = vsel %vm969, %v2438, %v2440
        %v2442 = vrot.slane %v2429, 1
        %v2443 = vsel %vm969, %v2440, %v2442
        %v2444 = vrot.slane %v2430, 1
        %v2445 = vsel %vm969, %v2442, %v2444
        %v2447 = vsel %vm671, %v2433, 0
        %v2450 = vsel %vm671, %v2435, 0
        %v2453 = vsel %vm671, %v2437, 0
        %v2456 = vsel %vm671, %v2439, 0
        %v2459 = vsel %vm671, %v2441, 0
        %v2462 = vsel %vm671, %v2443, 0
        %v2465 = vsel %vm671, %v2445, 0
        %v2468 = vsel %vm671, %v2444, 0
        %v2471 = vsel %vm696, %v2390, 0
        %2473 = vmatprep.subr.bf16.mxu0 0
        %2474 = vmatpush1.bf16.msra.mxu0 %v2471
        %2475 = vmatprep.subr.bf16.mxu0 0
        %2476 = vmatpush1.bf16.msra.mxu0 0
        %2477 = vmatprep.subr.bf16.mxu0 0
        %2478 = vmatpush1.bf16.msra.mxu0 0
        %2479 = vmatprep.subr.bf16.mxu0 0
        %2480 = vmatpush1.bf16.msra.mxu0 0
        %2481 = vmatprep.subr.bf16.mxu0 0
        %2482 = vmatpush1.bf16.msra.mxu0 0
        %2483 = vmatprep.subr.bf16.mxu0 0
        %2484 = vmatpush1.bf16.msra.mxu0 0
        %2485 = vmatprep.subr.bf16.mxu0 0
        %2486 = vmatpush1.bf16.msra.mxu0 0
        %2487 = vmatprep.subr.bf16.mxu0 0
        %2488 = vmatpush1.bf16.msra.mxu0 0
        %2489 = vmatprep.subr.bf16.mxu0 0
        %2490 = vmatpush1.bf16.msra.mxu0 0
        %2491 = vmatprep.subr.bf16.mxu0 0
        %2492 = vmatpush1.bf16.msra.mxu0 0
        %2493 = vmatprep.subr.bf16.mxu0 0
        %2494 = vmatpush1.bf16.msra.mxu0 0
        %2495 = vmatprep.subr.bf16.mxu0 0
        %2496 = vmatpush1.bf16.msra.mxu0 0
        %2497 = vmatprep.subr.bf16.mxu0 0
        %2498 = vmatpush1.bf16.msra.mxu0 0
        %2499 = vmatprep.subr.bf16.mxu0 0
        %2500 = vmatpush1.bf16.msra.mxu0 0
        %2501 = vmatprep.subr.bf16.mxu0 0
        %2502 = vmatpush1.bf16.msra.mxu0 0
        %2503 = vmatprep.subr.bf16.mxu0 0
        %2504 = vmatpush1.bf16.msra.mxu0 0
        %2505 = vmatprep.mubr.bf16.mxu0 0
        %2506 = vmatmul.mubr.bf16.gmra.mrb[0].mxu0 %v2447
        %v2507 = vpop.f32.mrb[0].mxu0
        %v2508 = vadd.f32 0.0, %v2507
        %v2509 = vpop.f32.mrb[0].mxu0
        %v2510 = vpop.f32.mrb[0].mxu0
        %v2511 = vadd.f32 0.0, %v2510
        %v2512 = vpop.f32.mrb[0].mxu0
        %2513 = vmatprep.mubr.bf16.mxu0 0
        %2514 = vmatmul.mubr.bf16.gmra.mrb[0].mxu0 %v2450
        %v2515 = vpop.f32.mrb[0].mxu0
        %v2516 = vadd.f32 0.0, %v2515
        %v2517 = vpop.f32.mrb[0].mxu0
        %v2518 = vpop.f32.mrb[0].mxu0
        %v2519 = vadd.f32 0.0, %v2518
        %v2520 = vpop.f32.mrb[0].mxu0
        %2521 = vmatprep.mubr.bf16.mxu0 0
        %2522 = vmatmul.mubr.bf16.gmra.mrb[0].mxu0 %v2453
        %v2523 = vpop.f32.mrb[0].mxu0
        %v2524 = vadd.f32 0.0, %v2523
        %v2525 = vpop.f32.mrb[0].mxu0
        %v2526 = vpop.f32.mrb[0].mxu0
        %v2527 = vadd.f32 0.0, %v2526
        %v2528 = vpop.f32.mrb[0].mxu0
        %2529 = vmatprep.mubr.bf16.mxu0 0
        %2530 = vmatmul.mubr.bf16.gmra.mrb[0].mxu0 %v2456
        %v2531 = vpop.f32.mrb[0].mxu0
        %v2532 = vadd.f32 0.0, %v2531
        %v2533 = vpop.f32.mrb[0].mxu0
        %v2534 = vpop.f32.mrb[0].mxu0
        %v2535 = vadd.f32 0.0, %v2534
        %v2536 = vpop.f32.mrb[0].mxu0
        %2537 = vmatprep.mubr.bf16.mxu0 0
        %2538 = vmatmul.mubr.bf16.gmra.mrb[0].mxu0 %v2459
        %v2539 = vpop.f32.mrb[0].mxu0
        %v2540 = vadd.f32 0.0, %v2539
        %v2541 = vpop.f32.mrb[0].mxu0
        %v2542 = vpop.f32.mrb[0].mxu0
        %v2543 = vadd.f32 0.0, %v2542
        %v2544 = vpop.f32.mrb[0].mxu0
        %2545 = vmatprep.mubr.bf16.mxu0 0
        %2546 = vmatmul.mubr.bf16.gmra.mrb[0].mxu0 %v2462
        %v2547 = vpop.f32.mrb[0].mxu0
        %v2548 = vadd.f32 0.0, %v2547
        %v2549 = vpop.f32.mrb[0].mxu0
        %v2550 = vpop.f32.mrb[0].mxu0
        %v2551 = vadd.f32 0.0, %v2550
        %v2552 = vpop.f32.mrb[0].mxu0
        %2553 = vmatprep.mubr.bf16.mxu0 0
        %2554 = vmatmul.mubr.bf16.gmra.mrb[0].mxu0 %v2465
        %v2555 = vpop.f32.mrb[0].mxu0
        %v2556 = vadd.f32 0.0, %v2555
        %v2557 = vpop.f32.mrb[0].mxu0
        %v2558 = vpop.f32.mrb[0].mxu0
        %v2559 = vadd.f32 0.0, %v2558
        %v2560 = vpop.f32.mrb[0].mxu0
        %2561 = vmatprep.mubr.bf16.mxu0 0
        %2562 = vmatmul.mubr.bf16.gmra.mrb[0].mxu0 %v2468
        %v2563 = vpop.f32.mrb[0].mxu0
        %v2564 = vadd.f32 0.0, %v2563
        %v2565 = vpop.f32.mrb[0].mxu0
        %v2566 = vpop.f32.mrb[0].mxu0
        %v2567 = vpop.f32.mrb[0].mxu0
        %2568 = vdwg.mxu0
        %v2569 = vadd.f32 %v2358, %v2508
        %v2570 = vadd.f32 %v2359, %v2511
        %v2571 = vadd.f32 %v2360, %v2516
        %v2572 = vadd.f32 %v2361, %v2519
        %v2573 = vadd.f32 %v2362, %v2524
        %v2574 = vadd.f32 %v2363, %v2527
        %v2575 = vadd.f32 %v2364, %v2532
        %v2576 = vadd.f32 %v2365, %v2535
        %v2577 = vadd.f32 %v2366, %v2540
        %v2578 = vadd.f32 %v2367, %v2543
        %v2579 = vadd.f32 %v2368, %v2548
        %v2580 = vadd.f32 %v2369, %v2551
        %v2581 = vadd.f32 %v2370, %v2556
        %v2582 = vadd.f32 %v2371, %v2559
        %v2583 = vadd.f32 %v2372, %v2564
        %v2584 = vld [vmem:[%s6] sm:$0x1]
        %v2586 = vlaneseq
        %v2587 = vshrl.u32 %v2586, 7
        %v2588 = vsub.s32 0, %v2587
        %v2589 = vrot.slane %v2584, %v2588
        %v2591 = vmul.f32 %v2569, %v2589
        %v2592 = vmul.f32 %v2570, %v2589
        %v2593 = vmul.f32 %v2571, %v2589
        %v2594 = vmul.f32 %v2572, %v2589
        %v2595 = vmul.f32 %v2573, %v2589
        %v2596 = vmul.f32 %v2574, %v2589
        %v2597 = vmul.f32 %v2575, %v2589
        %v2598 = vmul.f32 %v2576, %v2589
        %v2599 = vmul.f32 %v2577, %v2589
        %v2600 = vmul.f32 %v2578, %v2589
        %v2601 = vmul.f32 %v2579, %v2589
        %v2602 = vmul.f32 %v2580, %v2589
        %v2603 = vmul.f32 %v2581, %v2589
        %v2604 = vmul.f32 %v2582, %v2589
        %v2605 = vmul.f32 %v2583, %v2589
        %v2606 = vld [vmem:[%s7] sm:$0x1]
        %v2608 = vlaneseq
        %v2609 = vshrl.u32 %v2608, 7
        %v2610 = vsub.s32 0, %v2609
        %v2611 = vrot.slane %v2606, %v2610
        %v2613 = vadd.f32 %v2591, %v2611
        %v2614 = vadd.f32 %v2592, %v2611
        %v2615 = vadd.f32 %v2593, %v2611
        %v2616 = vadd.f32 %v2594, %v2611
        %v2617 = vadd.f32 %v2595, %v2611
        %v2618 = vadd.f32 %v2596, %v2611
        %v2619 = vadd.f32 %v2597, %v2611
        %v2620 = vadd.f32 %v2598, %v2611
        %v2621 = vadd.f32 %v2599, %v2611
        %v2622 = vadd.f32 %v2600, %v2611
        %v2623 = vadd.f32 %v2601, %v2611
        %v2624 = vadd.f32 %v2602, %v2611
        %v2625 = vadd.f32 %v2603, %v2611
        %v2626 = vadd.f32 %v2604, %v2611
        %v2627 = vadd.f32 %v2605, %v2611
        %v2628 = vmax.f32 %v2613, 0.0
        %v2629 = vmax.f32 %v2614, 0.0
        %v2630 = vmax.f32 %v2615, 0.0
        %v2631 = vmax.f32 %v2616, 0.0
        %v2632 = vmax.f32 %v2617, 0.0
        %v2633 = vmax.f32 %v2618, 0.0
        %v2634 = vmax.f32 %v2619, 0.0
        %v2635 = vmax.f32 %v2620, 0.0
        %v2636 = vmax.f32 %v2621, 0.0
        %v2637 = vmax.f32 %v2622, 0.0
        %v2638 = vmax.f32 %v2623, 0.0
        %v2639 = vmax.f32 %v2624, 0.0
        %v2640 = vmax.f32 %v2625, 0.0
        %v2641 = vmax.f32 %v2626, 0.0
        %v2642 = vmax.f32 %v2627, 0.0
        %vm2643 = vcmask 130048
        %2644 = vst.msk [vmem:[#allocation2] sm:$0xff] %vm2643, 0.0
        %2645 = vst.msk [vmem:[#allocation2 + $0x8] sm:$0xff] %vm2643, 0.0
        %2646 = vst.msk [vmem:[#allocation2 + $0x10] sm:$0xff] %vm2643, 0.0
        %2647 = vst.msk [vmem:[#allocation2 + $0x18] sm:$0xff] %vm2643, 0.0
        %2648 = vst.msk [vmem:[#allocation2 + $0x20] sm:$0xff] %vm2643, 0.0
        %2649 = vst.msk [vmem:[#allocation2 + $0x28] sm:$0xff] %vm2643, 0.0
        %2650 = vst.msk [vmem:[#allocation2 + $0x30] sm:$0xff] %vm2643, 0.0
        %2651 = vst.msk [vmem:[#allocation2 + $0x38] sm:$0xff] %vm2643, 0.0
        %2652 = vst.msk [vmem:[#allocation2 + $0x40] sm:$0xff] %vm2643, 0.0
        %2653 = vst.msk [vmem:[#allocation2 + $0x48] sm:$0xff] %vm2643, 0.0
        %2654 = vst.msk [vmem:[#allocation2 + $0x50] sm:$0xff] %vm2643, 0.0
        %2655 = vst.msk [vmem:[#allocation2 + $0x58] sm:$0xff] %vm2643, 0.0
        %2656 = vst.msk [vmem:[#allocation2 + $0x60] sm:$0xff] %vm2643, 0.0
        %2657 = vst.msk [vmem:[#allocation2 + $0x68] sm:$0xff] %vm2643, 0.0
        %2658 = vst.msk [vmem:[#allocation2 + $0x70] sm:$0xff] %vm2643, 0.0
        %2659 = vst.msk [vmem:[#allocation2 + $0x78] sm:$0xff] %vm2643, 0.0
        %2660 = vst.msk [vmem:[#allocation2 + $0x8] sm:$0xff] %vm2643, %v2628
        %2661 = vst.msk [vmem:[#allocation2 + $0x10] sm:$0xff] %vm2643, %v2629
        %2662 = vst.msk [vmem:[#allocation2 + $0x18] sm:$0xff] %vm2643, %v2630
        %2663 = vst.msk [vmem:[#allocation2 + $0x20] sm:$0xff] %vm2643, %v2631
        %2664 = vst.msk [vmem:[#allocation2 + $0x28] sm:$0xff] %vm2643, %v2632
        %2665 = vst.msk [vmem:[#allocation2 + $0x30] sm:$0xff] %vm2643, %v2633
        %2666 = vst.msk [vmem:[#allocation2 + $0x38] sm:$0xff] %vm2643, %v2634
        %2667 = vst.msk [vmem:[#allocation2 + $0x40] sm:$0xff] %vm2643, %v2635
        %2668 = vst.msk [vmem:[#allocation2 + $0x48] sm:$0xff] %vm2643, %v2636
        %2669 = vst.msk [vmem:[#allocation2 + $0x50] sm:$0xff] %vm2643, %v2637
        %2670 = vst.msk [vmem:[#allocation2 + $0x58] sm:$0xff] %vm2643, %v2638
        %2671 = vst.msk [vmem:[#allocation2 + $0x60] sm:$0xff] %vm2643, %v2639
        %2672 = vst.msk [vmem:[#allocation2 + $0x68] sm:$0xff] %vm2643, %v2640
        %2673 = vst.msk [vmem:[#allocation2 + $0x70] sm:$0xff] %vm2643, %v2641
        %vm2674 = vcmask 129024
        %2675 = vst.msk [vmem:[#allocation2 + $0x78] sm:$0x7f] %vm2674, %v2642
        %s2676 = scalar_lea.vmem [#allocation2], 7
        %v2677 = vld [vmem:[%s2676] ss:$2 sm:$0xff]
        %s2678 = scalar_lea.vmem [#allocation2], 23
        %v2679 = vld [vmem:[%s2678] ss:$2 sm:$0xff]
        %s2680 = scalar_lea.vmem [#allocation2], 39
        %v2681 = vld [vmem:[%s2680] ss:$2 sm:$0xff]
        %s2682 = scalar_lea.vmem [#allocation2], 55
        %v2683 = vld [vmem:[%s2682] ss:$2 sm:$0xff]
        %s2684 = scalar_lea.vmem [#allocation2], 71
        %v2685 = vld [vmem:[%s2684] ss:$2 sm:$0xff]
        %s2686 = scalar_lea.vmem [#allocation2], 87
        %v2687 = vld [vmem:[%s2686] ss:$2 sm:$0xff]
        %s2688 = scalar_lea.vmem [#allocation2], 103
        %v2689 = vld [vmem:[%s2688] ss:$2 sm:$0xff]
        %s2690 = scalar_lea.vmem [#allocation2], 119
        %v2691 = vld [vmem:[%s2690] ss:$2 sm:$0xf]
        %s2692 = scalar_lea.vmem [#allocation2], 8
        %v2693 = vld [vmem:[%s2692] ss:$2 sm:$0xff]
        %s2694 = scalar_lea.vmem [#allocation2], 24
        %v2695 = vld [vmem:[%s2694] ss:$2 sm:$0xff]
        %s2696 = scalar_lea.vmem [#allocation2], 40
        %v2697 = vld [vmem:[%s2696] ss:$2 sm:$0xff]
        %s2698 = scalar_lea.vmem [#allocation2], 56
        %v2699 = vld [vmem:[%s2698] ss:$2 sm:$0xff]
        %s2700 = scalar_lea.vmem [#allocation2], 72
        %v2701 = vld [vmem:[%s2700] ss:$2 sm:$0xff]
        %s2702 = scalar_lea.vmem [#allocation2], 88
        %v2703 = vld [vmem:[%s2702] ss:$2 sm:$0xff]
        %s2704 = scalar_lea.vmem [#allocation2], 104
        %v2705 = vld [vmem:[%s2704] ss:$2 sm:$0xff]
        %s2706 = scalar_lea.vmem [#allocation2], 120
        %v2707 = vld [vmem:[%s2706] ss:$2 sm:$0xf]
        %v2708 = vmax.f32 %v2677, %v2693
        %v2709 = vmax.f32 %v2679, %v2695
        %v2710 = vmax.f32 %v2681, %v2697
        %v2711 = vmax.f32 %v2683, %v2699
        %v2712 = vmax.f32 %v2685, %v2701
        %v2713 = vmax.f32 %v2687, %v2703
        %v2714 = vmax.f32 %v2689, %v2705
        %v2715 = vmax.f32 %v2691, %v2707
        %2716 = vst.msk [vmem:[#allocation3] sm:$0xff] %vm2643, 0.0
        %2717 = vst.msk [vmem:[#allocation3 + $0x8] sm:$0xff] %vm2643, 0.0
        %2718 = vst.msk [vmem:[#allocation3 + $0x10] sm:$0xff] %vm2643, 0.0
        %2719 = vst.msk [vmem:[#allocation3 + $0x18] sm:$0xff] %vm2643, 0.0
        %2720 = vst.msk [vmem:[#allocation3 + $0x20] sm:$0xff] %vm2643, 0.0
        %2721 = vst.msk [vmem:[#allocation3 + $0x28] sm:$0xff] %vm2643, 0.0
        %2722 = vst.msk [vmem:[#allocation3 + $0x30] sm:$0xff] %vm2643, 0.0
        %2723 = vst.msk [vmem:[#allocation3 + $0x38] sm:$0xff] %vm2643, 0.0
        %vm2724 = vcmask 126976
        %2725 = vst.msk [vmem:[#allocation3 + $0x40] sm:$0x1f] %vm2724, 0.0
        %2726 = vst.msk [vmem:[#allocation3 + $0x8] sm:$0xff] %vm2643, %v2708
        %2727 = vst.msk [vmem:[#allocation3 + $0x10] sm:$0xff] %vm2643, %v2709
        %2728 = vst.msk [vmem:[#allocation3 + $0x18] sm:$0xff] %vm2643, %v2710
        %2729 = vst.msk [vmem:[#allocation3 + $0x20] sm:$0xff] %vm2643, %v2711
        %2730 = vst.msk [vmem:[#allocation3 + $0x28] sm:$0xff] %vm2643, %v2712
        %2731 = vst.msk [vmem:[#allocation3 + $0x30] sm:$0xff] %vm2643, %v2713
        %2732 = vst.msk [vmem:[#allocation3 + $0x38] sm:$0xff] %vm2643, %v2714
        %vm2733 = vcmask 125952
        %2734 = vst.msk [vmem:[#allocation3 + $0x40] sm:$0xf] %vm2733, %v2715
        %v2735 = vld [vmem:[#allocation3 + $0x7] sm:$0xff]
        %v2736 = vld [vmem:[#allocation3 + $0xf] sm:$0xff]
        %v2737 = vld [vmem:[#allocation3 + $0x17] sm:$0xff]
        %v2738 = vld [vmem:[#allocation3 + $0x1f] sm:$0xff]
        %v2739 = vld [vmem:[#allocation3 + $0x27] sm:$0xff]
        %v2740 = vld [vmem:[#allocation3 + $0x2f] sm:$0xff]
        %v2741 = vld [vmem:[#allocation3 + $0x37] sm:$0xff]
        %v2742 = vld [vmem:[#allocation3 + $0x3f] sm:$0xf]
        %v2743 = vpack.c.bf16 %v2736, %v2735
        %v2744 = vpack.c.bf16 %v2738, %v2737
        %v2745 = vpack.c.bf16 %v2740, %v2739
        %v2746 = vpack.c.bf16 %v2742, %v2741
        %v2747 = vld [vmem:[%s2] sm:$0xf]
        %v2748 = vld [vmem:[%s2 + $0x4] sm:$0xf]
        %v2749 = vld [vmem:[#allocation3 + $0x8] sm:$0xff]
        %v2750 = vld [vmem:[#allocation3 + $0x10] sm:$0xff]
        %v2751 = vld [vmem:[#allocation3 + $0x18] sm:$0xff]
        %v2752 = vld [vmem:[#allocation3 + $0x20] sm:$0xff]
        %v2753 = vld [vmem:[#allocation3 + $0x28] sm:$0xff]
        %v2754 = vld [vmem:[#allocation3 + $0x30] sm:$0xff]
        %v2755 = vld [vmem:[#allocation3 + $0x38] sm:$0xff]
        %v2756 = vld [vmem:[#allocation3 + $0x40] sm:$0xf]
        %v2757 = vpack.c.bf16 %v2750, %v2749
        %v2758 = vpack.c.bf16 %v2752, %v2751
        %v2759 = vpack.c.bf16 %v2754, %v2753
        %v2760 = vpack.c.bf16 %v2756, %v2755
        %s2761 = scalar_lea.vmem %s2, 8
        %v2762 = vld [vmem:[%s2761] sm:$0xf]
        %v2763 = vld [vmem:[%s2761 + $0x4] sm:$0xf]
        %v2766 = vunpack.c.l.b16 %v2762
        %v2767 = vunpack.c.l.b16 %v2763
        %v2768 = vpack.c.b16 %v2767, %v2766
        %v2771 = vsel %vm2643, %v2757, 0
        %v2774 = vsel %vm2643, %v2758, 0
        %v2777 = vsel %vm2643, %v2759, 0
        %v2780 = vsel %vm2643, %v2760, 0
        %2782 = vmatprep.subr.bf16.mxu0 0
        %2783 = vmatpush1.bf16.msra.mxu0 %v2768
        %2784 = vmatprep.subr.bf16.mxu0 0
        %2785 = vmatpush1.bf16.msra.mxu0 0
        %2786 = vmatprep.subr.bf16.mxu0 0
        %2787 = vmatpush1.bf16.msra.mxu0 0
        %2788 = vmatprep.subr.bf16.mxu0 0
        %2789 = vmatpush1.bf16.msra.mxu0 0
        %2790 = vmatprep.subr.bf16.mxu0 0
        %2791 = vmatpush1.bf16.msra.mxu0 0
        %2792 = vmatprep.subr.bf16.mxu0 0
        %2793 = vmatpush1.bf16.msra.mxu0 0
        %2794 = vmatprep.subr.bf16.mxu0 0
        %2795 = vmatpush1.bf16.msra.mxu0 0
        %2796 = vmatprep.subr.bf16.mxu0 0
        %2797 = vmatpush1.bf16.msra.mxu0 0
        %2798 = vmatprep.subr.bf16.mxu0 0
        %2799 = vmatpush1.bf16.msra.mxu0 0
        %2800 = vmatprep.subr.bf16.mxu0 0
        %2801 = vmatpush1.bf16.msra.mxu0 0
        %2802 = vmatprep.subr.bf16.mxu0 0
        %2803 = vmatpush1.bf16.msra.mxu0 0
        %2804 = vmatprep.subr.bf16.mxu0 0
        %2805 = vmatpush1.bf16.msra.mxu0 0
        %2806 = vmatprep.subr.bf16.mxu0 0
        %2807 = vmatpush1.bf16.msra.mxu0 0
        %2808 = vmatprep.subr.bf16.mxu0 0
        %2809 = vmatpush1.bf16.msra.mxu0 0
        %2810 = vmatprep.subr.bf16.mxu0 0
        %2811 = vmatpush1.bf16.msra.mxu0 0
        %2812 = vmatprep.subr.bf16.mxu0 0
        %2813 = vmatpush1.bf16.msra.mxu0 0
        %2814 = vmatprep.mubr.bf16.mxu0 0
        %2815 = vmatmul.mubr.bf16.gmra.mrb[0].mxu0 %v2771
        %v2816 = vpop.f32.mrb[0].mxu0
        %v2817 = vadd.f32 0.0, %v2816
        %v2818 = vpop.f32.mrb[0].mxu0
        %v2819 = vpop.f32.mrb[0].mxu0
        %v2820 = vadd.f32 0.0, %v2819
        %v2821 = vpop.f32.mrb[0].mxu0
        %2822 = vmatprep.mubr.bf16.mxu0 0
        %2823 = vmatmul.mubr.bf16.gmra.mrb[0].mxu0 %v2774
        %v2824 = vpop.f32.mrb[0].mxu0
        %v2825 = vadd.f32 0.0, %v2824
        %v2826 = vpop.f32.mrb[0].mxu0
        %v2827 = vpop.f32.mrb[0].mxu0
        %v2828 = vadd.f32 0.0, %v2827
        %v2829 = vpop.f32.mrb[0].mxu0
        %2830 = vmatprep.mubr.bf16.mxu0 0
        %2831 = vmatmul.mubr.bf16.gmra.mrb[0].mxu0 %v2777
        %v2832 = vpop.f32.mrb[0].mxu0
        %v2833 = vadd.f32 0.0, %v2832
        %v2834 = vpop.f32.mrb[0].mxu0
        %v2835 = vpop.f32.mrb[0].mxu0
        %v2836 = vadd.f32 0.0, %v2835
        %v2837 = vpop.f32.mrb[0].mxu0
        %2838 = vmatprep.mubr.bf16.mxu0 0
        %2839 = vmatmul.mubr.bf16.gmra.mrb[0].mxu0 %v2780
        %v2840 = vpop.f32.mrb[0].mxu0
        %v2841 = vadd.f32 0.0, %v2840
        %v2842 = vpop.f32.mrb[0].mxu0
        %v2843 = vpop.f32.mrb[0].mxu0
        %v2844 = vadd.f32 0.0, %v2843
        %v2845 = vpop.f32.mrb[0].mxu0
        %2846 = vdwg.mxu0
        %v2849 = vunpack.c.l.b16 %v2747
        %v2850 = vunpack.c.l.b16 %v2748
        %v2851 = vpack.c.b16 %v2850, %v2849
        %v2854 = vsel %vm2643, %v2743, 0
        %v2857 = vsel %vm2643, %v2744, 0
        %v2860 = vsel %vm2643, %v2745, 0
        %v2863 = vsel %vm2643, %v2746, 0
        %2865 = vmatprep.subr.bf16.mxu0 0
        %2866 = vmatpush1.bf16.msra.mxu0 %v2851
        %2867 = vmatprep.subr.bf16.mxu0 0
        %2868 = vmatpush1.bf16.msra.mxu0 0
        %2869 = vmatprep.subr.bf16.mxu0 0
        %2870 = vmatpush1.bf16.msra.mxu0 0
        %2871 = vmatprep.subr.bf16.mxu0 0
        %2872 = vmatpush1.bf16.msra.mxu0 0
        %2873 = vmatprep.subr.bf16.mxu0 0
        %2874 = vmatpush1.bf16.msra.mxu0 0
        %2875 = vmatprep.subr.bf16.mxu0 0
        %2876 = vmatpush1.bf16.msra.mxu0 0
        %2877 = vmatprep.subr.bf16.mxu0 0
        %2878 = vmatpush1.bf16.msra.mxu0 0
        %2879 = vmatprep.subr.bf16.mxu0 0
        %2880 = vmatpush1.bf16.msra.mxu0 0
        %2881 = vmatprep.subr.bf16.mxu0 0
        %2882 = vmatpush1.bf16.msra.mxu0 0
        %2883 = vmatprep.subr.bf16.mxu0 0
        %2884 = vmatpush1.bf16.msra.mxu0 0
        %2885 = vmatprep.subr.bf16.mxu0 0
        %2886 = vmatpush1.bf16.msra.mxu0 0
        %2887 = vmatprep.subr.bf16.mxu0 0
        %2888 = vmatpush1.bf16.msra.mxu0 0
        %2889 = vmatprep.subr.bf16.mxu0 0
        %2890 = vmatpush1.bf16.msra.mxu0 0
        %2891 = vmatprep.subr.bf16.mxu0 0
        %2892 = vmatpush1.bf16.msra.mxu0 0
        %2893 = vmatprep.subr.bf16.mxu0 0
        %2894 = vmatpush1.bf16.msra.mxu0 0
        %2895 = vmatprep.subr.bf16.mxu0 0
        %2896 = vmatpush1.bf16.msra.mxu0 0
        %2897 = vmatprep.mubr.bf16.mxu0 0
        %2898 = vmatmul.mubr.bf16.gmra.mrb[0].mxu0 %v2854
        %v2899 = vpop.f32.mrb[0].mxu0
        %v2900 = vadd.f32 %v2817, %v2899
        %v2901 = vpop.f32.mrb[0].mxu0
        %v2902 = vpop.f32.mrb[0].mxu0
        %v2903 = vadd.f32 %v2820, %v2902
        %v2904 = vpop.f32.mrb[0].mxu0
        %2905 = vmatprep.mubr.bf16.mxu0 0
        %2906 = vmatmul.mubr.bf16.gmra.mrb[0].mxu0 %v2857
        %v2907 = vpop.f32.mrb[0].mxu0
        %v2908 = vadd.f32 %v2825, %v2907
        %v2909 = vpop.f32.mrb[0].mxu0
        %v2910 = vpop.f32.mrb[0].mxu0
        %v2911 = vadd.f32 %v2828, %v2910
        %v2912 = vpop.f32.mrb[0].mxu0
        %2913 = vmatprep.mubr.bf16.mxu0 0
        %2914 = vmatmul.mubr.bf16.gmra.mrb[0].mxu0 %v2860
        %v2915 = vpop.f32.mrb[0].mxu0
        %v2916 = vadd.f32 %v2833, %v2915
        %v2917 = vpop.f32.mrb[0].mxu0
        %v2918 = vpop.f32.mrb[0].mxu0
        %v2919 = vadd.f32 %v2836, %v2918
        %v2920 = vpop.f32.mrb[0].mxu0
        %2921 = vmatprep.mubr.bf16.mxu0 0
        %2922 = vmatmul.mubr.bf16.gmra.mrb[0].mxu0 %v2863
        %v2923 = vpop.f32.mrb[0].mxu0
        %v2924 = vadd.f32 %v2841, %v2923
        %v2925 = vpop.f32.mrb[0].mxu0
        %v2926 = vpop.f32.mrb[0].mxu0
        %v2927 = vadd.f32 %v2844, %v2926
        %v2928 = vpop.f32.mrb[0].mxu0
        %2929 = vdwg.mxu0
        %v2930 = vld [vmem:[#allocation3 + $0x9] sm:$0xff]
        %v2931 = vld [vmem:[#allocation3 + $0x11] sm:$0xff]
        %v2932 = vld [vmem:[#allocation3 + $0x19] sm:$0xff]
        %v2933 = vld [vmem:[#allocation3 + $0x21] sm:$0xff]
        %v2934 = vld [vmem:[#allocation3 + $0x29] sm:$0xff]
        %v2935 = vld [vmem:[#allocation3 + $0x31] sm:$0xff]
        %v2936 = vld [vmem:[#allocation3 + $0x39] sm:$0xff]
        %v2937 = vld [vmem:[#allocation3 + $0x41] sm:$0xf]
        %v2938 = vpack.c.bf16 %v2931, %v2930
        %v2939 = vpack.c.bf16 %v2933, %v2932
        %v2940 = vpack.c.bf16 %v2935, %v2934
        %v2941 = vpack.c.bf16 %v2937, %v2936
        %s2942 = scalar_lea.vmem %s2, 16
        %v2943 = vld [vmem:[%s2942] sm:$0xf]
        %v2944 = vld [vmem:[%s2942 + $0x4] sm:$0xf]
        %v2947 = vunpack.c.l.b16 %v2943
        %v2948 = vunpack.c.l.b16 %v2944
        %v2949 = vpack.c.b16 %v2948, %v2947
        %v2952 = vsel %vm2643, %v2938, 0
        %v2955 = vsel %vm2643, %v2939, 0
        %v2958 = vsel %vm2643, %v2940, 0
        %v2961 = vsel %vm2643, %v2941, 0
        %2963 = vmatprep.subr.bf16.mxu0 0
        %2964 = vmatpush1.bf16.msra.mxu0 %v2949
        %2965 = vmatprep.subr.bf16.mxu0 0
        %2966 = vmatpush1.bf16.msra.mxu0 0
        %2967 = vmatprep.subr.bf16.mxu0 0
        %2968 = vmatpush1.bf16.msra.mxu0 0
        %2969 = vmatprep.subr.bf16.mxu0 0
        %2970 = vmatpush1.bf16.msra.mxu0 0
        %2971 = vmatprep.subr.bf16.mxu0 0
        %2972 = vmatpush1.bf16.msra.mxu0 0
        %2973 = vmatprep.subr.bf16.mxu0 0
        %2974 = vmatpush1.bf16.msra.mxu0 0
        %2975 = vmatprep.subr.bf16.mxu0 0
        %2976 = vmatpush1.bf16.msra.mxu0 0
        %2977 = vmatprep.subr.bf16.mxu0 0
        %2978 = vmatpush1.bf16.msra.mxu0 0
        %2979 = vmatprep.subr.bf16.mxu0 0
        %2980 = vmatpush1.bf16.msra.mxu0 0
        %2981 = vmatprep.subr.bf16.mxu0 0
        %2982 = vmatpush1.bf16.msra.mxu0 0
        %2983 = vmatprep.subr.bf16.mxu0 0
        %2984 = vmatpush1.bf16.msra.mxu0 0
        %2985 = vmatprep.subr.bf16.mxu0 0
        %2986 = vmatpush1.bf16.msra.mxu0 0
        %2987 = vmatprep.subr.bf16.mxu0 0
        %2988 = vmatpush1.bf16.msra.mxu0 0
        %2989 = vmatprep.subr.bf16.mxu0 0
        %2990 = vmatpush1.bf16.msra.mxu0 0
        %2991 = vmatprep.subr.bf16.mxu0 0
        %2992 = vmatpush1.bf16.msra.mxu0 0
        %2993 = vmatprep.subr.bf16.mxu0 0
        %2994 = vmatpush1.bf16.msra.mxu0 0
        %2995 = vmatprep.mubr.bf16.mxu0 0
        %2996 = vmatmul.mubr.bf16.gmra.mrb[0].mxu0 %v2952
        %v2997 = vpop.f32.mrb[0].mxu0
        %v2998 = vadd.f32 0.0, %v2997
        %v2999 = vpop.f32.mrb[0].mxu0
        %v3000 = vpop.f32.mrb[0].mxu0
        %v3001 = vadd.f32 0.0, %v3000
        %v3002 = vpop.f32.mrb[0].mxu0
        %3003 = vmatprep.mubr.bf16.mxu0 0
        %3004 = vmatmul.mubr.bf16.gmra.mrb[0].mxu0 %v2955
        %v3005 = vpop.f32.mrb[0].mxu0
        %v3006 = vadd.f32 0.0, %v3005
        %v3007 = vpop.f32.mrb[0].mxu0
        %v3008 = vpop.f32.mrb[0].mxu0
        %v3009 = vadd.f32 0.0, %v3008
        %v3010 = vpop.f32.mrb[0].mxu0
        %3011 = vmatprep.mubr.bf16.mxu0 0
        %3012 = vmatmul.mubr.bf16.gmra.mrb[0].mxu0 %v2958
        %v3013 = vpop.f32.mrb[0].mxu0
        %v3014 = vadd.f32 0.0, %v3013
        %v3015 = vpop.f32.mrb[0].mxu0
        %v3016 = vpop.f32.mrb[0].mxu0
        %v3017 = vadd.f32 0.0, %v3016
        %v3018 = vpop.f32.mrb[0].mxu0
        %3019 = vmatprep.mubr.bf16.mxu0 0
        %3020 = vmatmul.mubr.bf16.gmra.mrb[0].mxu0 %v2961
        %v3021 = vpop.f32.mrb[0].mxu0
        %v3022 = vadd.f32 0.0, %v3021
        %v3023 = vpop.f32.mrb[0].mxu0
        %v3024 = vpop.f32.mrb[0].mxu0
        %v3025 = vadd.f32 0.0, %v3024
        %v3026 = vpop.f32.mrb[0].mxu0
        %3027 = vdwg.mxu0
        %v3028 = vadd.f32 %v2900, %v2998
        %v3029 = vadd.f32 %v2903, %v3001
        %v3030 = vadd.f32 %v2908, %v3006
        %v3031 = vadd.f32 %v2911, %v3009
        %v3032 = vadd.f32 %v2916, %v3014
        %v3033 = vadd.f32 %v2919, %v3017
        %v3034 = vadd.f32 %v2924, %v3022
        %v3035 = vadd.f32 %v2927, %v3025
        %v3036 = vld [vmem:[%s8] sm:$0x1]
        %v3038 = vlaneseq
        %v3039 = vshrl.u32 %v3038, 7
        %v3040 = vsub.s32 0, %v3039
        %v3041 = vrot.slane %v3036, %v3040
        %v3043 = vmul.f32 %v3028, %v3041
        %v3044 = vmul.f32 %v3029, %v3041
        %v3045 = vmul.f32 %v3030, %v3041
        %v3046 = vmul.f32 %v3031, %v3041
        %v3047 = vmul.f32 %v3032, %v3041
        %v3048 = vmul.f32 %v3033, %v3041
        %v3049 = vmul.f32 %v3034, %v3041
        %v3050 = vmul.f32 %v3035, %v3041
        %v3051 = vld [vmem:[%s9] sm:$0x1]
        %v3053 = vlaneseq
        %v3054 = vshrl.u32 %v3053, 7
        %v3055 = vsub.s32 0, %v3054
        %v3056 = vrot.slane %v3051, %v3055
        %v3058 = vadd.f32 %v3043, %v3056
        %v3059 = vadd.f32 %v3044, %v3056
        %v3060 = vadd.f32 %v3045, %v3056
        %v3061 = vadd.f32 %v3046, %v3056
        %v3062 = vadd.f32 %v3047, %v3056
        %v3063 = vadd.f32 %v3048, %v3056
        %v3064 = vadd.f32 %v3049, %v3056
        %v3065 = vadd.f32 %v3050, %v3056
        %v3066 = vmax.f32 %v3058, 0.0
        %v3067 = vmax.f32 %v3059, 0.0
        %v3068 = vmax.f32 %v3060, 0.0
        %v3069 = vmax.f32 %v3061, 0.0
        %v3070 = vmax.f32 %v3062, 0.0
        %v3071 = vmax.f32 %v3063, 0.0
        %v3072 = vmax.f32 %v3064, 0.0
        %v3073 = vmax.f32 %v3065, 0.0
        %vm3074 = vcmask 261120
        %3075 = vst.msk [vmem:[#allocation4] sm:$0xff] %vm3074, %v3066
        %3076 = vst.msk [vmem:[#allocation4 + $0x8] sm:$0xff] %vm3074, %v3067
        %3077 = vst.msk [vmem:[#allocation4 + $0x10] sm:$0xff] %vm3074, %v3068
        %3078 = vst.msk [vmem:[#allocation4 + $0x18] sm:$0xff] %vm3074, %v3069
        %3079 = vst.msk [vmem:[#allocation4 + $0x20] sm:$0xff] %vm3074, %v3070
        %3080 = vst.msk [vmem:[#allocation4 + $0x28] sm:$0xff] %vm3074, %v3071
        %3081 = vst.msk [vmem:[#allocation4 + $0x30] sm:$0xff] %vm3074, %v3072
        %vm3082 = vcmask 257024
        %3083 = vst.msk [vmem:[#allocation4 + $0x38] sm:$0xf] %vm3082, %v3073
        %v3084 = vld [vmem:[#allocation4] ss:$2 sm:$0xff]
        %s3085 = scalar_lea.vmem [#allocation4], 16
        %v3086 = vld [vmem:[%s3085] ss:$2 sm:$0xff]
        %s3087 = scalar_lea.vmem [#allocation4], 32
        %v3088 = vld [vmem:[%s3087] ss:$2 sm:$0xff]
        %s3089 = scalar_lea.vmem [#allocation4], 48
        %v3090 = vld [vmem:[%s3089] ss:$2 sm:$0x3f]
        %s3091 = scalar_lea.vmem [#allocation4], 1
        %v3092 = vld [vmem:[%s3091] ss:$2 sm:$0xff]
        %s3093 = scalar_lea.vmem [#allocation4], 17
        %v3094 = vld [vmem:[%s3093] ss:$2 sm:$0xff]
        %s3095 = scalar_lea.vmem [#allocation4], 33
        %v3096 = vld [vmem:[%s3095] ss:$2 sm:$0xff]
        %s3097 = scalar_lea.vmem [#allocation4], 49
        %v3098 = vld [vmem:[%s3097] ss:$2 sm:$0x3f]
        %v3099 = vmax.f32 %v3084, %v3092
        %v3100 = vmax.f32 %v3086, %v3094
        %v3101 = vmax.f32 %v3088, %v3096
        %v3102 = vmax.f32 %v3090, %v3098
        %3103 = vst.msk [vmem:[#allocation5] sm:$0xff] %vm3074, 0.0
        %3104 = vst.msk [vmem:[#allocation5 + $0x8] sm:$0xff] %vm3074, 0.0
        %3105 = vst.msk [vmem:[#allocation5 + $0x10] sm:$0xff] %vm3074, 0.0
        %3106 = vst.msk [vmem:[#allocation5 + $0x18] sm:$0xff] %vm3074, 0.0
        %vm3107 = vcmask 260096
        %3108 = vst.msk [vmem:[#allocation5 + $0x20] sm:$0x7f] %vm3107, 0.0
        %3109 = vst.msk [vmem:[#allocation5 + $0x8] sm:$0xff] %vm3074, %v3099
        %3110 = vst.msk [vmem:[#allocation5 + $0x10] sm:$0xff] %vm3074, %v3100
        %3111 = vst.msk [vmem:[#allocation5 + $0x18] sm:$0xff] %vm3074, %v3101
        %vm3112 = vcmask 259072
        %3113 = vst.msk [vmem:[#allocation5 + $0x20] sm:$0x3f] %vm3112, %v3102
        %v3114 = vld [vmem:[#allocation5 + $0x7] sm:$0xff]
        %v3115 = vld [vmem:[#allocation5 + $0xf] sm:$0xff]
        %v3116 = vld [vmem:[#allocation5 + $0x17] sm:$0xff]
        %v3117 = vld [vmem:[#allocation5 + $0x1f] sm:$0x3f]
        %v3118 = vpack.c.bf16 %v3115, %v3114
        %v3119 = vpack.c.bf16 %v3117, %v3116
        %v3120 = vld [vmem:[#allocation13] sm:$0xf]
        %v3121 = vld [vmem:[#allocation13 + $0x4] sm:$0xf]
        %v3122 = vld [vmem:[#allocation13 + $0x8] sm:$0xf]
        %v3123 = vld [vmem:[#allocation13 + $0xc] sm:$0xf]
        %v3124 = vld [vmem:[#allocation5 + $0x8] sm:$0xff]
        %v3125 = vld [vmem:[#allocation5 + $0x10] sm:$0xff]
        %v3126 = vld [vmem:[#allocation5 + $0x18] sm:$0xff]
        %v3127 = vld [vmem:[#allocation5 + $0x20] sm:$0x3f]
        %v3128 = vpack.c.bf16 %v3125, %v3124
        %v3129 = vpack.c.bf16 %v3127, %v3126
        %s3130 = scalar_lea.vmem [#allocation13], 16
        %v3131 = vld [vmem:[%s3130] sm:$0xf]
        %v3132 = vld [vmem:[%s3130 + $0x4] sm:$0xf]
        %v3133 = vld [vmem:[%s3130 + $0x8] sm:$0xf]
        %v3134 = vld [vmem:[%s3130 + $0xc] sm:$0xf]
        %v3139 = vunpack.c.l.b16 %v3131
        %v3140 = vunpack.c.l.b16 %v3132
        %v3141 = vunpack.c.l.b16 %v3133
        %v3142 = vunpack.c.l.b16 %v3134
        %v3143 = vpack.c.b16 %v3140, %v3139
        %v3144 = vpack.c.b16 %v3142, %v3141
        %v3148 = vsel %vm3074, %v3128, 0
        %v3151 = vsel %vm3074, %v3129, 0
        %3153 = vmatprep.subr.bf16.mxu0 0
        %3154 = vmatpush1.bf16.msra.mxu0 %v3143
        %3155 = vmatprep.subr.bf16.mxu0 0
        %3156 = vmatpush1.bf16.msra.mxu0 %v3144
        %3157 = vmatprep.subr.bf16.mxu0 0
        %3158 = vmatpush1.bf16.msra.mxu0 0
        %3159 = vmatprep.subr.bf16.mxu0 0
        %3160 = vmatpush1.bf16.msra.mxu0 0
        %3161 = vmatprep.subr.bf16.mxu0 0
        %3162 = vmatpush1.bf16.msra.mxu0 0
        %3163 = vmatprep.subr.bf16.mxu0 0
        %3164 = vmatpush1.bf16.msra.mxu0 0
        %3165 = vmatprep.subr.bf16.mxu0 0
        %3166 = vmatpush1.bf16.msra.mxu0 0
        %3167 = vmatprep.subr.bf16.mxu0 0
        %3168 = vmatpush1.bf16.msra.mxu0 0
        %3169 = vmatprep.subr.bf16.mxu0 0
        %3170 = vmatpush1.bf16.msra.mxu0 0
        %3171 = vmatprep.subr.bf16.mxu0 0
        %3172 = vmatpush1.bf16.msra.mxu0 0
        %3173 = vmatprep.subr.bf16.mxu0 0
        %3174 = vmatpush1.bf16.msra.mxu0 0
        %3175 = vmatprep.subr.bf16.mxu0 0
        %3176 = vmatpush1.bf16.msra.mxu0 0
        %3177 = vmatprep.subr.bf16.mxu0 0
        %3178 = vmatpush1.bf16.msra.mxu0 0
        %3179 = vmatprep.subr.bf16.mxu0 0
        %3180 = vmatpush1.bf16.msra.mxu0 0
        %3181 = vmatprep.subr.bf16.mxu0 0
        %3182 = vmatpush1.bf16.msra.mxu0 0
        %3183 = vmatprep.subr.bf16.mxu0 0
        %3184 = vmatpush1.bf16.msra.mxu0 0
        %3185 = vmatprep.mubr.bf16.mxu0 0
        %3186 = vmatmul.mubr.bf16.gmra.mrb[0].mxu0 %v3148
        %v3187 = vpop.f32.mrb[0].mxu0
        %v3188 = vadd.f32 0.0, %v3187
        %v3189 = vpop.f32.mrb[0].mxu0
        %v3190 = vpop.f32.mrb[0].mxu0
        %v3191 = vadd.f32 0.0, %v3190
        %v3192 = vpop.f32.mrb[0].mxu0
        %3193 = vmatprep.mubr.bf16.mxu0 0
        %3194 = vmatmul.mubr.bf16.gmra.mrb[0].mxu0 %v3151
        %v3195 = vpop.f32.mrb[0].mxu0
        %v3196 = vadd.f32 0.0, %v3195
        %v3197 = vpop.f32.mrb[0].mxu0
        %v3198 = vpop.f32.mrb[0].mxu0
        %v3199 = vadd.f32 0.0, %v3198
        %v3200 = vpop.f32.mrb[0].mxu0
        %3201 = vdwg.mxu0
        %v3206 = vunpack.c.l.b16 %v3120
        %v3207 = vunpack.c.l.b16 %v3121
        %v3208 = vunpack.c.l.b16 %v3122
        %v3209 = vunpack.c.l.b16 %v3123
        %v3210 = vpack.c.b16 %v3207, %v3206
        %v3211 = vpack.c.b16 %v3209, %v3208
        %v3215 = vsel %vm3074, %v3118, 0
        %v3218 = vsel %vm3074, %v3119, 0
        %3220 = vmatprep.subr.bf16.mxu0 0
        %3221 = vmatpush1.bf16.msra.mxu0 %v3210
        %3222 = vmatprep.subr.bf16.mxu0 0
        %3223 = vmatpush1.bf16.msra.mxu0 %v3211
        %3224 = vmatprep.subr.bf16.mxu0 0
        %3225 = vmatpush1.bf16.msra.mxu0 0
        %3226 = vmatprep.subr.bf16.mxu0 0
        %3227 = vmatpush1.bf16.msra.mxu0 0
        %3228 = vmatprep.subr.bf16.mxu0 0
        %3229 = vmatpush1.bf16.msra.mxu0 0
        %3230 = vmatprep.subr.bf16.mxu0 0
        %3231 = vmatpush1.bf16.msra.mxu0 0
        %3232 = vmatprep.subr.bf16.mxu0 0
        %3233 = vmatpush1.bf16.msra.mxu0 0
        %3234 = vmatprep.subr.bf16.mxu0 0
        %3235 = vmatpush1.bf16.msra.mxu0 0
        %3236 = vmatprep.subr.bf16.mxu0 0
        %3237 = vmatpush1.bf16.msra.mxu0 0
        %3238 = vmatprep.subr.bf16.mxu0 0
        %3239 = vmatpush1.bf16.msra.mxu0 0
        %3240 = vmatprep.subr.bf16.mxu0 0
        %3241 = vmatpush1.bf16.msra.mxu0 0
        %3242 = vmatprep.subr.bf16.mxu0 0
        %3243 = vmatpush1.bf16.msra.mxu0 0
        %3244 = vmatprep.subr.bf16.mxu0 0
        %3245 = vmatpush1.bf16.msra.mxu0 0
        %3246 = vmatprep.subr.bf16.mxu0 0
        %3247 = vmatpush1.bf16.msra.mxu0 0
        %3248 = vmatprep.subr.bf16.mxu0 0
        %3249 = vmatpush1.bf16.msra.mxu0 0
        %3250 = vmatprep.subr.bf16.mxu0 0
        %3251 = vmatpush1.bf16.msra.mxu0 0
        %3252 = vmatprep.mubr.bf16.mxu0 0
        %3253 = vmatmul.mubr.bf16.gmra.mrb[0].mxu0 %v3215
        %v3254 = vpop.f32.mrb[0].mxu0
        %v3255 = vadd.f32 %v3188, %v3254
        %v3256 = vpop.f32.mrb[0].mxu0
        %v3257 = vpop.f32.mrb[0].mxu0
        %v3258 = vadd.f32 %v3191, %v3257
        %v3259 = vpop.f32.mrb[0].mxu0
        %3260 = vmatprep.mubr.bf16.mxu0 0
        %3261 = vmatmul.mubr.bf16.gmra.mrb[0].mxu0 %v3218
        %v3262 = vpop.f32.mrb[0].mxu0
        %v3263 = vadd.f32 %v3196, %v3262
        %v3264 = vpop.f32.mrb[0].mxu0
        %v3265 = vpop.f32.mrb[0].mxu0
        %v3266 = vadd.f32 %v3199, %v3265
        %v3267 = vpop.f32.mrb[0].mxu0
        %3268 = vdwg.mxu0
        %v3269 = vld [vmem:[#allocation5 + $0x9] sm:$0xff]
        %v3270 = vld [vmem:[#allocation5 + $0x11] sm:$0xff]
        %v3271 = vld [vmem:[#allocation5 + $0x19] sm:$0xff]
        %v3272 = vld [vmem:[#allocation5 + $0x21] sm:$0x3f]
        %v3273 = vpack.c.bf16 %v3270, %v3269
        %v3274 = vpack.c.bf16 %v3272, %v3271
        %s3275 = scalar_lea.vmem [#allocation13], 32
        %v3276 = vld [vmem:[%s3275] sm:$0xf]
        %v3277 = vld [vmem:[%s3275 + $0x4] sm:$0xf]
        %v3278 = vld [vmem:[%s3275 + $0x8] sm:$0xf]
        %v3279 = vld [vmem:[%s3275 + $0xc] sm:$0xf]
        %v3284 = vunpack.c.l.b16 %v3276
        %v3285 = vunpack.c.l.b16 %v3277
        %v3286 = vunpack.c.l.b16 %v3278
        %v3287 = vunpack.c.l.b16 %v3279
        %v3288 = vpack.c.b16 %v3285, %v3284
        %v3289 = vpack.c.b16 %v3287, %v3286
        %v3293 = vsel %vm3074, %v3273, 0
        %v3296 = vsel %vm3074, %v3274, 0
        %3298 = vmatprep.subr.bf16.mxu0 0
        %3299 = vmatpush1.bf16.msra.mxu0 %v3288
        %3300 = vmatprep.subr.bf16.mxu0 0
        %3301 = vmatpush1.bf16.msra.mxu0 %v3289
        %3302 = vmatprep.subr.bf16.mxu0 0
        %3303 = vmatpush1.bf16.msra.mxu0 0
        %3304 = vmatprep.subr.bf16.mxu0 0
        %3305 = vmatpush1.bf16.msra.mxu0 0
        %3306 = vmatprep.subr.bf16.mxu0 0
        %3307 = vmatpush1.bf16.msra.mxu0 0
        %3308 = vmatprep.subr.bf16.mxu0 0
        %3309 = vmatpush1.bf16.msra.mxu0 0
        %3310 = vmatprep.subr.bf16.mxu0 0
        %3311 = vmatpush1.bf16.msra.mxu0 0
        %3312 = vmatprep.subr.bf16.mxu0 0
        %3313 = vmatpush1.bf16.msra.mxu0 0
        %3314 = vmatprep.subr.bf16.mxu0 0
        %3315 = vmatpush1.bf16.msra.mxu0 0
        %3316 = vmatprep.subr.bf16.mxu0 0
        %3317 = vmatpush1.bf16.msra.mxu0 0
        %3318 = vmatprep.subr.bf16.mxu0 0
        %3319 = vmatpush1.bf16.msra.mxu0 0
        %3320 = vmatprep.subr.bf16.mxu0 0
        %3321 = vmatpush1.bf16.msra.mxu0 0
        %3322 = vmatprep.subr.bf16.mxu0 0
        %3323 = vmatpush1.bf16.msra.mxu0 0
        %3324 = vmatprep.subr.bf16.mxu0 0
        %3325 = vmatpush1.bf16.msra.mxu0 0
        %3326 = vmatprep.subr.bf16.mxu0 0
        %3327 = vmatpush1.bf16.msra.mxu0 0
        %3328 = vmatprep.subr.bf16.mxu0 0
        %3329 = vmatpush1.bf16.msra.mxu0 0
        %3330 = vmatprep.mubr.bf16.mxu0 0
        %3331 = vmatmul.mubr.bf16.gmra.mrb[0].mxu0 %v3293
        %v3332 = vpop.f32.mrb[0].mxu0
        %v3333 = vadd.f32 0.0, %v3332
        %v3334 = vpop.f32.mrb[0].mxu0
        %v3335 = vpop.f32.mrb[0].mxu0
        %v3336 = vadd.f32 0.0, %v3335
        %v3337 = vpop.f32.mrb[0].mxu0
        %3338 = vmatprep.mubr.bf16.mxu0 0
        %3339 = vmatmul.mubr.bf16.gmra.mrb[0].mxu0 %v3296
        %v3340 = vpop.f32.mrb[0].mxu0
        %v3341 = vadd.f32 0.0, %v3340
        %v3342 = vpop.f32.mrb[0].mxu0
        %v3343 = vpop.f32.mrb[0].mxu0
        %v3344 = vadd.f32 0.0, %v3343
        %v3345 = vpop.f32.mrb[0].mxu0
        %3346 = vdwg.mxu0
        %v3347 = vadd.f32 %v3255, %v3333
        %v3348 = vadd.f32 %v3258, %v3336
        %v3349 = vadd.f32 %v3263, %v3341
        %v3350 = vadd.f32 %v3266, %v3344
        %v3351 = vld [vmem:[%s10] sm:$0x1]
        %v3353 = vlaneseq
        %v3354 = vshrl.u32 %v3353, 7
        %v3355 = vsub.s32 0, %v3354
        %v3356 = vrot.slane %v3351, %v3355
        %v3358 = vmul.f32 %v3347, %v3356
        %v3359 = vmul.f32 %v3348, %v3356
        %v3360 = vmul.f32 %v3349, %v3356
        %v3361 = vmul.f32 %v3350, %v3356
        %v3362 = vld [vmem:[%s11] sm:$0x1]
        %v3364 = vlaneseq
        %v3365 = vshrl.u32 %v3364, 7
        %v3366 = vsub.s32 0, %v3365
        %v3367 = vrot.slane %v3362, %v3366
        %v3369 = vadd.f32 %v3358, %v3367
        %v3370 = vadd.f32 %v3359, %v3367
        %v3371 = vadd.f32 %v3360, %v3367
        %v3372 = vadd.f32 %v3361, %v3367
        %v3373 = vmax.f32 %v3369, 0.0
        %v3374 = vmax.f32 %v3370, 0.0
        %v3375 = vmax.f32 %v3371, 0.0
        %v3376 = vmax.f32 %v3372, 0.0
        %vm3377 = vcmask 523264
        %3378 = vst.msk [vmem:[#allocation6] sm:$0xff] %vm3377, %v3373
        %3379 = vst.msk [vmem:[#allocation6 + $0x8] sm:$0xff] %vm3377, %v3374
        %3380 = vst.msk [vmem:[#allocation6 + $0x10] sm:$0xff] %vm3377, %v3375
        %vm3381 = vcmask 521216
        %3382 = vst.msk [vmem:[#allocation6 + $0x18] sm:$0x3f] %vm3381, %v3376
        %v3383 = vld [vmem:[#allocation6] ss:$2 sm:$0xff]
        %s3384 = scalar_lea.vmem [#allocation6], 16
        %v3385 = vld [vmem:[%s3384] ss:$2 sm:$0x7f]
        %s3386 = scalar_lea.vmem [#allocation6], 1
        %v3387 = vld [vmem:[%s3386] ss:$2 sm:$0xff]
        %s3388 = scalar_lea.vmem [#allocation6], 17
        %v3389 = vld [vmem:[%s3388] ss:$2 sm:$0x7f]
        %v3390 = vmax.f32 %v3383, %v3387
        %v3391 = vmax.f32 %v3385, %v3389
        %3392 = vst.msk [vmem:[#allocation7] sm:$0xff] %vm3377, 0.0
        %3393 = vst.msk [vmem:[#allocation7 + $0x8] sm:$0xff] %vm3377, 0.0
        %3394 = vst.msk [vmem:[#allocation7 + $0x10] sm:$0xff] %vm3377, 0.0
        %3395 = vst.msk [vmem:[#allocation7 + $0x8] sm:$0xff] %vm3377, %v3390
        %vm3396 = vcmask 522240
        %3397 = vst.msk [vmem:[#allocation7 + $0x10] sm:$0x7f] %vm3396, %v3391
        %v3398 = vld [vmem:[#allocation7 + $0x7] sm:$0xff]
        %v3399 = vld [vmem:[#allocation7 + $0xf] sm:$0x7f]
        %v3400 = vpack.c.bf16 %v3399, %v3398
        %v3401 = vld [vmem:[%s4] sm:$0xf]
        %v3402 = vld [vmem:[%s4 + $0x4] sm:$0xf]
        %v3403 = vld [vmem:[%s4 + $0x8] sm:$0xf]
        %v3404 = vld [vmem:[%s4 + $0xc] sm:$0xf]
        %v3405 = vld [vmem:[%s4 + $0x10] sm:$0xf]
        %v3406 = vld [vmem:[%s4 + $0x14] sm:$0xf]
        %v3407 = vld [vmem:[%s4 + $0x18] sm:$0xf]
        %v3408 = vld [vmem:[%s4 + $0x1c] sm:$0xf]
        %v3409 = vld [vmem:[#allocation7 + $0x8] sm:$0xff]
        %v3410 = vld [vmem:[#allocation7 + $0x10] sm:$0x7f]
        %v3411 = vpack.c.bf16 %v3410, %v3409
        %s3412 = scalar_lea.vmem %s4, 32
        %v3413 = vld [vmem:[%s3412] sm:$0xf]
        %v3414 = vld [vmem:[%s3412 + $0x4] sm:$0xf]
        %v3415 = vld [vmem:[%s3412 + $0x8] sm:$0xf]
        %v3416 = vld [vmem:[%s3412 + $0xc] sm:$0xf]
        %v3417 = vld [vmem:[%s3412 + $0x10] sm:$0xf]
        %v3418 = vld [vmem:[%s3412 + $0x14] sm:$0xf]
        %v3419 = vld [vmem:[%s3412 + $0x18] sm:$0xf]
        %v3420 = vld [vmem:[%s3412 + $0x1c] sm:$0xf]
        %v3429 = vunpack.c.l.b16 %v3413
        %v3430 = vunpack.c.l.b16 %v3414
        %v3431 = vunpack.c.l.b16 %v3415
        %v3432 = vunpack.c.l.b16 %v3416
        %v3433 = vunpack.c.l.b16 %v3417
        %v3434 = vunpack.c.l.b16 %v3418
        %v3435 = vunpack.c.l.b16 %v3419
        %v3436 = vunpack.c.l.b16 %v3420
        %v3437 = vpack.c.b16 %v3430, %v3429
        %v3438 = vpack.c.b16 %v3432, %v3431
        %v3439 = vpack.c.b16 %v3434, %v3433
        %v3440 = vpack.c.b16 %v3436, %v3435
        %v3446 = vsel %vm3377, %v3411, 0
        %3448 = vmatprep.subr.bf16.mxu0 0
        %3449 = vmatpush1.bf16.msra.mxu0 %v3437
        %3450 = vmatprep.subr.bf16.mxu0 0
        %3451 = vmatpush1.bf16.msra.mxu0 %v3438
        %3452 = vmatprep.subr.bf16.mxu0 0
        %3453 = vmatpush1.bf16.msra.mxu0 %v3439
        %3454 = vmatprep.subr.bf16.mxu0 0
        %3455 = vmatpush1.bf16.msra.mxu0 %v3440
        %3456 = vmatprep.subr.bf16.mxu0 0
        %3457 = vmatpush1.bf16.msra.mxu0 0
        %3458 = vmatprep.subr.bf16.mxu0 0
        %3459 = vmatpush1.bf16.msra.mxu0 0
        %3460 = vmatprep.subr.bf16.mxu0 0
        %3461 = vmatpush1.bf16.msra.mxu0 0
        %3462 = vmatprep.subr.bf16.mxu0 0
        %3463 = vmatpush1.bf16.msra.mxu0 0
        %3464 = vmatprep.subr.bf16.mxu0 0
        %3465 = vmatpush1.bf16.msra.mxu0 0
        %3466 = vmatprep.subr.bf16.mxu0 0
        %3467 = vmatpush1.bf16.msra.mxu0 0
        %3468 = vmatprep.subr.bf16.mxu0 0
        %3469 = vmatpush1.bf16.msra.mxu0 0
        %3470 = vmatprep.subr.bf16.mxu0 0
        %3471 = vmatpush1.bf16.msra.mxu0 0
        %3472 = vmatprep.subr.bf16.mxu0 0
        %3473 = vmatpush1.bf16.msra.mxu0 0
        %3474 = vmatprep.subr.bf16.mxu0 0
        %3475 = vmatpush1.bf16.msra.mxu0 0
        %3476 = vmatprep.subr.bf16.mxu0 0
        %3477 = vmatpush1.bf16.msra.mxu0 0
        %3478 = vmatprep.subr.bf16.mxu0 0
        %3479 = vmatpush1.bf16.msra.mxu0 0
        %3480 = vmatprep.mubr.bf16.mxu0 0
        %3481 = vmatmul.mubr.bf16.gmra.mrb[0].mxu0 %v3446
        %v3482 = vpop.f32.mrb[0].mxu0
        %v3483 = vadd.f32 0.0, %v3482
        %v3484 = vpop.f32.mrb[0].mxu0
        %v3485 = vpop.f32.mrb[0].mxu0
        %v3486 = vadd.f32 0.0, %v3485
        %v3487 = vpop.f32.mrb[0].mxu0
        %3488 = vdwg.mxu0
        %v3497 = vunpack.c.l.b16 %v3401
        %v3498 = vunpack.c.l.b16 %v3402
        %v3499 = vunpack.c.l.b16 %v3403
        %v3500 = vunpack.c.l.b16 %v3404
        %v3501 = vunpack.c.l.b16 %v3405
        %v3502 = vunpack.c.l.b16 %v3406
        %v3503 = vunpack.c.l.b16 %v3407
        %v3504 = vunpack.c.l.b16 %v3408
        %v3505 = vpack.c.b16 %v3498, %v3497
        %v3506 = vpack.c.b16 %v3500, %v3499
        %v3507 = vpack.c.b16 %v3502, %v3501
        %v3508 = vpack.c.b16 %v3504, %v3503
        %v3514 = vsel %vm3377, %v3400, 0
        %3516 = vmatprep.subr.bf16.mxu0 0
        %3517 = vmatpush1.bf16.msra.mxu0 %v3505
        %3518 = vmatprep.subr.bf16.mxu0 0
        %3519 = vmatpush1.bf16.msra.mxu0 %v3506
        %3520 = vmatprep.subr.bf16.mxu0 0
        %3521 = vmatpush1.bf16.msra.mxu0 %v3507
        %3522 = vmatprep.subr.bf16.mxu0 0
        %3523 = vmatpush1.bf16.msra.mxu0 %v3508
        %3524 = vmatprep.subr.bf16.mxu0 0
        %3525 = vmatpush1.bf16.msra.mxu0 0
        %3526 = vmatprep.subr.bf16.mxu0 0
        %3527 = vmatpush1.bf16.msra.mxu0 0
        %3528 = vmatprep.subr.bf16.mxu0 0
        %3529 = vmatpush1.bf16.msra.mxu0 0
        %3530 = vmatprep.subr.bf16.mxu0 0
        %3531 = vmatpush1.bf16.msra.mxu0 0
        %3532 = vmatprep.subr.bf16.mxu0 0
        %3533 = vmatpush1.bf16.msra.mxu0 0
        %3534 = vmatprep.subr.bf16.mxu0 0
        %3535 = vmatpush1.bf16.msra.mxu0 0
        %3536 = vmatprep.subr.bf16.mxu0 0
        %3537 = vmatpush1.bf16.msra.mxu0 0
        %3538 = vmatprep.subr.bf16.mxu0 0
        %3539 = vmatpush1.bf16.msra.mxu0 0
        %3540 = vmatprep.subr.bf16.mxu0 0
        %3541 = vmatpush1.bf16.msra.mxu0 0
        %3542 = vmatprep.subr.bf16.mxu0 0
        %3543 = vmatpush1.bf16.msra.mxu0 0
        %3544 = vmatprep.subr.bf16.mxu0 0
        %3545 = vmatpush1.bf16.msra.mxu0 0
        %3546 = vmatprep.subr.bf16.mxu0 0
        %3547 = vmatpush1.bf16.msra.mxu0 0
        %3548 = vmatprep.mubr.bf16.mxu0 0
        %3549 = vmatmul.mubr.bf16.gmra.mrb[0].mxu0 %v3514
        %v3550 = vpop.f32.mrb[0].mxu0
        %v3551 = vadd.f32 %v3483, %v3550
        %v3552 = vpop.f32.mrb[0].mxu0
        %v3553 = vpop.f32.mrb[0].mxu0
        %v3554 = vadd.f32 %v3486, %v3553
        %v3555 = vpop.f32.mrb[0].mxu0
        %3556 = vdwg.mxu0
        %v3557 = vld [vmem:[#allocation7 + $0x9] sm:$0xff]
        %v3558 = vld [vmem:[#allocation7 + $0x11] sm:$0x7f]
        %v3559 = vpack.c.bf16 %v3558, %v3557
        %s3560 = scalar_lea.vmem %s4, 64
        %v3561 = vld [vmem:[%s3560] sm:$0xf]
        %v3562 = vld [vmem:[%s3560 + $0x4] sm:$0xf]
        %v3563 = vld [vmem:[%s3560 + $0x8] sm:$0xf]
        %v3564 = vld [vmem:[%s3560 + $0xc] sm:$0xf]
        %v3565 = vld [vmem:[%s3560 + $0x10] sm:$0xf]
        %v3566 = vld [vmem:[%s3560 + $0x14] sm:$0xf]
        %v3567 = vld [vmem:[%s3560 + $0x18] sm:$0xf]
        %v3568 = vld [vmem:[%s3560 + $0x1c] sm:$0xf]
        %v3577 = vunpack.c.l.b16 %v3561
        %v3578 = vunpack.c.l.b16 %v3562
        %v3579 = vunpack.c.l.b16 %v3563
        %v3580 = vunpack.c.l.b16 %v3564
        %v3581 = vunpack.c.l.b16 %v3565
        %v3582 = vunpack.c.l.b16 %v3566
        %v3583 = vunpack.c.l.b16 %v3567
        %v3584 = vunpack.c.l.b16 %v3568
        %v3585 = vpack.c.b16 %v3578, %v3577
        %v3586 = vpack.c.b16 %v3580, %v3579
        %v3587 = vpack.c.b16 %v3582, %v3581
        %v3588 = vpack.c.b16 %v3584, %v3583
        %v3594 = vsel %vm3377, %v3559, 0
        %3596 = vmatprep.subr.bf16.mxu0 0
        %3597 = vmatpush1.bf16.msra.mxu0 %v3585
        %3598 = vmatprep.subr.bf16.mxu0 0
        %3599 = vmatpush1.bf16.msra.mxu0 %v3586
        %3600 = vmatprep.subr.bf16.mxu0 0
        %3601 = vmatpush1.bf16.msra.mxu0 %v3587
        %3602 = vmatprep.subr.bf16.mxu0 0
        %3603 = vmatpush1.bf16.msra.mxu0 %v3588
        %3604 = vmatprep.subr.bf16.mxu0 0
        %3605 = vmatpush1.bf16.msra.mxu0 0
        %3606 = vmatprep.subr.bf16.mxu0 0
        %3607 = vmatpush1.bf16.msra.mxu0 0
        %3608 = vmatprep.subr.bf16.mxu0 0
        %3609 = vmatpush1.bf16.msra.mxu0 0
        %3610 = vmatprep.subr.bf16.mxu0 0
        %3611 = vmatpush1.bf16.msra.mxu0 0
        %3612 = vmatprep.subr.bf16.mxu0 0
        %3613 = vmatpush1.bf16.msra.mxu0 0
        %3614 = vmatprep.subr.bf16.mxu0 0
        %3615 = vmatpush1.bf16.msra.mxu0 0
        %3616 = vmatprep.subr.bf16.mxu0 0
        %3617 = vmatpush1.bf16.msra.mxu0 0
        %3618 = vmatprep.subr.bf16.mxu0 0
        %3619 = vmatpush1.bf16.msra.mxu0 0
        %3620 = vmatprep.subr.bf16.mxu0 0
        %3621 = vmatpush1.bf16.msra.mxu0 0
        %3622 = vmatprep.subr.bf16.mxu0 0
        %3623 = vmatpush1.bf16.msra.mxu0 0
        %3624 = vmatprep.subr.bf16.mxu0 0
        %3625 = vmatpush1.bf16.msra.mxu0 0
        %3626 = vmatprep.subr.bf16.mxu0 0
        %3627 = vmatpush1.bf16.msra.mxu0 0
        %3628 = vmatprep.mubr.bf16.mxu0 0
        %3629 = vmatmul.mubr.bf16.gmra.mrb[0].mxu0 %v3594
        %v3630 = vpop.f32.mrb[0].mxu0
        %v3631 = vadd.f32 0.0, %v3630
        %v3632 = vpop.f32.mrb[0].mxu0
        %v3633 = vpop.f32.mrb[0].mxu0
        %v3634 = vadd.f32 0.0, %v3633
        %v3635 = vpop.f32.mrb[0].mxu0
        %3636 = vdwg.mxu0
        %v3637 = vadd.f32 %v3551, %v3631
        %v3638 = vadd.f32 %v3554, %v3634
        %v3639 = vld [vmem:[%s12] sm:$0x1]
        %v3641 = vlaneseq
        %v3642 = vshrl.u32 %v3641, 7
        %v3643 = vsub.s32 0, %v3642
        %v3644 = vrot.slane %v3639, %v3643
        %v3646 = vmul.f32 %v3637, %v3644
        %v3647 = vmul.f32 %v3638, %v3644
        %v3648 = vld [vmem:[%s13] sm:$0x1]
        %v3650 = vlaneseq
        %v3651 = vshrl.u32 %v3650, 7
        %v3652 = vsub.s32 0, %v3651
        %v3653 = vrot.slane %v3648, %v3652
        %v3655 = vadd.f32 %v3646, %v3653
        %v3656 = vadd.f32 %v3647, %v3653
        %v3657 = vmax.f32 %v3655, 0.0
        %v3658 = vmax.f32 %v3656, 0.0
        %3659 = vst.msk [vmem:[#allocation8] sm:$0xff] %vm3377, %v3657
        %3660 = vst.msk [vmem:[#allocation8 + $0x8] sm:$0x7f] %vm3396, %v3658
        %v3661 = vld [vmem:[#allocation8] ss:$2 sm:$0x7f]
        %s3662 = scalar_lea.vmem [#allocation8], 1
        %v3663 = vld [vmem:[%s3662] ss:$2 sm:$0x7f]
        %v3664 = vmax.f32 %v3661, %v3663
        %3665 = vst.msk [vmem:[#allocation9] sm:$0xff] %vm3377, 0.0
        %3666 = vst.msk [vmem:[#allocation9 + $0x8] sm:$0xff] %vm3377, 0.0
        %3667 = vst.msk [vmem:[#allocation9 + $0x8] sm:$0x7f] %vm3396, %v3664
        %v3668 = vld [vmem:[#allocation9 + $0x7] sm:$0x7f]
        %v3669 = vpack.c.bf16 %v3668, %v3668
        %v3670 = vld [vmem:[%s5] sm:$0xf]
        %v3671 = vld [vmem:[%s5 + $0x4] sm:$0xf]
        %v3672 = vld [vmem:[%s5 + $0x8] sm:$0xf]
        %v3673 = vld [vmem:[%s5 + $0xc] sm:$0xf]
        %v3674 = vld [vmem:[%s5 + $0x10] sm:$0xf]
        %v3675 = vld [vmem:[%s5 + $0x14] sm:$0xf]
        %v3676 = vld [vmem:[%s5 + $0x18] sm:$0xf]
        %v3677 = vld [vmem:[%s5 + $0x1c] sm:$0xf]
        %v3678 = vld [vmem:[#allocation9 + $0x8] sm:$0x7f]
        %v3679 = vpack.c.bf16 %v3678, %v3678
        %s3680 = scalar_lea.vmem %s5, 32
        %v3681 = vld [vmem:[%s3680] sm:$0xf]
        %v3682 = vld [vmem:[%s3680 + $0x4] sm:$0xf]
        %v3683 = vld [vmem:[%s3680 + $0x8] sm:$0xf]
        %v3684 = vld [vmem:[%s3680 + $0xc] sm:$0xf]
        %v3685 = vld [vmem:[%s3680 + $0x10] sm:$0xf]
        %v3686 = vld [vmem:[%s3680 + $0x14] sm:$0xf]
        %v3687 = vld [vmem:[%s3680 + $0x18] sm:$0xf]
        %v3688 = vld [vmem:[%s3680 + $0x1c] sm:$0xf]
        %v3697 = vunpack.c.l.b16 %v3681
        %v3698 = vunpack.c.l.b16 %v3682
        %v3699 = vunpack.c.l.b16 %v3683
        %v3700 = vunpack.c.l.b16 %v3684
        %v3701 = vunpack.c.l.b16 %v3685
        %v3702 = vunpack.c.l.b16 %v3686
        %v3703 = vunpack.c.l.b16 %v3687
        %v3704 = vunpack.c.l.b16 %v3688
        %v3705 = vpack.c.b16 %v3698, %v3697
        %v3706 = vpack.c.b16 %v3700, %v3699
        %v3707 = vpack.c.b16 %v3702, %v3701
        %v3708 = vpack.c.b16 %v3704, %v3703
        %v3714 = vsel %vm3377, %v3679, 0
        %3716 = vmatprep.subr.bf16.mxu0 0
        %3717 = vmatpush1.bf16.msra.mxu0 %v3705
        %3718 = vmatprep.subr.bf16.mxu0 0
        %3719 = vmatpush1.bf16.msra.mxu0 %v3706
        %3720 = vmatprep.subr.bf16.mxu0 0
        %3721 = vmatpush1.bf16.msra.mxu0 %v3707
        %3722 = vmatprep.subr.bf16.mxu0 0
        %3723 = vmatpush1.bf16.msra.mxu0 %v3708
        %3724 = vmatprep.subr.bf16.mxu0 0
        %3725 = vmatpush1.bf16.msra.mxu0 0
        %3726 = vmatprep.subr.bf16.mxu0 0
        %3727 = vmatpush1.bf16.msra.mxu0 0
        %3728 = vmatprep.subr.bf16.mxu0 0
        %3729 = vmatpush1.bf16.msra.mxu0 0
        %3730 = vmatprep.subr.bf16.mxu0 0
        %3731 = vmatpush1.bf16.msra.mxu0 0
        %3732 = vmatprep.subr.bf16.mxu0 0
        %3733 = vmatpush1.bf16.msra.mxu0 0
        %3734 = vmatprep.subr.bf16.mxu0 0
        %3735 = vmatpush1.bf16.msra.mxu0 0
        %3736 = vmatprep.subr.bf16.mxu0 0
        %3737 = vmatpush1.bf16.msra.mxu0 0
        %3738 = vmatprep.subr.bf16.mxu0 0
        %3739 = vmatpush1.bf16.msra.mxu0 0
        %3740 = vmatprep.subr.bf16.mxu0 0
        %3741 = vmatpush1.bf16.msra.mxu0 0
        %3742 = vmatprep.subr.bf16.mxu0 0
        %3743 = vmatpush1.bf16.msra.mxu0 0
        %3744 = vmatprep.subr.bf16.mxu0 0
        %3745 = vmatpush1.bf16.msra.mxu0 0
        %3746 = vmatprep.subr.bf16.mxu0 0
        %3747 = vmatpush1.bf16.msra.mxu0 0
        %3748 = vmatprep.mubr.bf16.mxu0 0
        %3749 = vmatmul.mubr.bf16.gmra.mrb[0].mxu0 %v3714
        %v3750 = vpop.f32.mrb[0].mxu0
        %v3751 = vadd.f32 0.0, %v3750
        %v3752 = vpop.f32.mrb[0].mxu0
        %v3753 = vpop.f32.mrb[0].mxu0
        %v3754 = vpop.f32.mrb[0].mxu0
        %3755 = vdwg.mxu0
        %v3764 = vunpack.c.l.b16 %v3670
        %v3765 = vunpack.c.l.b16 %v3671
        %v3766 = vunpack.c.l.b16 %v3672
        %v3767 = vunpack.c.l.b16 %v3673
        %v3768 = vunpack.c.l.b16 %v3674
        %v3769 = vunpack.c.l.b16 %v3675
        %v3770 = vunpack.c.l.b16 %v3676
        %v3771 = vunpack.c.l.b16 %v3677
        %v3772 = vpack.c.b16 %v3765, %v3764
        %v3773 = vpack.c.b16 %v3767, %v3766
        %v3774 = vpack.c.b16 %v3769, %v3768
        %v3775 = vpack.c.b16 %v3771, %v3770
        %v3781 = vsel %vm3377, %v3669, 0
        %3783 = vmatprep.subr.bf16.mxu0 0
        %3784 = vmatpush1.bf16.msra.mxu0 %v3772
        %3785 = vmatprep.subr.bf16.mxu0 0
        %3786 = vmatpush1.bf16.msra.mxu0 %v3773
        %3787 = vmatprep.subr.bf16.mxu0 0
        %3788 = vmatpush1.bf16.msra.mxu0 %v3774
        %3789 = vmatprep.subr.bf16.mxu0 0
        %3790 = vmatpush1.bf16.msra.mxu0 %v3775
        %3791 = vmatprep.subr.bf16.mxu0 0
        %3792 = vmatpush1.bf16.msra.mxu0 0
        %3793 = vmatprep.subr.bf16.mxu0 0
        %3794 = vmatpush1.bf16.msra.mxu0 0
        %3795 = vmatprep.subr.bf16.mxu0 0
        %3796 = vmatpush1.bf16.msra.mxu0 0
        %3797 = vmatprep.subr.bf16.mxu0 0
        %3798 = vmatpush1.bf16.msra.mxu0 0
        %3799 = vmatprep.subr.bf16.mxu0 0
        %3800 = vmatpush1.bf16.msra.mxu0 0
        %3801 = vmatprep.subr.bf16.mxu0 0
        %3802 = vmatpush1.bf16.msra.mxu0 0
        %3803 = vmatprep.subr.bf16.mxu0 0
        %3804 = vmatpush1.bf16.msra.mxu0 0
        %3805 = vmatprep.subr.bf16.mxu0 0
        %3806 = vmatpush1.bf16.msra.mxu0 0
        %3807 = vmatprep.subr.bf16.mxu0 0
        %3808 = vmatpush1.bf16.msra.mxu0 0
        %3809 = vmatprep.subr.bf16.mxu0 0
        %3810 = vmatpush1.bf16.msra.mxu0 0
        %3811 = vmatprep.subr.bf16.mxu0 0
        %3812 = vmatpush1.bf16.msra.mxu0 0
        %3813 = vmatprep.subr.bf16.mxu0 0
        %3814 = vmatpush1.bf16.msra.mxu0 0
        %3815 = vmatprep.mubr.bf16.mxu0 0
        %3816 = vmatmul.mubr.bf16.gmra.mrb[0].mxu0 %v3781
        %v3817 = vpop.f32.mrb[0].mxu0
        %v3818 = vadd.f32 %v3751, %v3817
        %v3819 = vpop.f32.mrb[0].mxu0
        %v3820 = vpop.f32.mrb[0].mxu0
        %v3821 = vpop.f32.mrb[0].mxu0
        %3822 = vdwg.mxu0
        %v3823 = vld [vmem:[#allocation9 + $0x9] sm:$0x7f]
        %v3824 = vpack.c.bf16 %v3823, %v3823
        %s3825 = scalar_lea.vmem %s5, 64
        %v3826 = vld [vmem:[%s3825] sm:$0xf]
        %v3827 = vld [vmem:[%s3825 + $0x4] sm:$0xf]
        %v3828 = vld [vmem:[%s3825 + $0x8] sm:$0xf]
        %v3829 = vld [vmem:[%s3825 + $0xc] sm:$0xf]
        %v3830 = vld [vmem:[%s3825 + $0x10] sm:$0xf]
        %v3831 = vld [vmem:[%s3825 + $0x14] sm:$0xf]
        %v3832 = vld [vmem:[%s3825 + $0x18] sm:$0xf]
        %v3833 = vld [vmem:[%s3825 + $0x1c] sm:$0xf]
        %v3842 = vunpack.c.l.b16 %v3826
        %v3843 = vunpack.c.l.b16 %v3827
        %v3844 = vunpack.c.l.b16 %v3828
        %v3845 = vunpack.c.l.b16 %v3829
        %v3846 = vunpack.c.l.b16 %v3830
        %v3847 = vunpack.c.l.b16 %v3831
        %v3848 = vunpack.c.l.b16 %v3832
        %v3849 = vunpack.c.l.b16 %v3833
        %v3850 = vpack.c.b16 %v3843, %v3842
        %v3851 = vpack.c.b16 %v3845, %v3844
        %v3852 = vpack.c.b16 %v3847, %v3846
        %v3853 = vpack.c.b16 %v3849, %v3848
        %v3859 = vsel %vm3377, %v3824, 0
        %3861 = vmatprep.subr.bf16.mxu0 0
        %3862 = vmatpush1.bf16.msra.mxu0 %v3850
        %3863 = vmatprep.subr.bf16.mxu0 0
        %3864 = vmatpush1.bf16.msra.mxu0 %v3851
        %3865 = vmatprep.subr.bf16.mxu0 0
        %3866 = vmatpush1.bf16.msra.mxu0 %v3852
        %3867 = vmatprep.subr.bf16.mxu0 0
        %3868 = vmatpush1.bf16.msra.mxu0 %v3853
        %3869 = vmatprep.subr.bf16.mxu0 0
        %3870 = vmatpush1.bf16.msra.mxu0 0
        %3871 = vmatprep.subr.bf16.mxu0 0
        %3872 = vmatpush1.bf16.msra.mxu0 0
        %3873 = vmatprep.subr.bf16.mxu0 0
        %3874 = vmatpush1.bf16.msra.mxu0 0
        %3875 = vmatprep.subr.bf16.mxu0 0
        %3876 = vmatpush1.bf16.msra.mxu0 0
        %3877 = vmatprep.subr.bf16.mxu0 0
        %3878 = vmatpush1.bf16.msra.mxu0 0
        %3879 = vmatprep.subr.bf16.mxu0 0
        %3880 = vmatpush1.bf16.msra.mxu0 0
        %3881 = vmatprep.subr.bf16.mxu0 0
        %3882 = vmatpush1.bf16.msra.mxu0 0
        %3883 = vmatprep.subr.bf16.mxu0 0
        %3884 = vmatpush1.bf16.msra.mxu0 0
        %3885 = vmatprep.subr.bf16.mxu0 0
        %3886 = vmatpush1.bf16.msra.mxu0 0
        %3887 = vmatprep.subr.bf16.mxu0 0
        %3888 = vmatpush1.bf16.msra.mxu0 0
        %3889 = vmatprep.subr.bf16.mxu0 0
        %3890 = vmatpush1.bf16.msra.mxu0 0
        %3891 = vmatprep.subr.bf16.mxu0 0
        %3892 = vmatpush1.bf16.msra.mxu0 0
        %3893 = vmatprep.mubr.bf16.mxu0 0
        %3894 = vmatmul.mubr.bf16.gmra.mrb[0].mxu0 %v3859
        %v3895 = vpop.f32.mrb[0].mxu0
        %v3896 = vadd.f32 0.0, %v3895
        %v3897 = vpop.f32.mrb[0].mxu0
        %v3898 = vpop.f32.mrb[0].mxu0
        %v3899 = vpop.f32.mrb[0].mxu0
        %3900 = vdwg.mxu0
        %v3901 = vadd.f32 %v3818, %v3896
        %v3902 = vld [vmem:[%s14] sm:$0x1]
        %v3904 = vlaneseq
        %v3905 = vshrl.u32 %v3904, 7
        %v3906 = vsub.s32 0, %v3905
        %v3907 = vrot.slane %v3902, %v3906
        %v3909 = vmul.f32 %v3901, %v3907
        %v3910 = vld [vmem:[%s15] sm:$0x1]
        %v3912 = vlaneseq
        %v3913 = vshrl.u32 %v3912, 7
        %v3914 = vsub.s32 0, %v3913
        %v3915 = vrot.slane %v3910, %v3914
        %v3917 = vadd.f32 %v3909, %v3915
        %v3918 = vmax.f32 %v3917, 0.0
        %3919 = vst.msk [vmem:[#allocation10] sm:$0x7f] %vm3396, %v3918
        %v3920 = vld [vmem:[#allocation10] ss:$2 sm:$0x7]
        %s3921 = scalar_lea.vmem [#allocation10], 1
        %v3922 = vld [vmem:[%s3921] ss:$2 sm:$0x7]
        %v3923 = vmax.f32 %v3920, %v3922
        %vm3924 = vcmask 518144
        %3925 = vst.msk [vmem:[%s549] sm:$0x7] %vm3924, %v3923
        %p3926 = scmp.lt.s32.totalorder %s29, 1
        %s3927 = scalar_select %p3926, %s29, 1
        %s3928 = smul.addr %s3927, 4
        %s3929 = scalar_lea.vmem %s16, %s3928
        // Predicated region
        $region93: #{conv_autoencoder_encoder.1} parent=83 // pred_check
          %p3930 = pneg %p388
        $region94: #{conv_autoencoder_encoder.1} parent=83 // pred_check_branch
          %3932 = sbr.rel (%p3930) target = $region96
        $region95: #{conv_autoencoder_encoder.1} parent=83 // pred_region
          _
        $region96: #{conv_autoencoder_encoder.1} parent=83 // pred_fallthru
          _
      $region84: #{conv_autoencoder_encoder.1} parent=5 // pred_fallthru
        _
      %p3933 = scmp.le.s32.totalorder 2, %s24
      // Predicated region
      $region97: #{conv_autoencoder_encoder.1} parent=5 // pred_check
        %p3934 = pneg %p3933
      $region98: #{conv_autoencoder_encoder.1} parent=5 // pred_check_branch
        %3936 = sbr.rel (%p3934) target = $region100
      $region99: #{conv_autoencoder_encoder.1} parent=5 // pred_region
        %s3937 = ssub.s32 %s24, 2
        // Predicated region
        $region101: #{conv_autoencoder_encoder.1} parent=99 // pred_check
          %p3938 = pneg %p394
        $region102: #{conv_autoencoder_encoder.1} parent=99 // pred_check_branch
          %3940 = sbr.rel (%p3938) target = $region104
        $region103: #{conv_autoencoder_encoder.1} parent=99 // pred_region
          %p3941 = scmp.lt.s32.totalorder %s30, 1
          %s3942 = scalar_select %p3941, %s30, 1
          %s3943 = smul.addr %s3942, 4
          %s3944 = scalar_lea.vmem %s16, %s3943
        $region104: #{conv_autoencoder_encoder.1} parent=99 // pred_fallthru
          _
      $region100: #{conv_autoencoder_encoder.1} parent=5 // pred_fallthru
        _
    $region6: #{conv_autoencoder_encoder.1} parent=1 // loop_footer
      %s28 = sadd.s32 1, %s24
    $region7: #{conv_autoencoder_encoder.1} parent=1 // loop_footer_branch
      %23 = sbr.rel target = $region3
    $region8: #{conv_autoencoder_encoder.1} parent=1 // loop_exit
      _
    %3945 = vsyncpa [#allocation12], 1
    %s3946 = scalar_lea.sflag [#allocation12], 1
    %3947 = vsyncpa %s3946, 1
    %3948 = vsyncpa [#allocation14], 1

</llo_original>
